<compile_context>
chip_gen: v7x
topology: tpu7x:2x2x1
jax: 0.10.0
libtpu: 0.0.40
codegen_flags: <defaults>
</compile_context>

<pallas_src>
import math

import jax
import jax.numpy as jnp
from jax.experimental import pallas as pl
from jax.experimental.pallas import tpu as pltpu

LANE = 128  # TPU lane width


# ----------------------------- small helpers --------------------------------

def _round_up(x, m):
    return ((x + m - 1) // m) * m


def _pad2d(a, rows, cols):
    r, c = a.shape
    if r == rows and c == cols:
        return a
    return jnp.pad(a, ((0, rows - r), (0, cols - c)))


def _vmem_budget_bytes():
    """Per-generation VMEM budget for Pallas buffers (conservative)."""
    cap = 64 * 1024 * 1024  # safe fallback (v7x per-core physical VMEM)
    try:
        info = pltpu.get_tpu_info()
        cap = int(getattr(info, "vmem_capacity_bytes", cap))
    except Exception:
        pass
    return max(32 * 1024 * 1024, min(int(cap * 0.6), 80 * 1024 * 1024))


def _compiler_params(semantics, budget):
    return pltpu.CompilerParams(
        dimension_semantics=semantics,
        vmem_limit_bytes=int(budget),
    )


def _row_tile(np_):
    """Row tile: as big as possible while keeping >= 2 tiles (megacore)."""
    for t in (1024, 512, 256, 128):
        if np_ % t == 0 and np_ // t >= 2:
            return t
    for t in (1024, 512, 256, 128):
        if np_ % t == 0:
            return t
    return 128


# ----------------------------- Pallas kernels --------------------------------

def _linear_kernel(x_ref, wt_ref, b_ref, o_ref):
    # y = x @ Wt + b   (Wt already transposed in the wrapper), all f32.
    acc = jnp.dot(x_ref[...], wt_ref[...], preferred_element_type=jnp.float32)
    o_ref[...] = (acc + b_ref[...]).astype(o_ref.dtype)


def _make_prop_kernel(tk, resident_h):
    """out[i] = sum_k adj[i, k] @ h[k]; bf16 operands, f32 accumulation
    directly into the resident output block (no scratch accumulator)."""

    def kernel(adj_ref, h_ref, o_ref):
        k = pl.program_id(1)

        @pl.when(k == 0)
        def _():
            o_ref[...] = jnp.zeros_like(o_ref)

        if resident_h:
            start = pl.multiple_of(k * tk, tk)
            hk = h_ref[pl.ds(start, tk), :]
        else:
            hk = h_ref[...]
        o_ref[...] += jnp.dot(adj_ref[...], hk,
                              preferred_element_type=jnp.float32)

    return kernel


def _make_fused_kernel(n_layers):
    """linear_in -> n_layers x (adj @ .) -> linear_out, everything resident.
    adj is bf16; propagation uses bf16 MXU inputs with f32 accumulation,
    ping-ponging h between two f32 VMEM scratch buffers."""

    def kernel(adj_ref, x_ref, wt_in_ref, b_in_ref, wt_out_ref, b_out_ref,
               o_ref, h0_ref, h1_ref):
        h0_ref[...] = (
            jnp.dot(x_ref[...], wt_in_ref[...],
                    preferred_element_type=jnp.float32) + b_in_ref[...])
        bufs = (h0_ref, h1_ref)
        for ell in range(n_layers):
            src = bufs[ell % 2]
            dst = bufs[(ell + 1) % 2]
            dst[...] = jnp.dot(adj_ref[...], src[...].astype(jnp.bfloat16),
                               preferred_element_type=jnp.float32)
        h_final = bufs[n_layers % 2][...]
        o_ref[...] = (
            jnp.dot(h_final, wt_out_ref[...],
                    preferred_element_type=jnp.float32)
            + b_out_ref[...]).astype(o_ref.dtype)

    return kernel


# ------------------------------- wrappers -------------------------------------
# All wrappers operate on pre-padded arrays: node dim and feature dims padded
# to multiples of 128, so every BlockSpec is (8,128)-legal and every output
# store is lane-dense.

def linear_padded(x, wt, b2, budget):
    """x: [Np, Fin_p] f32, wt: [Fin_p, Fout_p] f32, b2: [1, Fout_p] f32."""
    np_, fin = x.shape
    fout = wt.shape[1]
    tm = _row_tile(np_)
    cost = pl.CostEstimate(
        flops=2 * np_ * fin * fout, transcendentals=0,
        bytes_accessed=4 * (np_ * fin + fin * fout + np_ * fout))
    return pl.pallas_call(
        _linear_kernel,
        out_shape=jax.ShapeDtypeStruct((np_, fout), jnp.float32),
        grid_spec=pltpu.PrefetchScalarGridSpec(
            num_scalar_prefetch=0,
            grid=(np_ // tm,),
            in_specs=[
                pl.BlockSpec((tm, fin), lambda i: (i, 0)),
                pl.BlockSpec((fin, fout), lambda i: (0, 0)),
                pl.BlockSpec((1, fout), lambda i: (0, 0)),
            ],
            out_specs=pl.BlockSpec((tm, fout), lambda i: (i, 0)),
        ),
        compiler_params=_compiler_params(("parallel",), budget),
        cost_estimate=cost,
    )(x, wt, b2)


def propagate(adj_bf16, h_bf16, budget):
    """adj @ h with bf16 operands, VMEM-resident h, resident f32 output acc."""
    np_, f = h_bf16.shape
    tm = _row_tile(np_)

    h_resident_bytes = 2 * np_ * f * 2            # (possibly double-buffered)
    resident_h = h_resident_bytes <= 0.35 * budget

    # Pick the adjacency K tile to actually use the VMEM budget.
    tk = 128
    cands = sorted({t for t in (np_, 8192, 4096, 2048, 1024, 512, 256, 128)
                    if t <= np_ and np_ % t == 0}, reverse=True)
    for t in cands:
        adj_bytes = 2 * tm * t * 2                # double-buffered bf16 tile
        out_bytes = 2 * tm * f * 4                # double-buffered f32 output
        h_bytes = h_resident_bytes if resident_h else 2 * t * f * 2
        if adj_bytes + out_bytes + h_bytes <= 0.7 * budget:
            tk = t
            break

    if resident_h:
        h_spec = pl.BlockSpec((np_, f), lambda i, k: (0, 0))
    else:
        h_spec = pl.BlockSpec((tk, f), lambda i, k: (k, 0))

    cost = pl.CostEstimate(
        flops=2 * np_ * np_ * f, transcendentals=0,
        bytes_accessed=2 * np_ * np_ + 2 * np_ * f + 4 * np_ * f)
    return pl.pallas_call(
        _make_prop_kernel(tk, resident_h),
        out_shape=jax.ShapeDtypeStruct((np_, f), jnp.float32),
        grid_spec=pltpu.PrefetchScalarGridSpec(
            num_scalar_prefetch=0,
            grid=(np_ // tm, np_ // tk),
            in_specs=[
                pl.BlockSpec((tm, tk), lambda i, k: (i, k)),   # adj tile
                h_spec,                                        # features
            ],
            out_specs=pl.BlockSpec((tm, f), lambda i, k: (i, 0)),
        ),
        compiler_params=_compiler_params(("parallel", "arbitrary"), budget),
        cost_estimate=cost,
    )(adj_bf16, h_bf16)


def sgc_fused(adj_bf16, x, wt_in, b_in, wt_out, b_out, n_layers, budget):
    """Single pallas_call: adj read from HBM exactly once, h stays in VMEM."""
    np_ = adj_bf16.shape[0]
    fin = x.shape[1]
    fhid = wt_in.shape[1]
    fcls = wt_out.shape[1]
    cost = pl.CostEstimate(
        flops=2 * np_ * (fin * fhid + n_layers * np_ * fhid + fhid * fcls),
        transcendentals=0,
        bytes_accessed=(2 * np_ * np_ + 4 * np_ * (fin + fcls)
                        + 4 * (fin * fhid + fhid * fcls)))
    return pl.pallas_call(
        _make_fused_kernel(n_layers),
        out_shape=jax.ShapeDtypeStruct((np_, fcls), jnp.float32),
        grid_spec=pltpu.PrefetchScalarGridSpec(
            num_scalar_prefetch=0,
            grid=(1,),
            in_specs=[
                pl.BlockSpec((np_, np_), lambda i: (0, 0)),    # adj (bf16)
                pl.BlockSpec((np_, fin), lambda i: (0, 0)),    # x
                pl.BlockSpec((fin, fhid), lambda i: (0, 0)),   # W_in.T
                pl.BlockSpec((1, fhid), lambda i: (0, 0)),     # b_in
                pl.BlockSpec((fhid, fcls), lambda i: (0, 0)),  # W_out.T
                pl.BlockSpec((1, fcls), lambda i: (0, 0)),     # b_out
            ],
            out_specs=pl.BlockSpec((np_, fcls), lambda i: (0, 0)),
            scratch_shapes=[pltpu.VMEM((np_, fhid), jnp.float32),
                            pltpu.VMEM((np_, fhid), jnp.float32)],
        ),
        compiler_params=_compiler_params(("arbitrary",), budget),
        cost_estimate=cost,
    )(adj_bf16, x, wt_in, b_in, wt_out, b_out)


# ------------------------------ SGC forward -----------------------------------

def sgc_forward(x, adj, params, n_layers, force_tiled=False):
    """Pallas SGC forward: linear_in -> n_layers x (adj @ .) -> linear_out."""
    n, n_feat = x.shape
    n_hid = params["w_in"].shape[0]
    n_classes = params["w_out"].shape[0]

    budget = _vmem_budget_bytes()

    n_pad = _round_up(n, LANE)
    fin_p = _round_up(n_feat, LANE)
    fhid_p = _round_up(n_hid, LANE)
    fcls_p = _round_up(n_classes, LANE)

    # Wrapper-side layout plumbing: zero-pad, pre-transpose weights, and cast
    # the dense adjacency to bf16 (accumulation stays f32 in-kernel).
    adj_bf16 = _pad2d(adj, n_pad, n_pad).astype(jnp.bfloat16)
    x_p = _pad2d(x, n_pad, fin_p).astype(jnp.float32)
    wt_in = _pad2d(params["w_in"].T, fin_p, fhid_p).astype(jnp.float32)
    b_in = _pad2d(params["b_in"].reshape(1, -1), 1, fhid_p).astype(jnp.float32)
    wt_out = _pad2d(params["w_out"].T, fhid_p, fcls_p).astype(jnp.float32)
    b_out = _pad2d(params["b_out"].reshape(1, -1), 1, fcls_p).astype(jnp.float32)

    # Fully fused path: adj + x + two h buffers + out all resident in VMEM.
    fused_bytes = (n_pad * n_pad * 2 + n_pad * (fin_p + fcls_p) * 4
                   + 2 * n_pad * fhid_p * 4
                   + 4 * (fin_p * fhid_p + fhid_p * fcls_p))
    if not force_tiled and fused_bytes <= 0.6 * budget:
        out = sgc_fused(adj_bf16, x_p, wt_in, b_in, wt_out, b_out,
                        n_layers, budget)
        return out[:n, :n_classes]

    # Tiled fallback: un-fused linears + one K-tiled propagation per layer.
    h = linear_padded(x_p, wt_in, b_in, budget)
    for _ in range(n_layers):
        h = propagate(adj_bf16, h.astype(jnp.bfloat16), budget)
    out = linear_padded(h, wt_out, b_out, budget)
    return out[:n, :n_classes]


# --------------------------- parameter init -----------------------------------

def init_params(key, n_feat, n_hid, n_classes):
    """nn.Linear-style init: U(-1/sqrt(fan_in), 1/sqrt(fan_in))."""
    k1, k2, k3, k4 = jax.random.split(key, 4)
    bound_in = 1.0 / math.sqrt(n_feat)
    bound_out = 1.0 / math.sqrt(n_hid)
    return {
        "w_in": jax.random.uniform(k1, (n_hid, n_feat), jnp.float32,
                                   -bound_in, bound_in),
        "b_in": jax.random.uniform(k2, (n_hid,), jnp.float32,
                                   -bound_in, bound_in),
        "w_out": jax.random.uniform(k3, (n_classes, n_hid), jnp.float32,
                                    -bound_out, bound_out),
        "b_out": jax.random.uniform(k4, (n_classes,), jnp.float32,
                                    -bound_out, bound_out),
    }


# ----------------------------------- main --------------------------------------

if __name__ == "__main__":
    # Small config with deliberately non-aligned sizes to exercise padding:
    # N=300 nodes, n_feat=96, n_hid=64, n_classes=10, n_layers=3.
    N, n_feat, n_hid, n_classes, n_layers = 300, 96, 64, 10, 3

    key = jax.random.PRNGKey(0)
    kx, ka, kp = jax.random.split(key, 3)

    x = jax.random.normal(kx, (N, n_feat), dtype=jnp.float32)

    # Symmetric, row-normalized dense adjacency (typical SGC preprocessing).
    a = jax.random.uniform(ka, (N, N), dtype=jnp.float32)
    a = (a + a.T) * 0.5 + jnp.eye(N, dtype=jnp.float32)
    adj = a / jnp.sum(a, axis=1, keepdims=True)

    params = init_params(kp, n_feat, n_hid, n_classes)

    # Pure-JAX f32 reference (highest precision matmuls).
    hp = jax.lax.Precision.HIGHEST
    ref = jnp.dot(x, params["w_in"].T, precision=hp) + params["b_in"]
    for _ in range(n_layers):
        ref = jnp.dot(adj, ref, precision=hp)
    ref = jnp.dot(ref, params["w_out"].T, precision=hp) + params["b_out"]

    # Exercise both the fully fused (adj-resident) path and the tiled path.
    out_fused = jax.block_until_ready(sgc_forward(x, adj, params, n_layers))
    out_tiled = jax.block_until_ready(
        sgc_forward(x, adj, params, n_layers, force_tiled=True))

    for name, out in (("fused", out_fused), ("tiled", out_tiled)):
        assert out.shape == (N, n_classes), (name, out.shape)
        err = float(jnp.max(jnp.abs(out - ref)))
        # bf16 adjacency / propagation operands with f32 accumulation.
        assert err < 2e-2, (name, err)

    print("KERNEL_OK")
</pallas_src>

<mosaic_0001>
module attributes {stable_mosaic.version = 11 : i64} {
  func.func @kernel(%arg0: i32, %arg1: memref<384x384xbf16, #tpu.memory_space<vmem>>, %arg2: memref<384x128xf32, #tpu.memory_space<vmem>>, %arg3: memref<128x128xf32, #tpu.memory_space<vmem>>, %arg4: memref<1x128xf32, #tpu.memory_space<vmem>>, %arg5: memref<128x128xf32, #tpu.memory_space<vmem>>, %arg6: memref<1x128xf32, #tpu.memory_space<vmem>>, %arg7: memref<384x128xf32, #tpu.memory_space<vmem>>, %arg8: memref<384x128xf32, #tpu.memory_space<vmem>>, %arg9: memref<384x128xf32, #tpu.memory_space<vmem>>) attributes {dimension_semantics = [#tpu.dimension_semantics<arbitrary>], iteration_bounds = array<i64: 1>, scalar_prefetch = 0 : i64, scratch_operands = 2 : i64, tpu.core_type = #tpu.core_type<tc>, window_params = [{pipeline_mode = #tpu.pipeline_mode<synchronous>, transform_indices = @transform_0, window_bounds = array<i64: 384, 384>}, {pipeline_mode = #tpu.pipeline_mode<synchronous>, transform_indices = @transform_1, window_bounds = array<i64: 384, 128>}, {pipeline_mode = #tpu.pipeline_mode<synchronous>, transform_indices = @transform_2, window_bounds = array<i64: 128, 128>}, {pipeline_mode = #tpu.pipeline_mode<synchronous>, transform_indices = @transform_3, window_bounds = array<i64: 1, 128>}, {pipeline_mode = #tpu.pipeline_mode<synchronous>, transform_indices = @transform_4, window_bounds = array<i64: 128, 128>}, {pipeline_mode = #tpu.pipeline_mode<synchronous>, transform_indices = @transform_5, window_bounds = array<i64: 1, 128>}, {pipeline_mode = #tpu.pipeline_mode<synchronous>, transform_indices = @transform_6, window_bounds = array<i64: 384, 128>}]} {
    %c0 = arith.constant 0 : index
    %c0_0 = arith.constant 0 : index
    %0 = vector.load %arg2[%c0, %c0_0] : memref<384x128xf32, #tpu.memory_space<vmem>>, vector<384x128xf32>
    %c0_1 = arith.constant 0 : index
    %c0_2 = arith.constant 0 : index
    %1 = vector.load %arg3[%c0_1, %c0_2] : memref<128x128xf32, #tpu.memory_space<vmem>>, vector<128x128xf32>
    %cst = arith.constant dense<0.000000e+00> : vector<384x128xf32>
    %2 = tpu.matmul %0, %1, %cst {dimension_numbers = #tpu.dot_dimension_numbers<[1], [0], [0], [1], [0, 0, 1, 1], [], []>} : vector<384x128xf32>, vector<128x128xf32>, vector<384x128xf32> -> vector<384x128xf32>
    %c0_3 = arith.constant 0 : index
    %c0_4 = arith.constant 0 : index
    %3 = vector.load %arg4[%c0_3, %c0_4] : memref<1x128xf32, #tpu.memory_space<vmem>>, vector<1x128xf32>
    %4 = vector.broadcast %3 : vector<1x128xf32> to vector<384x128xf32>
    %5 = arith.addf %2, %4 : vector<384x128xf32>
    %c0_5 = arith.constant 0 : index
    %c0_6 = arith.constant 0 : index
    %6 = vector.load %arg8[%c0_5, %c0_6] : memref<384x128xf32, #tpu.memory_space<vmem>>, vector<384x128xf32>
    tpu.vector_store %arg8[%c0_5, %c0_6], %5 {strides = array<i32>} : memref<384x128xf32, #tpu.memory_space<vmem>>, vector<384x128xf32>,
    %c0_7 = arith.constant 0 : index
    %c0_8 = arith.constant 0 : index
    %7 = vector.load %arg1[%c0_7, %c0_8] : memref<384x384xbf16, #tpu.memory_space<vmem>>, vector<384x384xbf16>
    %c0_9 = arith.constant 0 : index
    %c0_10 = arith.constant 0 : index
    %8 = vector.load %arg8[%c0_9, %c0_10] : memref<384x128xf32, #tpu.memory_space<vmem>>, vector<384x128xf32>
    %9 = arith.truncf %8 : vector<384x128xf32> to vector<384x128xbf16>
    %cst_11 = arith.constant dense<0.000000e+00> : vector<384x128xf32>
    %10 = tpu.matmul %7, %9, %cst_11 {dimension_numbers = #tpu.dot_dimension_numbers<[1], [0], [0], [1], [0, 0, 1, 1], [], []>} : vector<384x384xbf16>, vector<384x128xbf16>, vector<384x128xf32> -> vector<384x128xf32>
    %c0_12 = arith.constant 0 : index
    %c0_13 = arith.constant 0 : index
    %11 = vector.load %arg9[%c0_12, %c0_13] : memref<384x128xf32, #tpu.memory_space<vmem>>, vector<384x128xf32>
    tpu.vector_store %arg9[%c0_12, %c0_13], %10 {strides = array<i32>} : memref<384x128xf32, #tpu.memory_space<vmem>>, vector<384x128xf32>,
    %c0_14 = arith.constant 0 : index
    %c0_15 = arith.constant 0 : index
    %12 = vector.load %arg1[%c0_14, %c0_15] : memref<384x384xbf16, #tpu.memory_space<vmem>>, vector<384x384xbf16>
    %c0_16 = arith.constant 0 : index
    %c0_17 = arith.constant 0 : index
    %13 = vector.load %arg9[%c0_16, %c0_17] : memref<384x128xf32, #tpu.memory_space<vmem>>, vector<384x128xf32>
    %14 = arith.truncf %13 : vector<384x128xf32> to vector<384x128xbf16>
    %cst_18 = arith.constant dense<0.000000e+00> : vector<384x128xf32>
    %15 = tpu.matmul %12, %14, %cst_18 {dimension_numbers = #tpu.dot_dimension_numbers<[1], [0], [0], [1], [0, 0, 1, 1], [], []>} : vector<384x384xbf16>, vector<384x128xbf16>, vector<384x128xf32> -> vector<384x128xf32>
    %c0_19 = arith.constant 0 : index
    %c0_20 = arith.constant 0 : index
    %16 = vector.load %arg8[%c0_19, %c0_20] : memref<384x128xf32, #tpu.memory_space<vmem>>, vector<384x128xf32>
    tpu.vector_store %arg8[%c0_19, %c0_20], %15 {strides = array<i32>} : memref<384x128xf32, #tpu.memory_space<vmem>>, vector<384x128xf32>,
    %c0_21 = arith.constant 0 : index
    %c0_22 = arith.constant 0 : index
    %17 = vector.load %arg1[%c0_21, %c0_22] : memref<384x384xbf16, #tpu.memory_space<vmem>>, vector<384x384xbf16>
    %c0_23 = arith.constant 0 : index
    %c0_24 = arith.constant 0 : index
    %18 = vector.load %arg8[%c0_23, %c0_24] : memref<384x128xf32, #tpu.memory_space<vmem>>, vector<384x128xf32>
    %19 = arith.truncf %18 : vector<384x128xf32> to vector<384x128xbf16>
    %cst_25 = arith.constant dense<0.000000e+00> : vector<384x128xf32>
    %20 = tpu.matmul %17, %19, %cst_25 {dimension_numbers = #tpu.dot_dimension_numbers<[1], [0], [0], [1], [0, 0, 1, 1], [], []>} : vector<384x384xbf16>, vector<384x128xbf16>, vector<384x128xf32> -> vector<384x128xf32>
    %c0_26 = arith.constant 0 : index
    %c0_27 = arith.constant 0 : index
    %21 = vector.load %arg9[%c0_26, %c0_27] : memref<384x128xf32, #tpu.memory_space<vmem>>, vector<384x128xf32>
    tpu.vector_store %arg9[%c0_26, %c0_27], %20 {strides = array<i32>} : memref<384x128xf32, #tpu.memory_space<vmem>>, vector<384x128xf32>,
    %c0_28 = arith.constant 0 : index
    %c0_29 = arith.constant 0 : index
    %22 = vector.load %arg9[%c0_28, %c0_29] : memref<384x128xf32, #tpu.memory_space<vmem>>, vector<384x128xf32>
    %c0_30 = arith.constant 0 : index
    %c0_31 = arith.constant 0 : index
    %23 = vector.load %arg5[%c0_30, %c0_31] : memref<128x128xf32, #tpu.memory_space<vmem>>, vector<128x128xf32>
    %cst_32 = arith.constant dense<0.000000e+00> : vector<384x128xf32>
    %24 = tpu.matmul %22, %23, %cst_32 {dimension_numbers = #tpu.dot_dimension_numbers<[1], [0], [0], [1], [0, 0, 1, 1], [], []>} : vector<384x128xf32>, vector<128x128xf32>, vector<384x128xf32> -> vector<384x128xf32>
    %c0_33 = arith.constant 0 : index
    %c0_34 = arith.constant 0 : index
    %25 = vector.load %arg6[%c0_33, %c0_34] : memref<1x128xf32, #tpu.memory_space<vmem>>, vector<1x128xf32>
    %26 = vector.broadcast %25 : vector<1x128xf32> to vector<384x128xf32>
    %27 = arith.addf %24, %26 : vector<384x128xf32>
    %c0_35 = arith.constant 0 : index
    %c0_36 = arith.constant 0 : index
    %28 = vector.load %arg7[%c0_35, %c0_36] : memref<384x128xf32, #tpu.memory_space<vmem>>, vector<384x128xf32>
    tpu.vector_store %arg7[%c0_35, %c0_36], %27 {strides = array<i32>} : memref<384x128xf32, #tpu.memory_space<vmem>>, vector<384x128xf32>,
    return
  }
  func.func @transform_0(%arg0: i32) -> (i32, i32) {
    %c0_i32 = arith.constant 0 : i32
    %c0_i32_0 = arith.constant 0 : i32
    %c0_i32_1 = arith.constant 0 : i32
    return %c0_i32, %c0_i32_0 : i32, i32
  }
  func.func @transform_1(%arg0: i32) -> (i32, i32) {
    %c0_i32 = arith.constant 0 : i32
    %c0_i32_0 = arith.constant 0 : i32
    %c0_i32_1 = arith.constant 0 : i32
    return %c0_i32, %c0_i32_0 : i32, i32
  }
  func.func @transform_2(%arg0: i32) -> (i32, i32) {
    %c0_i32 = arith.constant 0 : i32
    %c0_i32_0 = arith.constant 0 : i32
    %c0_i32_1 = arith.constant 0 : i32
    return %c0_i32, %c0_i32_0 : i32, i32
  }
  func.func @transform_3(%arg0: i32) -> (i32, i32) {
    %c0_i32 = arith.constant 0 : i32
    %c0_i32_0 = arith.constant 0 : i32
    %c0_i32_1 = arith.constant 0 : i32
    return %c0_i32, %c0_i32_0 : i32, i32
  }
  func.func @transform_4(%arg0: i32) -> (i32, i32) {
    %c0_i32 = arith.constant 0 : i32
    %c0_i32_0 = arith.constant 0 : i32
    %c0_i32_1 = arith.constant 0 : i32
    return %c0_i32, %c0_i32_0 : i32, i32
  }
  func.func @transform_5(%arg0: i32) -> (i32, i32) {
    %c0_i32 = arith.constant 0 : i32
    %c0_i32_0 = arith.constant 0 : i32
    %c0_i32_1 = arith.constant 0 : i32
    return %c0_i32, %c0_i32_0 : i32, i32
  }
  func.func @transform_6(%arg0: i32) -> (i32, i32) {
    %c0_i32 = arith.constant 0 : i32
    %c0_i32_0 = arith.constant 0 : i32
    %c0_i32_1 = arith.constant 0 : i32
    return %c0_i32, %c0_i32_0 : i32, i32
  }
}

</mosaic_0001>

<llo_original>
// kernel: tpu_custom_call.1
$region0: #{tpu_custom_call.1}
  #allocation0 [shape = 'u32[]', space=smem, size = 0x4, offset = 0x4, fixed_abs, tag = 'smem constant byte address 0x4 - core index']
  #allocation1 [shape = 'u32[144,128]{1,0:T(1,128)}', space=vmem, size = 0x12000, scoped, tag = 'internal scratch']
  #allocation2 [shape = 'f32[384,128]{1,0:T(8,128)}', space=vmem, size = 0x30000, scoped, tag = 'scratch operand']
  #allocation3 [shape = 'f32[384,128]{1,0:T(8,128)}', space=vmem, size = 0x30000, scoped, tag = 'scratch operand']
  %s0 = inlined_call_operand.hbm [shape: bf16[384,384], index: 0, kind: input, shape index: {}]
  %s1 = inlined_call_operand.hbm [shape: f32[384,128], index: 1, kind: input, shape index: {}]
  %s2 = inlined_call_operand.hbm [shape: f32[128,128], index: 2, kind: input, shape index: {}]
  %s3 = inlined_call_operand.vmem [shape: f32[1,128], index: 3, kind: input, shape index: {}]
  %s4 = inlined_call_operand.hbm [shape: f32[128,128], index: 4, kind: input, shape index: {}]
  %s5 = inlined_call_operand.vmem [shape: f32[1,128], index: 5, kind: input, shape index: {}]
  %s6 = inlined_call_operand.hbm [shape: f32[384,128], index: 6, kind: output, shape index: {}]
  %s7 = sld [smem:[#allocation0]]
  $region50: #{tpu_custom_call.1} parent=0
    _
  %s9 = ssub.s32 1, %s7
  %s10 = scalar_select 0, %s9, %s7
  $region1: #{tpu_custom_call.1} parent=0
    #allocation4 [shape = 'u8[294912]{0}', space=vmem, size = 0x48000, scoped, tag = 'input window, operand 0, single buffered']
    #allocation5 [shape = 's32[1]{0}', space=sflag, size = 0x4, scoped, tag = 'scoped memory for tpu_custom_call.1']
    #allocation6 [shape = 's32[1]{0}', space=sflag, size = 0x4, scoped, tag = 'scoped memory for tpu_custom_call.1']
    #allocation7 [shape = 'u8[196608]{0}', space=vmem, size = 0x30000, scoped, tag = 'input window, operand 1, single buffered']
    #allocation8 [shape = 's32[1]{0}', space=sflag, size = 0x4, scoped, tag = 'scoped memory for tpu_custom_call.1']
    #allocation9 [shape = 'u8[65536]{0}', space=vmem, size = 0x10000, scoped, tag = 'input window, operand 2, single buffered']
    #allocation10 [shape = 'u8[65536]{0}', space=vmem, size = 0x10000, scoped, tag = 'input window, operand 4, single buffered']
    #allocation11 [shape = 's32[1]{0}', space=sflag, size = 0x4, scoped, tag = 'scoped memory for tpu_custom_call.1']
    #allocation12 [shape = 'u8[196608]{0}', space=vmem, size = 0x30000, scoped, tag = 'output window, operand 0, single buffered']
    %11 = vsyncpa [#allocation5], 0
    %12 = vsyncpa [#allocation8], 0
    %13 = vsyncpa [#allocation11], 0
    %14 = vsyncpa [#allocation6], 0
    // Predicated region
    $region2: #{tpu_custom_call.1} parent=1 // pred_check
      _
    $region3: #{tpu_custom_call.1} parent=1 // pred_check_branch
      %16 = sbr.rel (0) target = $region5
    $region4: #{tpu_custom_call.1} parent=1 // pred_region
      %s18 = ssub.s32 9216, 9216
      %19 = vsyncadd [#allocation5], %s18
      %s20 = sshll.u32 [#allocation4], 4
      %s21 = int_to_ptr.vmem [resolvable:$true] %s20
      %26 = dma.hbm_to_vmem [thread:$0]  %s0, 9216, %s21, [#allocation5], 192, 192, 12
    $region5: #{tpu_custom_call.1} parent=1 // pred_fallthru
      _
    // Predicated region
    $region6: #{tpu_custom_call.1} parent=1 // pred_check
      _
    $region7: #{tpu_custom_call.1} parent=1 // pred_check_branch
      %28 = sbr.rel (0) target = $region9
    $region8: #{tpu_custom_call.1} parent=1 // pred_region
      %s30 = ssub.s32 6144, 6144
      %31 = vsyncadd [#allocation8], %s30
      %s32 = sshll.u32 [#allocation7], 4
      %s33 = int_to_ptr.vmem [resolvable:$true] %s32
      %38 = dma.hbm_to_vmem [thread:$0]  %s1, 6144, %s33, [#allocation8], 128, 128, 8
    $region9: #{tpu_custom_call.1} parent=1 // pred_fallthru
      _
    // Predicated region
    $region10: #{tpu_custom_call.1} parent=1 // pred_check
      _
    $region11: #{tpu_custom_call.1} parent=1 // pred_check_branch
      %40 = sbr.rel (0) target = $region13
    $region12: #{tpu_custom_call.1} parent=1 // pred_region
      %s42 = ssub.s32 2048, 2048
      %43 = vsyncadd [#allocation8], %s42
      %s44 = sshll.u32 [#allocation9], 4
      %s45 = int_to_ptr.vmem [resolvable:$true] %s44
      %50 = dma.hbm_to_vmem [thread:$0]  %s2, 2048, %s45, [#allocation8], 128, 128, 8
    $region13: #{tpu_custom_call.1} parent=1 // pred_fallthru
      _
    // Predicated region
    $region14: #{tpu_custom_call.1} parent=1 // pred_check
      _
    $region15: #{tpu_custom_call.1} parent=1 // pred_check_branch
      %52 = sbr.rel (0) target = $region17
    $region16: #{tpu_custom_call.1} parent=1 // pred_region
      _
    $region17: #{tpu_custom_call.1} parent=1 // pred_fallthru
      _
    // Predicated region
    $region18: #{tpu_custom_call.1} parent=1 // pred_check
      _
    $region19: #{tpu_custom_call.1} parent=1 // pred_check_branch
      %54 = sbr.rel (0) target = $region21
    $region20: #{tpu_custom_call.1} parent=1 // pred_region
      %s56 = ssub.s32 2048, 2048
      %57 = vsyncadd [#allocation11], %s56
      %s58 = sshll.u32 [#allocation10], 4
      %s59 = int_to_ptr.vmem [resolvable:$true] %s58
      %64 = dma.hbm_to_vmem [thread:$0]  %s4, 2048, %s59, [#allocation11], 128, 128, 8
    $region21: #{tpu_custom_call.1} parent=1 // pred_fallthru
      _
    // Predicated region
    $region22: #{tpu_custom_call.1} parent=1 // pred_check
      _
    $region23: #{tpu_custom_call.1} parent=1 // pred_check_branch
      %66 = sbr.rel (0) target = $region25
    $region24: #{tpu_custom_call.1} parent=1 // pred_region
      _
    $region25: #{tpu_custom_call.1} parent=1 // pred_fallthru
      _
    // Predicated region
    $region26: #{tpu_custom_call.1} parent=1 // pred_check
      _
    $region27: #{tpu_custom_call.1} parent=1 // pred_check_branch
      %68 = sbr.rel (0) target = $region29
    $region28: #{tpu_custom_call.1} parent=1 // pred_region
      %69 = dma.done [#allocation5], 9216
    $region29: #{tpu_custom_call.1} parent=1 // pred_fallthru
      _
    // Predicated region
    $region30: #{tpu_custom_call.1} parent=1 // pred_check
      _
    $region31: #{tpu_custom_call.1} parent=1 // pred_check_branch
      %71 = sbr.rel (0) target = $region33
    $region32: #{tpu_custom_call.1} parent=1 // pred_region
      %72 = dma.done [#allocation8], 6144
    $region33: #{tpu_custom_call.1} parent=1 // pred_fallthru
      _
    // Predicated region
    $region34: #{tpu_custom_call.1} parent=1 // pred_check
      _
    $region35: #{tpu_custom_call.1} parent=1 // pred_check_branch
      %74 = sbr.rel (0) target = $region37
    $region36: #{tpu_custom_call.1} parent=1 // pred_region
      %75 = dma.done [#allocation8], 2048
    $region37: #{tpu_custom_call.1} parent=1 // pred_fallthru
      _
    // Predicated region
    $region38: #{tpu_custom_call.1} parent=1 // pred_check
      _
    $region39: #{tpu_custom_call.1} parent=1 // pred_check_branch
      %77 = sbr.rel (0) target = $region41
    $region40: #{tpu_custom_call.1} parent=1 // pred_region
      %78 = dma.done [#allocation11], 2048
    $region41: #{tpu_custom_call.1} parent=1 // pred_fallthru
      _
    %v80 = vld [vmem:[#allocation7] sm:$0xff]
    %v81 = vld [vmem:[#allocation7 + $0x8] sm:$0xff]
    %v82 = vld [vmem:[#allocation7 + $0x10] sm:$0xff]
    %v83 = vld [vmem:[#allocation7 + $0x18] sm:$0xff]
    %v84 = vld [vmem:[#allocation7 + $0x20] sm:$0xff]
    %v85 = vld [vmem:[#allocation7 + $0x28] sm:$0xff]
    %v86 = vld [vmem:[#allocation7 + $0x30] sm:$0xff]
    %v87 = vld [vmem:[#allocation7 + $0x38] sm:$0xff]
    %v88 = vld [vmem:[#allocation7 + $0x40] sm:$0xff]
    %v89 = vld [vmem:[#allocation7 + $0x48] sm:$0xff]
    %v90 = vld [vmem:[#allocation7 + $0x50] sm:$0xff]
    %v91 = vld [vmem:[#allocation7 + $0x58] sm:$0xff]
    %v92 = vld [vmem:[#allocation7 + $0x60] sm:$0xff]
    %v93 = vld [vmem:[#allocation7 + $0x68] sm:$0xff]
    %v94 = vld [vmem:[#allocation7 + $0x70] sm:$0xff]
    %v95 = vld [vmem:[#allocation7 + $0x78] sm:$0xff]
    %v96 = vld [vmem:[#allocation7 + $0x80] sm:$0xff]
    %v97 = vld [vmem:[#allocation7 + $0x88] sm:$0xff]
    %v98 = vld [vmem:[#allocation7 + $0x90] sm:$0xff]
    %v99 = vld [vmem:[#allocation7 + $0x98] sm:$0xff]
    %v100 = vld [vmem:[#allocation7 + $0xa0] sm:$0xff]
    %v101 = vld [vmem:[#allocation7 + $0xa8] sm:$0xff]
    %v102 = vld [vmem:[#allocation7 + $0xb0] sm:$0xff]
    %v103 = vld [vmem:[#allocation7 + $0xb8] sm:$0xff]
    %v104 = vld [vmem:[#allocation7 + $0xc0] sm:$0xff]
    %v105 = vld [vmem:[#allocation7 + $0xc8] sm:$0xff]
    %v106 = vld [vmem:[#allocation7 + $0xd0] sm:$0xff]
    %v107 = vld [vmem:[#allocation7 + $0xd8] sm:$0xff]
    %v108 = vld [vmem:[#allocation7 + $0xe0] sm:$0xff]
    %v109 = vld [vmem:[#allocation7 + $0xe8] sm:$0xff]
    %v110 = vld [vmem:[#allocation7 + $0xf0] sm:$0xff]
    %v111 = vld [vmem:[#allocation7 + $0xf8] sm:$0xff]
    %v112 = vld [vmem:[#allocation7 + $0x100] sm:$0xff]
    %v113 = vld [vmem:[#allocation7 + $0x108] sm:$0xff]
    %v114 = vld [vmem:[#allocation7 + $0x110] sm:$0xff]
    %v115 = vld [vmem:[#allocation7 + $0x118] sm:$0xff]
    %v116 = vld [vmem:[#allocation7 + $0x120] sm:$0xff]
    %v117 = vld [vmem:[#allocation7 + $0x128] sm:$0xff]
    %v118 = vld [vmem:[#allocation7 + $0x130] sm:$0xff]
    %v119 = vld [vmem:[#allocation7 + $0x138] sm:$0xff]
    %v120 = vld [vmem:[#allocation7 + $0x140] sm:$0xff]
    %v121 = vld [vmem:[#allocation7 + $0x148] sm:$0xff]
    %v122 = vld [vmem:[#allocation7 + $0x150] sm:$0xff]
    %v123 = vld [vmem:[#allocation7 + $0x158] sm:$0xff]
    %v124 = vld [vmem:[#allocation7 + $0x160] sm:$0xff]
    %v125 = vld [vmem:[#allocation7 + $0x168] sm:$0xff]
    %v126 = vld [vmem:[#allocation7 + $0x170] sm:$0xff]
    %v127 = vld [vmem:[#allocation7 + $0x178] sm:$0xff]
    %v128 = vld [vmem:[#allocation9] sm:$0xff]
    %v129 = vld [vmem:[#allocation9 + $0x8] sm:$0xff]
    %v130 = vld [vmem:[#allocation9 + $0x10] sm:$0xff]
    %v131 = vld [vmem:[#allocation9 + $0x18] sm:$0xff]
    %v132 = vld [vmem:[#allocation9 + $0x20] sm:$0xff]
    %v133 = vld [vmem:[#allocation9 + $0x28] sm:$0xff]
    %v134 = vld [vmem:[#allocation9 + $0x30] sm:$0xff]
    %v135 = vld [vmem:[#allocation9 + $0x38] sm:$0xff]
    %v136 = vld [vmem:[#allocation9 + $0x40] sm:$0xff]
    %v137 = vld [vmem:[#allocation9 + $0x48] sm:$0xff]
    %v138 = vld [vmem:[#allocation9 + $0x50] sm:$0xff]
    %v139 = vld [vmem:[#allocation9 + $0x58] sm:$0xff]
    %v140 = vld [vmem:[#allocation9 + $0x60] sm:$0xff]
    %v141 = vld [vmem:[#allocation9 + $0x68] sm:$0xff]
    %v142 = vld [vmem:[#allocation9 + $0x70] sm:$0xff]
    %v143 = vld [vmem:[#allocation9 + $0x78] sm:$0xff]
    %v144 = vld [vmem:[%s3] sm:$0x1]
    %v146 = vlaneseq
    %v147 = vshrl.u32 %v146, 7
    %v148 = vsub.s32 0, %v147
    %v149 = vrot.slane %v144, %v148
    %151 = vmatprep.subr.mxu0 0.0
    %152 = vmatpush1.msra.mxu0 %v128
    %153 = vmatprep.subr.mxu0 0.0
    %154 = vmatpush1.msra.mxu0 %v129
    %155 = vmatprep.subr.mxu0 0.0
    %156 = vmatpush1.msra.mxu0 %v130
    %157 = vmatprep.subr.mxu0 0.0
    %158 = vmatpush1.msra.mxu0 %v131
    %159 = vmatprep.subr.mxu0 0.0
    %160 = vmatpush1.msra.mxu0 %v132
    %161 = vmatprep.subr.mxu0 0.0
    %162 = vmatpush1.msra.mxu0 %v133
    %163 = vmatprep.subr.mxu0 0.0
    %164 = vmatpush1.msra.mxu0 %v134
    %165 = vmatprep.subr.mxu0 0.0
    %166 = vmatpush1.msra.mxu0 %v135
    %167 = vmatprep.subr.mxu0 0.0
    %168 = vmatpush1.msra.mxu0 %v136
    %169 = vmatprep.subr.mxu0 0.0
    %170 = vmatpush1.msra.mxu0 %v137
    %171 = vmatprep.subr.mxu0 0.0
    %172 = vmatpush1.msra.mxu0 %v138
    %173 = vmatprep.subr.mxu0 0.0
    %174 = vmatpush1.msra.mxu0 %v139
    %175 = vmatprep.subr.mxu0 0.0
    %176 = vmatpush1.msra.mxu0 %v140
    %177 = vmatprep.subr.mxu0 0.0
    %178 = vmatpush1.msra.mxu0 %v141
    %179 = vmatprep.subr.mxu0 0.0
    %180 = vmatpush1.msra.mxu0 %v142
    %181 = vmatprep.subr.mxu0 0.0
    %182 = vmatpush1.msra.mxu0 %v143
    %183 = vmatprep.subr.mxu0 0.0
    %184 = vmatpush1.msra.mxu0 0.0
    %185 = vmatprep.subr.mxu0 0.0
    %186 = vmatpush1.msra.mxu0 0.0
    %187 = vmatprep.subr.mxu0 0.0
    %188 = vmatpush1.msra.mxu0 0.0
    %189 = vmatprep.subr.mxu0 0.0
    %190 = vmatpush1.msra.mxu0 0.0
    %191 = vmatprep.subr.mxu0 0.0
    %192 = vmatpush1.msra.mxu0 0.0
    %193 = vmatprep.subr.mxu0 0.0
    %194 = vmatpush1.msra.mxu0 0.0
    %195 = vmatprep.subr.mxu0 0.0
    %196 = vmatpush1.msra.mxu0 0.0
    %197 = vmatprep.subr.mxu0 0.0
    %198 = vmatpush1.msra.mxu0 0.0
    %199 = vmatprep.subr.mxu0 0.0
    %200 = vmatpush1.msra.mxu0 0.0
    %201 = vmatprep.subr.mxu0 0.0
    %202 = vmatpush1.msra.mxu0 0.0
    %203 = vmatprep.subr.mxu0 0.0
    %204 = vmatpush1.msra.mxu0 0.0
    %205 = vmatprep.subr.mxu0 0.0
    %206 = vmatpush1.msra.mxu0 0.0
    %207 = vmatprep.subr.mxu0 0.0
    %208 = vmatpush1.msra.mxu0 0.0
    %209 = vmatprep.subr.mxu0 0.0
    %210 = vmatpush1.msra.mxu0 0.0
    %211 = vmatprep.subr.mxu0 0.0
    %212 = vmatpush1.msra.mxu0 0.0
    %213 = vmatprep.subr.mxu0 0.0
    %214 = vmatpush1.msra.mxu0 0.0
    %215 = vmatprep.mubr.f32.mxu0 0.0
    %216 = vmatmul.mubr.f32.gmra.mrb[0].mxu0 %v80
    %v217 = vpop.f32.mrb[0].mxu0
    %v218 = vadd.f32 %v149, %v217
    %v219 = vpop.f32.mrb[0].mxu0
    %220 = vmatprep.mubr.f32.mxu0 0.0
    %221 = vmatmul.mubr.f32.gmra.mrb[0].mxu0 %v81
    %v222 = vpop.f32.mrb[0].mxu0
    %v223 = vadd.f32 %v149, %v222
    %v224 = vpop.f32.mrb[0].mxu0
    %225 = vmatprep.mubr.f32.mxu0 0.0
    %226 = vmatmul.mubr.f32.gmra.mrb[0].mxu0 %v82
    %v227 = vpop.f32.mrb[0].mxu0
    %v228 = vadd.f32 %v149, %v227
    %v229 = vpop.f32.mrb[0].mxu0
    %230 = vmatprep.mubr.f32.mxu0 0.0
    %231 = vmatmul.mubr.f32.gmra.mrb[0].mxu0 %v83
    %v232 = vpop.f32.mrb[0].mxu0
    %v233 = vadd.f32 %v149, %v232
    %v234 = vpop.f32.mrb[0].mxu0
    %235 = vmatprep.mubr.f32.mxu0 0.0
    %236 = vmatmul.mubr.f32.gmra.mrb[0].mxu0 %v84
    %v237 = vpop.f32.mrb[0].mxu0
    %v238 = vadd.f32 %v149, %v237
    %v239 = vpop.f32.mrb[0].mxu0
    %240 = vmatprep.mubr.f32.mxu0 0.0
    %241 = vmatmul.mubr.f32.gmra.mrb[0].mxu0 %v85
    %v242 = vpop.f32.mrb[0].mxu0
    %v243 = vadd.f32 %v149, %v242
    %v244 = vpop.f32.mrb[0].mxu0
    %245 = vmatprep.mubr.f32.mxu0 0.0
    %246 = vmatmul.mubr.f32.gmra.mrb[0].mxu0 %v86
    %v247 = vpop.f32.mrb[0].mxu0
    %v248 = vadd.f32 %v149, %v247
    %v249 = vpop.f32.mrb[0].mxu0
    %250 = vmatprep.mubr.f32.mxu0 0.0
    %251 = vmatmul.mubr.f32.gmra.mrb[0].mxu0 %v87
    %v252 = vpop.f32.mrb[0].mxu0
    %v253 = vadd.f32 %v149, %v252
    %v254 = vpop.f32.mrb[0].mxu0
    %255 = vmatprep.mubr.f32.mxu0 0.0
    %256 = vmatmul.mubr.f32.gmra.mrb[0].mxu0 %v88
    %v257 = vpop.f32.mrb[0].mxu0
    %v258 = vadd.f32 %v149, %v257
    %v259 = vpop.f32.mrb[0].mxu0
    %260 = vmatprep.mubr.f32.mxu0 0.0
    %261 = vmatmul.mubr.f32.gmra.mrb[0].mxu0 %v89
    %v262 = vpop.f32.mrb[0].mxu0
    %v263 = vadd.f32 %v149, %v262
    %v264 = vpop.f32.mrb[0].mxu0
    %265 = vmatprep.mubr.f32.mxu0 0.0
    %266 = vmatmul.mubr.f32.gmra.mrb[0].mxu0 %v90
    %v267 = vpop.f32.mrb[0].mxu0
    %v268 = vadd.f32 %v149, %v267
    %v269 = vpop.f32.mrb[0].mxu0
    %270 = vmatprep.mubr.f32.mxu0 0.0
    %271 = vmatmul.mubr.f32.gmra.mrb[0].mxu0 %v91
    %v272 = vpop.f32.mrb[0].mxu0
    %v273 = vadd.f32 %v149, %v272
    %v274 = vpop.f32.mrb[0].mxu0
    %275 = vmatprep.mubr.f32.mxu0 0.0
    %276 = vmatmul.mubr.f32.gmra.mrb[0].mxu0 %v92
    %v277 = vpop.f32.mrb[0].mxu0
    %v278 = vadd.f32 %v149, %v277
    %v279 = vpop.f32.mrb[0].mxu0
    %280 = vmatprep.mubr.f32.mxu0 0.0
    %281 = vmatmul.mubr.f32.gmra.mrb[0].mxu0 %v93
    %v282 = vpop.f32.mrb[0].mxu0
    %v283 = vadd.f32 %v149, %v282
    %v284 = vpop.f32.mrb[0].mxu0
    %285 = vmatprep.mubr.f32.mxu0 0.0
    %286 = vmatmul.mubr.f32.gmra.mrb[0].mxu0 %v94
    %v287 = vpop.f32.mrb[0].mxu0
    %v288 = vadd.f32 %v149, %v287
    %v289 = vpop.f32.mrb[0].mxu0
    %290 = vmatprep.mubr.f32.mxu0 0.0
    %291 = vmatmul.mubr.f32.gmra.mrb[0].mxu0 %v95
    %v292 = vpop.f32.mrb[0].mxu0
    %v293 = vadd.f32 %v149, %v292
    %v294 = vpop.f32.mrb[0].mxu0
    %295 = vmatprep.mubr.f32.mxu0 0.0
    %296 = vmatmul.mubr.f32.gmra.mrb[0].mxu0 %v96
    %v297 = vpop.f32.mrb[0].mxu0
    %v298 = vadd.f32 %v149, %v297
    %v299 = vpop.f32.mrb[0].mxu0
    %300 = vmatprep.mubr.f32.mxu0 0.0
    %301 = vmatmul.mubr.f32.gmra.mrb[0].mxu0 %v97
    %v302 = vpop.f32.mrb[0].mxu0
    %v303 = vadd.f32 %v149, %v302
    %v304 = vpop.f32.mrb[0].mxu0
    %305 = vmatprep.mubr.f32.mxu0 0.0
    %306 = vmatmul.mubr.f32.gmra.mrb[0].mxu0 %v98
    %v307 = vpop.f32.mrb[0].mxu0
    %v308 = vadd.f32 %v149, %v307
    %v309 = vpop.f32.mrb[0].mxu0
    %310 = vmatprep.mubr.f32.mxu0 0.0
    %311 = vmatmul.mubr.f32.gmra.mrb[0].mxu0 %v99
    %v312 = vpop.f32.mrb[0].mxu0
    %v313 = vadd.f32 %v149, %v312
    %v314 = vpop.f32.mrb[0].mxu0
    %315 = vmatprep.mubr.f32.mxu0 0.0
    %316 = vmatmul.mubr.f32.gmra.mrb[0].mxu0 %v100
    %v317 = vpop.f32.mrb[0].mxu0
    %v318 = vadd.f32 %v149, %v317
    %v319 = vpop.f32.mrb[0].mxu0
    %320 = vmatprep.mubr.f32.mxu0 0.0
    %321 = vmatmul.mubr.f32.gmra.mrb[0].mxu0 %v101
    %v322 = vpop.f32.mrb[0].mxu0
    %v323 = vadd.f32 %v149, %v322
    %v324 = vpop.f32.mrb[0].mxu0
    %325 = vmatprep.mubr.f32.mxu0 0.0
    %326 = vmatmul.mubr.f32.gmra.mrb[0].mxu0 %v102
    %v327 = vpop.f32.mrb[0].mxu0
    %v328 = vadd.f32 %v149, %v327
    %v329 = vpop.f32.mrb[0].mxu0
    %330 = vmatprep.mubr.f32.mxu0 0.0
    %331 = vmatmul.mubr.f32.gmra.mrb[0].mxu0 %v103
    %v332 = vpop.f32.mrb[0].mxu0
    %v333 = vadd.f32 %v149, %v332
    %v334 = vpop.f32.mrb[0].mxu0
    %335 = vmatprep.mubr.f32.mxu0 0.0
    %336 = vmatmul.mubr.f32.gmra.mrb[0].mxu0 %v104
    %v337 = vpop.f32.mrb[0].mxu0
    %v338 = vadd.f32 %v149, %v337
    %v339 = vpop.f32.mrb[0].mxu0
    %340 = vmatprep.mubr.f32.mxu0 0.0
    %341 = vmatmul.mubr.f32.gmra.mrb[0].mxu0 %v105
    %v342 = vpop.f32.mrb[0].mxu0
    %v343 = vadd.f32 %v149, %v342
    %v344 = vpop.f32.mrb[0].mxu0
    %345 = vmatprep.mubr.f32.mxu0 0.0
    %346 = vmatmul.mubr.f32.gmra.mrb[0].mxu0 %v106
    %v347 = vpop.f32.mrb[0].mxu0
    %v348 = vadd.f32 %v149, %v347
    %v349 = vpop.f32.mrb[0].mxu0
    %350 = vmatprep.mubr.f32.mxu0 0.0
    %351 = vmatmul.mubr.f32.gmra.mrb[0].mxu0 %v107
    %v352 = vpop.f32.mrb[0].mxu0
    %v353 = vadd.f32 %v149, %v352
    %v354 = vpop.f32.mrb[0].mxu0
    %355 = vmatprep.mubr.f32.mxu0 0.0
    %356 = vmatmul.mubr.f32.gmra.mrb[0].mxu0 %v108
    %v357 = vpop.f32.mrb[0].mxu0
    %v358 = vadd.f32 %v149, %v357
    %v359 = vpop.f32.mrb[0].mxu0
    %360 = vmatprep.mubr.f32.mxu0 0.0
    %361 = vmatmul.mubr.f32.gmra.mrb[0].mxu0 %v109
    %v362 = vpop.f32.mrb[0].mxu0
    %v363 = vadd.f32 %v149, %v362
    %v364 = vpop.f32.mrb[0].mxu0
    %365 = vmatprep.mubr.f32.mxu0 0.0
    %366 = vmatmul.mubr.f32.gmra.mrb[0].mxu0 %v110
    %v367 = vpop.f32.mrb[0].mxu0
    %v368 = vadd.f32 %v149, %v367
    %v369 = vpop.f32.mrb[0].mxu0
    %370 = vmatprep.mubr.f32.mxu0 0.0
    %371 = vmatmul.mubr.f32.gmra.mrb[0].mxu0 %v111
    %v372 = vpop.f32.mrb[0].mxu0
    %v373 = vadd.f32 %v149, %v372
    %v374 = vpop.f32.mrb[0].mxu0
    %375 = vmatprep.mubr.f32.mxu0 0.0
    %376 = vmatmul.mubr.f32.gmra.mrb[0].mxu0 %v112
    %v377 = vpop.f32.mrb[0].mxu0
    %v378 = vadd.f32 %v149, %v377
    %v379 = vpop.f32.mrb[0].mxu0
    %380 = vmatprep.mubr.f32.mxu0 0.0
    %381 = vmatmul.mubr.f32.gmra.mrb[0].mxu0 %v113
    %v382 = vpop.f32.mrb[0].mxu0
    %v383 = vadd.f32 %v149, %v382
    %v384 = vpop.f32.mrb[0].mxu0
    %385 = vmatprep.mubr.f32.mxu0 0.0
    %386 = vmatmul.mubr.f32.gmra.mrb[0].mxu0 %v114
    %v387 = vpop.f32.mrb[0].mxu0
    %v388 = vadd.f32 %v149, %v387
    %v389 = vpop.f32.mrb[0].mxu0
    %390 = vmatprep.mubr.f32.mxu0 0.0
    %391 = vmatmul.mubr.f32.gmra.mrb[0].mxu0 %v115
    %v392 = vpop.f32.mrb[0].mxu0
    %v393 = vadd.f32 %v149, %v392
    %v394 = vpop.f32.mrb[0].mxu0
    %395 = vmatprep.mubr.f32.mxu0 0.0
    %396 = vmatmul.mubr.f32.gmra.mrb[0].mxu0 %v116
    %v397 = vpop.f32.mrb[0].mxu0
    %v398 = vadd.f32 %v149, %v397
    %v399 = vpop.f32.mrb[0].mxu0
    %400 = vmatprep.mubr.f32.mxu0 0.0
    %401 = vmatmul.mubr.f32.gmra.mrb[0].mxu0 %v117
    %v402 = vpop.f32.mrb[0].mxu0
    %v403 = vadd.f32 %v149, %v402
    %v404 = vpop.f32.mrb[0].mxu0
    %405 = vmatprep.mubr.f32.mxu0 0.0
    %406 = vmatmul.mubr.f32.gmra.mrb[0].mxu0 %v118
    %v407 = vpop.f32.mrb[0].mxu0
    %v408 = vadd.f32 %v149, %v407
    %v409 = vpop.f32.mrb[0].mxu0
    %410 = vmatprep.mubr.f32.mxu0 0.0
    %411 = vmatmul.mubr.f32.gmra.mrb[0].mxu0 %v119
    %v412 = vpop.f32.mrb[0].mxu0
    %v413 = vadd.f32 %v149, %v412
    %v414 = vpop.f32.mrb[0].mxu0
    %415 = vmatprep.mubr.f32.mxu0 0.0
    %416 = vmatmul.mubr.f32.gmra.mrb[0].mxu0 %v120
    %v417 = vpop.f32.mrb[0].mxu0
    %v418 = vadd.f32 %v149, %v417
    %v419 = vpop.f32.mrb[0].mxu0
    %420 = vmatprep.mubr.f32.mxu0 0.0
    %421 = vmatmul.mubr.f32.gmra.mrb[0].mxu0 %v121
    %v422 = vpop.f32.mrb[0].mxu0
    %v423 = vadd.f32 %v149, %v422
    %v424 = vpop.f32.mrb[0].mxu0
    %425 = vmatprep.mubr.f32.mxu0 0.0
    %426 = vmatmul.mubr.f32.gmra.mrb[0].mxu0 %v122
    %v427 = vpop.f32.mrb[0].mxu0
    %v428 = vadd.f32 %v149, %v427
    %v429 = vpop.f32.mrb[0].mxu0
    %430 = vmatprep.mubr.f32.mxu0 0.0
    %431 = vmatmul.mubr.f32.gmra.mrb[0].mxu0 %v123
    %v432 = vpop.f32.mrb[0].mxu0
    %v433 = vadd.f32 %v149, %v432
    %v434 = vpop.f32.mrb[0].mxu0
    %435 = vmatprep.mubr.f32.mxu0 0.0
    %436 = vmatmul.mubr.f32.gmra.mrb[0].mxu0 %v124
    %v437 = vpop.f32.mrb[0].mxu0
    %v438 = vadd.f32 %v149, %v437
    %v439 = vpop.f32.mrb[0].mxu0
    %440 = vmatprep.mubr.f32.mxu0 0.0
    %441 = vmatmul.mubr.f32.gmra.mrb[0].mxu0 %v125
    %v442 = vpop.f32.mrb[0].mxu0
    %v443 = vadd.f32 %v149, %v442
    %v444 = vpop.f32.mrb[0].mxu0
    %445 = vmatprep.mubr.f32.mxu0 0.0
    %446 = vmatmul.mubr.f32.gmra.mrb[0].mxu0 %v126
    %v447 = vpop.f32.mrb[0].mxu0
    %v448 = vadd.f32 %v149, %v447
    %v449 = vpop.f32.mrb[0].mxu0
    %450 = vmatprep.mubr.f32.mxu0 0.0
    %451 = vmatmul.mubr.f32.gmra.mrb[0].mxu0 %v127
    %v452 = vpop.f32.mrb[0].mxu0
    %v453 = vadd.f32 %v149, %v452
    %v454 = vpop.f32.mrb[0].mxu0
    %455 = vdwg.mxu0
    %456 = vst [vmem:[#allocation2] sm:$0xff] %v218
    %457 = vst [vmem:[#allocation2 + $0x8] sm:$0xff] %v223
    %458 = vst [vmem:[#allocation2 + $0x10] sm:$0xff] %v228
    %459 = vst [vmem:[#allocation2 + $0x18] sm:$0xff] %v233
    %460 = vst [vmem:[#allocation2 + $0x20] sm:$0xff] %v238
    %461 = vst [vmem:[#allocation2 + $0x28] sm:$0xff] %v243
    %462 = vst [vmem:[#allocation2 + $0x30] sm:$0xff] %v248
    %463 = vst [vmem:[#allocation2 + $0x38] sm:$0xff] %v253
    %464 = vst [vmem:[#allocation2 + $0x40] sm:$0xff] %v258
    %465 = vst [vmem:[#allocation2 + $0x48] sm:$0xff] %v263
    %466 = vst [vmem:[#allocation2 + $0x50] sm:$0xff] %v268
    %467 = vst [vmem:[#allocation2 + $0x58] sm:$0xff] %v273
    %468 = vst [vmem:[#allocation2 + $0x60] sm:$0xff] %v278
    %469 = vst [vmem:[#allocation2 + $0x68] sm:$0xff] %v283
    %470 = vst [vmem:[#allocation2 + $0x70] sm:$0xff] %v288
    %471 = vst [vmem:[#allocation2 + $0x78] sm:$0xff] %v293
    %472 = vst [vmem:[#allocation2 + $0x80] sm:$0xff] %v298
    %473 = vst [vmem:[#allocation2 + $0x88] sm:$0xff] %v303
    %474 = vst [vmem:[#allocation2 + $0x90] sm:$0xff] %v308
    %475 = vst [vmem:[#allocation2 + $0x98] sm:$0xff] %v313
    %476 = vst [vmem:[#allocation2 + $0xa0] sm:$0xff] %v318
    %477 = vst [vmem:[#allocation2 + $0xa8] sm:$0xff] %v323
    %478 = vst [vmem:[#allocation2 + $0xb0] sm:$0xff] %v328
    %479 = vst [vmem:[#allocation2 + $0xb8] sm:$0xff] %v333
    %480 = vst [vmem:[#allocation2 + $0xc0] sm:$0xff] %v338
    %481 = vst [vmem:[#allocation2 + $0xc8] sm:$0xff] %v343
    %482 = vst [vmem:[#allocation2 + $0xd0] sm:$0xff] %v348
    %483 = vst [vmem:[#allocation2 + $0xd8] sm:$0xff] %v353
    %484 = vst [vmem:[#allocation2 + $0xe0] sm:$0xff] %v358
    %485 = vst [vmem:[#allocation2 + $0xe8] sm:$0xff] %v363
    %486 = vst [vmem:[#allocation2 + $0xf0] sm:$0xff] %v368
    %487 = vst [vmem:[#allocation2 + $0xf8] sm:$0xff] %v373
    %488 = vst [vmem:[#allocation2 + $0x100] sm:$0xff] %v378
    %489 = vst [vmem:[#allocation2 + $0x108] sm:$0xff] %v383
    %490 = vst [vmem:[#allocation2 + $0x110] sm:$0xff] %v388
    %491 = vst [vmem:[#allocation2 + $0x118] sm:$0xff] %v393
    %492 = vst [vmem:[#allocation2 + $0x120] sm:$0xff] %v398
    %493 = vst [vmem:[#allocation2 + $0x128] sm:$0xff] %v403
    %494 = vst [vmem:[#allocation2 + $0x130] sm:$0xff] %v408
    %495 = vst [vmem:[#allocation2 + $0x138] sm:$0xff] %v413
    %496 = vst [vmem:[#allocation2 + $0x140] sm:$0xff] %v418
    %497 = vst [vmem:[#allocation2 + $0x148] sm:$0xff] %v423
    %498 = vst [vmem:[#allocation2 + $0x150] sm:$0xff] %v428
    %499 = vst [vmem:[#allocation2 + $0x158] sm:$0xff] %v433
    %500 = vst [vmem:[#allocation2 + $0x160] sm:$0xff] %v438
    %501 = vst [vmem:[#allocation2 + $0x168] sm:$0xff] %v443
    %502 = vst [vmem:[#allocation2 + $0x170] sm:$0xff] %v448
    %503 = vst [vmem:[#allocation2 + $0x178] sm:$0xff] %v453
    %v504 = vld [vmem:[#allocation4] sm:$0xff]
    %v505 = vld [vmem:[#allocation4 + $0x8] sm:$0xf]
    %v506 = vld [vmem:[#allocation4 + $0xc] sm:$0xff]
    %v507 = vld [vmem:[#allocation4 + $0x14] sm:$0xf]
    %v508 = vld [vmem:[#allocation4 + $0x18] sm:$0xff]
    %v509 = vld [vmem:[#allocation4 + $0x20] sm:$0xf]
    %v510 = vld [vmem:[#allocation4 + $0x24] sm:$0xff]
    %v511 = vld [vmem:[#allocation4 + $0x2c] sm:$0xf]
    %v512 = vld [vmem:[#allocation4 + $0x30] sm:$0xff]
    %v513 = vld [vmem:[#allocation4 + $0x38] sm:$0xf]
    %v514 = vld [vmem:[#allocation4 + $0x3c] sm:$0xff]
    %v515 = vld [vmem:[#allocation4 + $0x44] sm:$0xf]
    %v516 = vld [vmem:[#allocation4 + $0x48] sm:$0xff]
    %v517 = vld [vmem:[#allocation4 + $0x50] sm:$0xf]
    %v518 = vld [vmem:[#allocation4 + $0x54] sm:$0xff]
    %v519 = vld [vmem:[#allocation4 + $0x5c] sm:$0xf]
    %v520 = vld [vmem:[#allocation4 + $0x60] sm:$0xff]
    %v521 = vld [vmem:[#allocation4 + $0x68] sm:$0xf]
    %v522 = vld [vmem:[#allocation4 + $0x6c] sm:$0xff]
    %v523 = vld [vmem:[#allocation4 + $0x74] sm:$0xf]
    %v524 = vld [vmem:[#allocation4 + $0x78] sm:$0xff]
    %v525 = vld [vmem:[#allocation4 + $0x80] sm:$0xf]
    %v526 = vld [vmem:[#allocation4 + $0x84] sm:$0xff]
    %v527 = vld [vmem:[#allocation4 + $0x8c] sm:$0xf]
    %v528 = vld [vmem:[#allocation4 + $0x90] sm:$0xff]
    %v529 = vld [vmem:[#allocation4 + $0x98] sm:$0xf]
    %v530 = vld [vmem:[#allocation4 + $0x9c] sm:$0xff]
    %v531 = vld [vmem:[#allocation4 + $0xa4] sm:$0xf]
    %v532 = vld [vmem:[#allocation4 + $0xa8] sm:$0xff]
    %v533 = vld [vmem:[#allocation4 + $0xb0] sm:$0xf]
    %v534 = vld [vmem:[#allocation4 + $0xb4] sm:$0xff]
    %v535 = vld [vmem:[#allocation4 + $0xbc] sm:$0xf]
    %v536 = vld [vmem:[#allocation4 + $0xc0] sm:$0xff]
    %v537 = vld [vmem:[#allocation4 + $0xc8] sm:$0xf]
    %v538 = vld [vmem:[#allocation4 + $0xcc] sm:$0xff]
    %v539 = vld [vmem:[#allocation4 + $0xd4] sm:$0xf]
    %v540 = vld [vmem:[#allocation4 + $0xd8] sm:$0xff]
    %v541 = vld [vmem:[#allocation4 + $0xe0] sm:$0xf]
    %v542 = vld [vmem:[#allocation4 + $0xe4] sm:$0xff]
    %v543 = vld [vmem:[#allocation4 + $0xec] sm:$0xf]
    %v544 = vld [vmem:[#allocation4 + $0xf0] sm:$0xff]
    %v545 = vld [vmem:[#allocation4 + $0xf8] sm:$0xf]
    %v546 = vld [vmem:[#allocation4 + $0xfc] sm:$0xff]
    %v547 = vld [vmem:[#allocation4 + $0x104] sm:$0xf]
    %v548 = vld [vmem:[#allocation4 + $0x108] sm:$0xff]
    %v549 = vld [vmem:[#allocation4 + $0x110] sm:$0xf]
    %v550 = vld [vmem:[#allocation4 + $0x114] sm:$0xff]
    %v551 = vld [vmem:[#allocation4 + $0x11c] sm:$0xf]
    %v552 = vld [vmem:[#allocation4 + $0x120] sm:$0xff]
    %v553 = vld [vmem:[#allocation4 + $0x128] sm:$0xf]
    %v554 = vld [vmem:[#allocation4 + $0x12c] sm:$0xff]
    %v555 = vld [vmem:[#allocation4 + $0x134] sm:$0xf]
    %v556 = vld [vmem:[#allocation4 + $0x138] sm:$0xff]
    %v557 = vld [vmem:[#allocation4 + $0x140] sm:$0xf]
    %v558 = vld [vmem:[#allocation4 + $0x144] sm:$0xff]
    %v559 = vld [vmem:[#allocation4 + $0x14c] sm:$0xf]
    %v560 = vld [vmem:[#allocation4 + $0x150] sm:$0xff]
    %v561 = vld [vmem:[#allocation4 + $0x158] sm:$0xf]
    %v562 = vld [vmem:[#allocation4 + $0x15c] sm:$0xff]
    %v563 = vld [vmem:[#allocation4 + $0x164] sm:$0xf]
    %v564 = vld [vmem:[#allocation4 + $0x168] sm:$0xff]
    %v565 = vld [vmem:[#allocation4 + $0x170] sm:$0xf]
    %v566 = vld [vmem:[#allocation4 + $0x174] sm:$0xff]
    %v567 = vld [vmem:[#allocation4 + $0x17c] sm:$0xf]
    %v568 = vld [vmem:[#allocation4 + $0x180] sm:$0xff]
    %v569 = vld [vmem:[#allocation4 + $0x188] sm:$0xf]
    %v570 = vld [vmem:[#allocation4 + $0x18c] sm:$0xff]
    %v571 = vld [vmem:[#allocation4 + $0x194] sm:$0xf]
    %v572 = vld [vmem:[#allocation4 + $0x198] sm:$0xff]
    %v573 = vld [vmem:[#allocation4 + $0x1a0] sm:$0xf]
    %v574 = vld [vmem:[#allocation4 + $0x1a4] sm:$0xff]
    %v575 = vld [vmem:[#allocation4 + $0x1ac] sm:$0xf]
    %v576 = vld [vmem:[#allocation4 + $0x1b0] sm:$0xff]
    %v577 = vld [vmem:[#allocation4 + $0x1b8] sm:$0xf]
    %v578 = vld [vmem:[#allocation4 + $0x1bc] sm:$0xff]
    %v579 = vld [vmem:[#allocation4 + $0x1c4] sm:$0xf]
    %v580 = vld [vmem:[#allocation4 + $0x1c8] sm:$0xff]
    %v581 = vld [vmem:[#allocation4 + $0x1d0] sm:$0xf]
    %v582 = vld [vmem:[#allocation4 + $0x1d4] sm:$0xff]
    %v583 = vld [vmem:[#allocation4 + $0x1dc] sm:$0xf]
    %v584 = vld [vmem:[#allocation4 + $0x1e0] sm:$0xff]
    %v585 = vld [vmem:[#allocation4 + $0x1e8] sm:$0xf]
    %v586 = vld [vmem:[#allocation4 + $0x1ec] sm:$0xff]
    %v587 = vld [vmem:[#allocation4 + $0x1f4] sm:$0xf]
    %v588 = vld [vmem:[#allocation4 + $0x1f8] sm:$0xff]
    %v589 = vld [vmem:[#allocation4 + $0x200] sm:$0xf]
    %v590 = vld [vmem:[#allocation4 + $0x204] sm:$0xff]
    %v591 = vld [vmem:[#allocation4 + $0x20c] sm:$0xf]
    %v592 = vld [vmem:[#allocation4 + $0x210] sm:$0xff]
    %v593 = vld [vmem:[#allocation4 + $0x218] sm:$0xf]
    %v594 = vld [vmem:[#allocation4 + $0x21c] sm:$0xff]
    %v595 = vld [vmem:[#allocation4 + $0x224] sm:$0xf]
    %v596 = vld [vmem:[#allocation4 + $0x228] sm:$0xff]
    %v597 = vld [vmem:[#allocation4 + $0x230] sm:$0xf]
    %v598 = vld [vmem:[#allocation4 + $0x234] sm:$0xff]
    %v599 = vld [vmem:[#allocation4 + $0x23c] sm:$0xf]
    %v600 = vld [vmem:[#allocation2] sm:$0xff]
    %v601 = vld [vmem:[#allocation2 + $0x8] sm:$0xff]
    %v602 = vld [vmem:[#allocation2 + $0x10] sm:$0xff]
    %v603 = vld [vmem:[#allocation2 + $0x18] sm:$0xff]
    %v604 = vld [vmem:[#allocation2 + $0x20] sm:$0xff]
    %v605 = vld [vmem:[#allocation2 + $0x28] sm:$0xff]
    %v606 = vld [vmem:[#allocation2 + $0x30] sm:$0xff]
    %v607 = vld [vmem:[#allocation2 + $0x38] sm:$0xff]
    %v608 = vld [vmem:[#allocation2 + $0x40] sm:$0xff]
    %v609 = vld [vmem:[#allocation2 + $0x48] sm:$0xff]
    %v610 = vld [vmem:[#allocation2 + $0x50] sm:$0xff]
    %v611 = vld [vmem:[#allocation2 + $0x58] sm:$0xff]
    %v612 = vld [vmem:[#allocation2 + $0x60] sm:$0xff]
    %v613 = vld [vmem:[#allocation2 + $0x68] sm:$0xff]
    %v614 = vld [vmem:[#allocation2 + $0x70] sm:$0xff]
    %v615 = vld [vmem:[#allocation2 + $0x78] sm:$0xff]
    %v616 = vld [vmem:[#allocation2 + $0x80] sm:$0xff]
    %v617 = vld [vmem:[#allocation2 + $0x88] sm:$0xff]
    %v618 = vld [vmem:[#allocation2 + $0x90] sm:$0xff]
    %v619 = vld [vmem:[#allocation2 + $0x98] sm:$0xff]
    %v620 = vld [vmem:[#allocation2 + $0xa0] sm:$0xff]
    %v621 = vld [vmem:[#allocation2 + $0xa8] sm:$0xff]
    %v622 = vld [vmem:[#allocation2 + $0xb0] sm:$0xff]
    %v623 = vld [vmem:[#allocation2 + $0xb8] sm:$0xff]
    %v624 = vld [vmem:[#allocation2 + $0xc0] sm:$0xff]
    %v625 = vld [vmem:[#allocation2 + $0xc8] sm:$0xff]
    %v626 = vld [vmem:[#allocation2 + $0xd0] sm:$0xff]
    %v627 = vld [vmem:[#allocation2 + $0xd8] sm:$0xff]
    %v628 = vld [vmem:[#allocation2 + $0xe0] sm:$0xff]
    %v629 = vld [vmem:[#allocation2 + $0xe8] sm:$0xff]
    %v630 = vld [vmem:[#allocation2 + $0xf0] sm:$0xff]
    %v631 = vld [vmem:[#allocation2 + $0xf8] sm:$0xff]
    %v632 = vld [vmem:[#allocation2 + $0x100] sm:$0xff]
    %v633 = vld [vmem:[#allocation2 + $0x108] sm:$0xff]
    %v634 = vld [vmem:[#allocation2 + $0x110] sm:$0xff]
    %v635 = vld [vmem:[#allocation2 + $0x118] sm:$0xff]
    %v636 = vld [vmem:[#allocation2 + $0x120] sm:$0xff]
    %v637 = vld [vmem:[#allocation2 + $0x128] sm:$0xff]
    %v638 = vld [vmem:[#allocation2 + $0x130] sm:$0xff]
    %v639 = vld [vmem:[#allocation2 + $0x138] sm:$0xff]
    %v640 = vld [vmem:[#allocation2 + $0x140] sm:$0xff]
    %v641 = vld [vmem:[#allocation2 + $0x148] sm:$0xff]
    %v642 = vld [vmem:[#allocation2 + $0x150] sm:$0xff]
    %v643 = vld [vmem:[#allocation2 + $0x158] sm:$0xff]
    %v644 = vld [vmem:[#allocation2 + $0x160] sm:$0xff]
    %v645 = vld [vmem:[#allocation2 + $0x168] sm:$0xff]
    %v646 = vld [vmem:[#allocation2 + $0x170] sm:$0xff]
    %v647 = vld [vmem:[#allocation2 + $0x178] sm:$0xff]
    %v648 = vpack.c.bf16 %v601, %v600
    %v649 = vpack.c.bf16 %v603, %v602
    %v650 = vpack.c.bf16 %v605, %v604
    %v651 = vpack.c.bf16 %v607, %v606
    %v652 = vpack.c.bf16 %v609, %v608
    %v653 = vpack.c.bf16 %v611, %v610
    %v654 = vpack.c.bf16 %v613, %v612
    %v655 = vpack.c.bf16 %v615, %v614
    %v656 = vpack.c.bf16 %v617, %v616
    %v657 = vpack.c.bf16 %v619, %v618
    %v658 = vpack.c.bf16 %v621, %v620
    %v659 = vpack.c.bf16 %v623, %v622
    %v660 = vpack.c.bf16 %v625, %v624
    %v661 = vpack.c.bf16 %v627, %v626
    %v662 = vpack.c.bf16 %v629, %v628
    %v663 = vpack.c.bf16 %v631, %v630
    %v664 = vpack.c.bf16 %v633, %v632
    %v665 = vpack.c.bf16 %v635, %v634
    %v666 = vpack.c.bf16 %v637, %v636
    %v667 = vpack.c.bf16 %v639, %v638
    %v668 = vpack.c.bf16 %v641, %v640
    %v669 = vpack.c.bf16 %v643, %v642
    %v670 = vpack.c.bf16 %v645, %v644
    %v671 = vpack.c.bf16 %v647, %v646
    %v768 = vunpack.c.l.b16 %v504
    %v769 = vunpack.c.h.b16 %v504
    %v770 = vunpack.c.l.b16 %v505
    %v771 = vunpack.c.l.b16 %v506
    %v772 = vunpack.c.h.b16 %v506
    %v773 = vunpack.c.l.b16 %v507
    %v774 = vunpack.c.l.b16 %v508
    %v775 = vunpack.c.h.b16 %v508
    %v776 = vunpack.c.l.b16 %v509
    %v777 = vunpack.c.l.b16 %v510
    %v778 = vunpack.c.h.b16 %v510
    %v779 = vunpack.c.l.b16 %v511
    %v780 = vunpack.c.l.b16 %v512
    %v781 = vunpack.c.h.b16 %v512
    %v782 = vunpack.c.l.b16 %v513
    %v783 = vunpack.c.l.b16 %v514
    %v784 = vunpack.c.h.b16 %v514
    %v785 = vunpack.c.l.b16 %v515
    %v786 = vunpack.c.l.b16 %v516
    %v787 = vunpack.c.h.b16 %v516
    %v788 = vunpack.c.l.b16 %v517
    %v789 = vunpack.c.l.b16 %v518
    %v790 = vunpack.c.h.b16 %v518
    %v791 = vunpack.c.l.b16 %v519
    %v792 = vunpack.c.l.b16 %v520
    %v793 = vunpack.c.h.b16 %v520
    %v794 = vunpack.c.l.b16 %v521
    %v795 = vunpack.c.l.b16 %v522
    %v796 = vunpack.c.h.b16 %v522
    %v797 = vunpack.c.l.b16 %v523
    %v798 = vunpack.c.l.b16 %v524
    %v799 = vunpack.c.h.b16 %v524
    %v800 = vunpack.c.l.b16 %v525
    %v801 = vunpack.c.l.b16 %v526
    %v802 = vunpack.c.h.b16 %v526
    %v803 = vunpack.c.l.b16 %v527
    %v804 = vunpack.c.l.b16 %v528
    %v805 = vunpack.c.h.b16 %v528
    %v806 = vunpack.c.l.b16 %v529
    %v807 = vunpack.c.l.b16 %v530
    %v808 = vunpack.c.h.b16 %v530
    %v809 = vunpack.c.l.b16 %v531
    %v810 = vunpack.c.l.b16 %v532
    %v811 = vunpack.c.h.b16 %v532
    %v812 = vunpack.c.l.b16 %v533
    %v813 = vunpack.c.l.b16 %v534
    %v814 = vunpack.c.h.b16 %v534
    %v815 = vunpack.c.l.b16 %v535
    %v816 = vunpack.c.l.b16 %v536
    %v817 = vunpack.c.h.b16 %v536
    %v818 = vunpack.c.l.b16 %v537
    %v819 = vunpack.c.l.b16 %v538
    %v820 = vunpack.c.h.b16 %v538
    %v821 = vunpack.c.l.b16 %v539
    %v822 = vunpack.c.l.b16 %v540
    %v823 = vunpack.c.h.b16 %v540
    %v824 = vunpack.c.l.b16 %v541
    %v825 = vunpack.c.l.b16 %v542
    %v826 = vunpack.c.h.b16 %v542
    %v827 = vunpack.c.l.b16 %v543
    %v828 = vunpack.c.l.b16 %v544
    %v829 = vunpack.c.h.b16 %v544
    %v830 = vunpack.c.l.b16 %v545
    %v831 = vunpack.c.l.b16 %v546
    %v832 = vunpack.c.h.b16 %v546
    %v833 = vunpack.c.l.b16 %v547
    %v834 = vunpack.c.l.b16 %v548
    %v835 = vunpack.c.h.b16 %v548
    %v836 = vunpack.c.l.b16 %v549
    %v837 = vunpack.c.l.b16 %v550
    %v838 = vunpack.c.h.b16 %v550
    %v839 = vunpack.c.l.b16 %v551
    %v840 = vunpack.c.l.b16 %v552
    %v841 = vunpack.c.h.b16 %v552
    %v842 = vunpack.c.l.b16 %v553
    %v843 = vunpack.c.l.b16 %v554
    %v844 = vunpack.c.h.b16 %v554
    %v845 = vunpack.c.l.b16 %v555
    %v846 = vunpack.c.l.b16 %v556
    %v847 = vunpack.c.h.b16 %v556
    %v848 = vunpack.c.l.b16 %v557
    %v849 = vunpack.c.l.b16 %v558
    %v850 = vunpack.c.h.b16 %v558
    %v851 = vunpack.c.l.b16 %v559
    %v852 = vunpack.c.l.b16 %v560
    %v853 = vunpack.c.h.b16 %v560
    %v854 = vunpack.c.l.b16 %v561
    %v855 = vunpack.c.l.b16 %v562
    %v856 = vunpack.c.h.b16 %v562
    %v857 = vunpack.c.l.b16 %v563
    %v858 = vunpack.c.l.b16 %v564
    %v859 = vunpack.c.h.b16 %v564
    %v860 = vunpack.c.l.b16 %v565
    %v861 = vunpack.c.l.b16 %v566
    %v862 = vunpack.c.h.b16 %v566
    %v863 = vunpack.c.l.b16 %v567
    %v864 = vunpack.c.l.b16 %v568
    %v865 = vunpack.c.h.b16 %v568
    %v866 = vunpack.c.l.b16 %v569
    %v867 = vunpack.c.l.b16 %v570
    %v868 = vunpack.c.h.b16 %v570
    %v869 = vunpack.c.l.b16 %v571
    %v870 = vunpack.c.l.b16 %v572
    %v871 = vunpack.c.h.b16 %v572
    %v872 = vunpack.c.l.b16 %v573
    %v873 = vunpack.c.l.b16 %v574
    %v874 = vunpack.c.h.b16 %v574
    %v875 = vunpack.c.l.b16 %v575
    %v876 = vunpack.c.l.b16 %v576
    %v877 = vunpack.c.h.b16 %v576
    %v878 = vunpack.c.l.b16 %v577
    %v879 = vunpack.c.l.b16 %v578
    %v880 = vunpack.c.h.b16 %v578
    %v881 = vunpack.c.l.b16 %v579
    %v882 = vunpack.c.l.b16 %v580
    %v883 = vunpack.c.h.b16 %v580
    %v884 = vunpack.c.l.b16 %v581
    %v885 = vunpack.c.l.b16 %v582
    %v886 = vunpack.c.h.b16 %v582
    %v887 = vunpack.c.l.b16 %v583
    %v888 = vunpack.c.l.b16 %v584
    %v889 = vunpack.c.h.b16 %v584
    %v890 = vunpack.c.l.b16 %v585
    %v891 = vunpack.c.l.b16 %v586
    %v892 = vunpack.c.h.b16 %v586
    %v893 = vunpack.c.l.b16 %v587
    %v894 = vunpack.c.l.b16 %v588
    %v895 = vunpack.c.h.b16 %v588
    %v896 = vunpack.c.l.b16 %v589
    %v897 = vunpack.c.l.b16 %v590
    %v898 = vunpack.c.h.b16 %v590
    %v899 = vunpack.c.l.b16 %v591
    %v900 = vunpack.c.l.b16 %v592
    %v901 = vunpack.c.h.b16 %v592
    %v902 = vunpack.c.l.b16 %v593
    %v903 = vunpack.c.l.b16 %v594
    %v904 = vunpack.c.h.b16 %v594
    %v905 = vunpack.c.l.b16 %v595
    %v906 = vunpack.c.l.b16 %v596
    %v907 = vunpack.c.h.b16 %v596
    %v908 = vunpack.c.l.b16 %v597
    %v909 = vunpack.c.l.b16 %v598
    %v910 = vunpack.c.h.b16 %v598
    %v911 = vunpack.c.l.b16 %v599
    %v912 = vpack.c.b16 %v771, %v768
    %v913 = vpack.c.b16 %v772, %v769
    %v914 = vpack.c.b16 %v773, %v770
    %v915 = vpack.c.b16 %v777, %v774
    %v916 = vpack.c.b16 %v778, %v775
    %v917 = vpack.c.b16 %v779, %v776
    %v918 = vpack.c.b16 %v783, %v780
    %v919 = vpack.c.b16 %v784, %v781
    %v920 = vpack.c.b16 %v785, %v782
    %v921 = vpack.c.b16 %v789, %v786
    %v922 = vpack.c.b16 %v790, %v787
    %v923 = vpack.c.b16 %v791, %v788
    %v924 = vpack.c.b16 %v795, %v792
    %v925 = vpack.c.b16 %v796, %v793
    %v926 = vpack.c.b16 %v797, %v794
    %v927 = vpack.c.b16 %v801, %v798
    %v928 = vpack.c.b16 %v802, %v799
    %v929 = vpack.c.b16 %v803, %v800
    %v930 = vpack.c.b16 %v807, %v804
    %v931 = vpack.c.b16 %v808, %v805
    %v932 = vpack.c.b16 %v809, %v806
    %v933 = vpack.c.b16 %v813, %v810
    %v934 = vpack.c.b16 %v814, %v811
    %v935 = vpack.c.b16 %v815, %v812
    %v936 = vpack.c.b16 %v819, %v816
    %v937 = vpack.c.b16 %v820, %v817
    %v938 = vpack.c.b16 %v821, %v818
    %v939 = vpack.c.b16 %v825, %v822
    %v940 = vpack.c.b16 %v826, %v823
    %v941 = vpack.c.b16 %v827, %v824
    %v942 = vpack.c.b16 %v831, %v828
    %v943 = vpack.c.b16 %v832, %v829
    %v944 = vpack.c.b16 %v833, %v830
    %v945 = vpack.c.b16 %v837, %v834
    %v946 = vpack.c.b16 %v838, %v835
    %v947 = vpack.c.b16 %v839, %v836
    %v948 = vpack.c.b16 %v843, %v840
    %v949 = vpack.c.b16 %v844, %v841
    %v950 = vpack.c.b16 %v845, %v842
    %v951 = vpack.c.b16 %v849, %v846
    %v952 = vpack.c.b16 %v850, %v847
    %v953 = vpack.c.b16 %v851, %v848
    %v954 = vpack.c.b16 %v855, %v852
    %v955 = vpack.c.b16 %v856, %v853
    %v956 = vpack.c.b16 %v857, %v854
    %v957 = vpack.c.b16 %v861, %v858
    %v958 = vpack.c.b16 %v862, %v859
    %v959 = vpack.c.b16 %v863, %v860
    %v960 = vpack.c.b16 %v867, %v864
    %v961 = vpack.c.b16 %v868, %v865
    %v962 = vpack.c.b16 %v869, %v866
    %v963 = vpack.c.b16 %v873, %v870
    %v964 = vpack.c.b16 %v874, %v871
    %v965 = vpack.c.b16 %v875, %v872
    %v966 = vpack.c.b16 %v879, %v876
    %v967 = vpack.c.b16 %v880, %v877
    %v968 = vpack.c.b16 %v881, %v878
    %v969 = vpack.c.b16 %v885, %v882
    %v970 = vpack.c.b16 %v886, %v883
    %v971 = vpack.c.b16 %v887, %v884
    %v972 = vpack.c.b16 %v891, %v888
    %v973 = vpack.c.b16 %v892, %v889
    %v974 = vpack.c.b16 %v893, %v890
    %v975 = vpack.c.b16 %v897, %v894
    %v976 = vpack.c.b16 %v898, %v895
    %v977 = vpack.c.b16 %v899, %v896
    %v978 = vpack.c.b16 %v903, %v900
    %v979 = vpack.c.b16 %v904, %v901
    %v980 = vpack.c.b16 %v905, %v902
    %v981 = vpack.c.b16 %v909, %v906
    %v982 = vpack.c.b16 %v910, %v907
    %v983 = vpack.c.b16 %v911, %v908
    %1056 = vmatprep.subr.bf16.mxu0 0
    %1057 = vmatpush1.bf16.msra.mxu0 %v648
    %1058 = vmatprep.subr.bf16.mxu0 0
    %1059 = vmatpush1.bf16.msra.mxu0 %v649
    %1060 = vmatprep.subr.bf16.mxu0 0
    %1061 = vmatpush1.bf16.msra.mxu0 %v650
    %1062 = vmatprep.subr.bf16.mxu0 0
    %1063 = vmatpush1.bf16.msra.mxu0 %v651
    %1064 = vmatprep.subr.bf16.mxu0 0
    %1065 = vmatpush1.bf16.msra.mxu0 %v652
    %1066 = vmatprep.subr.bf16.mxu0 0
    %1067 = vmatpush1.bf16.msra.mxu0 %v653
    %1068 = vmatprep.subr.bf16.mxu0 0
    %1069 = vmatpush1.bf16.msra.mxu0 %v654
    %1070 = vmatprep.subr.bf16.mxu0 0
    %1071 = vmatpush1.bf16.msra.mxu0 %v655
    %1072 = vmatprep.subr.bf16.mxu0 0
    %1073 = vmatpush1.bf16.msra.mxu0 %v656
    %1074 = vmatprep.subr.bf16.mxu0 0
    %1075 = vmatpush1.bf16.msra.mxu0 %v657
    %1076 = vmatprep.subr.bf16.mxu0 0
    %1077 = vmatpush1.bf16.msra.mxu0 %v658
    %1078 = vmatprep.subr.bf16.mxu0 0
    %1079 = vmatpush1.bf16.msra.mxu0 %v659
    %1080 = vmatprep.subr.bf16.mxu0 0
    %1081 = vmatpush1.bf16.msra.mxu0 %v660
    %1082 = vmatprep.subr.bf16.mxu0 0
    %1083 = vmatpush1.bf16.msra.mxu0 %v661
    %1084 = vmatprep.subr.bf16.mxu0 0
    %1085 = vmatpush1.bf16.msra.mxu0 %v662
    %1086 = vmatprep.subr.bf16.mxu0 0
    %1087 = vmatpush1.bf16.msra.mxu0 %v663
    %1088 = vmatprep.mubr.bf16.mxu0 %v913
    %1089 = vmatmul.mubr.bf16.gmra.mrb[0].mxu0 %v912
    %v1090 = vpop.f32.mrb[0].mxu0
    %v1091 = vadd.f32 0.0, %v1090
    %v1092 = vpop.f32.mrb[0].mxu0
    %v1093 = vpop.f32.mrb[0].mxu0
    %v1094 = vadd.f32 0.0, %v1093
    %v1095 = vpop.f32.mrb[0].mxu0
    %1096 = vmatprep.mubr.bf16.mxu0 %v916
    %1097 = vmatmul.mubr.bf16.gmra.mrb[0].mxu0 %v915
    %v1098 = vpop.f32.mrb[0].mxu0
    %v1099 = vadd.f32 0.0, %v1098
    %v1100 = vpop.f32.mrb[0].mxu0
    %v1101 = vpop.f32.mrb[0].mxu0
    %v1102 = vadd.f32 0.0, %v1101
    %v1103 = vpop.f32.mrb[0].mxu0
    %1104 = vmatprep.mubr.bf16.mxu0 %v919
    %1105 = vmatmul.mubr.bf16.gmra.mrb[0].mxu0 %v918
    %v1106 = vpop.f32.mrb[0].mxu0
    %v1107 = vadd.f32 0.0, %v1106
    %v1108 = vpop.f32.mrb[0].mxu0
    %v1109 = vpop.f32.mrb[0].mxu0
    %v1110 = vadd.f32 0.0, %v1109
    %v1111 = vpop.f32.mrb[0].mxu0
    %1112 = vmatprep.mubr.bf16.mxu0 %v922
    %1113 = vmatmul.mubr.bf16.gmra.mrb[0].mxu0 %v921
    %v1114 = vpop.f32.mrb[0].mxu0
    %v1115 = vadd.f32 0.0, %v1114
    %v1116 = vpop.f32.mrb[0].mxu0
    %v1117 = vpop.f32.mrb[0].mxu0
    %v1118 = vadd.f32 0.0, %v1117
    %v1119 = vpop.f32.mrb[0].mxu0
    %1120 = vmatprep.mubr.bf16.mxu0 %v925
    %1121 = vmatmul.mubr.bf16.gmra.mrb[0].mxu0 %v924
    %v1122 = vpop.f32.mrb[0].mxu0
    %v1123 = vadd.f32 0.0, %v1122
    %v1124 = vpop.f32.mrb[0].mxu0
    %v1125 = vpop.f32.mrb[0].mxu0
    %v1126 = vadd.f32 0.0, %v1125
    %v1127 = vpop.f32.mrb[0].mxu0
    %1128 = vmatprep.mubr.bf16.mxu0 %v928
    %1129 = vmatmul.mubr.bf16.gmra.mrb[0].mxu0 %v927
    %v1130 = vpop.f32.mrb[0].mxu0
    %v1131 = vadd.f32 0.0, %v1130
    %v1132 = vpop.f32.mrb[0].mxu0
    %v1133 = vpop.f32.mrb[0].mxu0
    %v1134 = vadd.f32 0.0, %v1133
    %v1135 = vpop.f32.mrb[0].mxu0
    %1136 = vmatprep.mubr.bf16.mxu0 %v931
    %1137 = vmatmul.mubr.bf16.gmra.mrb[0].mxu0 %v930
    %v1138 = vpop.f32.mrb[0].mxu0
    %v1139 = vadd.f32 0.0, %v1138
    %v1140 = vpop.f32.mrb[0].mxu0
    %v1141 = vpop.f32.mrb[0].mxu0
    %v1142 = vadd.f32 0.0, %v1141
    %v1143 = vpop.f32.mrb[0].mxu0
    %1144 = vmatprep.mubr.bf16.mxu0 %v934
    %1145 = vmatmul.mubr.bf16.gmra.mrb[0].mxu0 %v933
    %v1146 = vpop.f32.mrb[0].mxu0
    %v1147 = vadd.f32 0.0, %v1146
    %v1148 = vpop.f32.mrb[0].mxu0
    %v1149 = vpop.f32.mrb[0].mxu0
    %v1150 = vadd.f32 0.0, %v1149
    %v1151 = vpop.f32.mrb[0].mxu0
    %1152 = vmatprep.mubr.bf16.mxu0 %v937
    %1153 = vmatmul.mubr.bf16.gmra.mrb[0].mxu0 %v936
    %v1154 = vpop.f32.mrb[0].mxu0
    %v1155 = vadd.f32 0.0, %v1154
    %v1156 = vpop.f32.mrb[0].mxu0
    %v1157 = vpop.f32.mrb[0].mxu0
    %v1158 = vadd.f32 0.0, %v1157
    %v1159 = vpop.f32.mrb[0].mxu0
    %1160 = vmatprep.mubr.bf16.mxu0 %v940
    %1161 = vmatmul.mubr.bf16.gmra.mrb[0].mxu0 %v939
    %v1162 = vpop.f32.mrb[0].mxu0
    %v1163 = vadd.f32 0.0, %v1162
    %v1164 = vpop.f32.mrb[0].mxu0
    %v1165 = vpop.f32.mrb[0].mxu0
    %v1166 = vadd.f32 0.0, %v1165
    %v1167 = vpop.f32.mrb[0].mxu0
    %1168 = vmatprep.mubr.bf16.mxu0 %v943
    %1169 = vmatmul.mubr.bf16.gmra.mrb[0].mxu0 %v942
    %v1170 = vpop.f32.mrb[0].mxu0
    %v1171 = vadd.f32 0.0, %v1170
    %v1172 = vpop.f32.mrb[0].mxu0
    %v1173 = vpop.f32.mrb[0].mxu0
    %v1174 = vadd.f32 0.0, %v1173
    %v1175 = vpop.f32.mrb[0].mxu0
    %1176 = vmatprep.mubr.bf16.mxu0 %v946
    %1177 = vmatmul.mubr.bf16.gmra.mrb[0].mxu0 %v945
    %v1178 = vpop.f32.mrb[0].mxu0
    %v1179 = vadd.f32 0.0, %v1178
    %v1180 = vpop.f32.mrb[0].mxu0
    %v1181 = vpop.f32.mrb[0].mxu0
    %v1182 = vadd.f32 0.0, %v1181
    %v1183 = vpop.f32.mrb[0].mxu0
    %1184 = vmatprep.mubr.bf16.mxu0 %v949
    %1185 = vmatmul.mubr.bf16.gmra.mrb[0].mxu0 %v948
    %v1186 = vpop.f32.mrb[0].mxu0
    %v1187 = vadd.f32 0.0, %v1186
    %v1188 = vpop.f32.mrb[0].mxu0
    %v1189 = vpop.f32.mrb[0].mxu0
    %v1190 = vadd.f32 0.0, %v1189
    %v1191 = vpop.f32.mrb[0].mxu0
    %1192 = vmatprep.mubr.bf16.mxu0 %v952
    %1193 = vmatmul.mubr.bf16.gmra.mrb[0].mxu0 %v951
    %v1194 = vpop.f32.mrb[0].mxu0
    %v1195 = vadd.f32 0.0, %v1194
    %v1196 = vpop.f32.mrb[0].mxu0
    %v1197 = vpop.f32.mrb[0].mxu0
    %v1198 = vadd.f32 0.0, %v1197
    %v1199 = vpop.f32.mrb[0].mxu0
    %1200 = vmatprep.mubr.bf16.mxu0 %v955
    %1201 = vmatmul.mubr.bf16.gmra.mrb[0].mxu0 %v954
    %v1202 = vpop.f32.mrb[0].mxu0
    %v1203 = vadd.f32 0.0, %v1202
    %v1204 = vpop.f32.mrb[0].mxu0
    %v1205 = vpop.f32.mrb[0].mxu0
    %v1206 = vadd.f32 0.0, %v1205
    %v1207 = vpop.f32.mrb[0].mxu0
    %1208 = vmatprep.mubr.bf16.mxu0 %v958
    %1209 = vmatmul.mubr.bf16.gmra.mrb[0].mxu0 %v957
    %v1210 = vpop.f32.mrb[0].mxu0
    %v1211 = vadd.f32 0.0, %v1210
    %v1212 = vpop.f32.mrb[0].mxu0
    %v1213 = vpop.f32.mrb[0].mxu0
    %v1214 = vadd.f32 0.0, %v1213
    %v1215 = vpop.f32.mrb[0].mxu0
    %1216 = vmatprep.mubr.bf16.mxu0 %v961
    %1217 = vmatmul.mubr.bf16.gmra.mrb[0].mxu0 %v960
    %v1218 = vpop.f32.mrb[0].mxu0
    %v1219 = vadd.f32 0.0, %v1218
    %v1220 = vpop.f32.mrb[0].mxu0
    %v1221 = vpop.f32.mrb[0].mxu0
    %v1222 = vadd.f32 0.0, %v1221
    %v1223 = vpop.f32.mrb[0].mxu0
    %1224 = vmatprep.mubr.bf16.mxu0 %v964
    %1225 = vmatmul.mubr.bf16.gmra.mrb[0].mxu0 %v963
    %v1226 = vpop.f32.mrb[0].mxu0
    %v1227 = vadd.f32 0.0, %v1226
    %v1228 = vpop.f32.mrb[0].mxu0
    %v1229 = vpop.f32.mrb[0].mxu0
    %v1230 = vadd.f32 0.0, %v1229
    %v1231 = vpop.f32.mrb[0].mxu0
    %1232 = vmatprep.mubr.bf16.mxu0 %v967
    %1233 = vmatmul.mubr.bf16.gmra.mrb[0].mxu0 %v966
    %v1234 = vpop.f32.mrb[0].mxu0
    %v1235 = vadd.f32 0.0, %v1234
    %v1236 = vpop.f32.mrb[0].mxu0
    %v1237 = vpop.f32.mrb[0].mxu0
    %v1238 = vadd.f32 0.0, %v1237
    %v1239 = vpop.f32.mrb[0].mxu0
    %1240 = vmatprep.mubr.bf16.mxu0 %v970
    %1241 = vmatmul.mubr.bf16.gmra.mrb[0].mxu0 %v969
    %v1242 = vpop.f32.mrb[0].mxu0
    %v1243 = vadd.f32 0.0, %v1242
    %v1244 = vpop.f32.mrb[0].mxu0
    %v1245 = vpop.f32.mrb[0].mxu0
    %v1246 = vadd.f32 0.0, %v1245
    %v1247 = vpop.f32.mrb[0].mxu0
    %1248 = vmatprep.mubr.bf16.mxu0 %v973
    %1249 = vmatmul.mubr.bf16.gmra.mrb[0].mxu0 %v972
    %v1250 = vpop.f32.mrb[0].mxu0
    %v1251 = vadd.f32 0.0, %v1250
    %v1252 = vpop.f32.mrb[0].mxu0
    %v1253 = vpop.f32.mrb[0].mxu0
    %v1254 = vadd.f32 0.0, %v1253
    %v1255 = vpop.f32.mrb[0].mxu0
    %1256 = vmatprep.mubr.bf16.mxu0 %v976
    %1257 = vmatmul.mubr.bf16.gmra.mrb[0].mxu0 %v975
    %v1258 = vpop.f32.mrb[0].mxu0
    %v1259 = vadd.f32 0.0, %v1258
    %v1260 = vpop.f32.mrb[0].mxu0
    %v1261 = vpop.f32.mrb[0].mxu0
    %v1262 = vadd.f32 0.0, %v1261
    %v1263 = vpop.f32.mrb[0].mxu0
    %1264 = vmatprep.mubr.bf16.mxu0 %v979
    %1265 = vmatmul.mubr.bf16.gmra.mrb[0].mxu0 %v978
    %v1266 = vpop.f32.mrb[0].mxu0
    %v1267 = vadd.f32 0.0, %v1266
    %v1268 = vpop.f32.mrb[0].mxu0
    %v1269 = vpop.f32.mrb[0].mxu0
    %v1270 = vadd.f32 0.0, %v1269
    %v1271 = vpop.f32.mrb[0].mxu0
    %1272 = vmatprep.mubr.bf16.mxu0 %v982
    %1273 = vmatmul.mubr.bf16.gmra.mrb[0].mxu0 %v981
    %v1274 = vpop.f32.mrb[0].mxu0
    %v1275 = vadd.f32 0.0, %v1274
    %v1276 = vpop.f32.mrb[0].mxu0
    %v1277 = vpop.f32.mrb[0].mxu0
    %v1278 = vadd.f32 0.0, %v1277
    %v1279 = vpop.f32.mrb[0].mxu0
    %1280 = vdwg.mxu0
    %1281 = vmatprep.subr.bf16.mxu0 0
    %1282 = vmatpush1.bf16.msra.mxu0 %v664
    %1283 = vmatprep.subr.bf16.mxu0 0
    %1284 = vmatpush1.bf16.msra.mxu0 %v665
    %1285 = vmatprep.subr.bf16.mxu0 0
    %1286 = vmatpush1.bf16.msra.mxu0 %v666
    %1287 = vmatprep.subr.bf16.mxu0 0
    %1288 = vmatpush1.bf16.msra.mxu0 %v667
    %1289 = vmatprep.subr.bf16.mxu0 0
    %1290 = vmatpush1.bf16.msra.mxu0 %v668
    %1291 = vmatprep.subr.bf16.mxu0 0
    %1292 = vmatpush1.bf16.msra.mxu0 %v669
    %1293 = vmatprep.subr.bf16.mxu0 0
    %1294 = vmatpush1.bf16.msra.mxu0 %v670
    %1295 = vmatprep.subr.bf16.mxu0 0
    %1296 = vmatpush1.bf16.msra.mxu0 %v671
    %1297 = vmatprep.subr.bf16.mxu0 0
    %1298 = vmatpush1.bf16.msra.mxu0 0
    %1299 = vmatprep.subr.bf16.mxu0 0
    %1300 = vmatpush1.bf16.msra.mxu0 0
    %1301 = vmatprep.subr.bf16.mxu0 0
    %1302 = vmatpush1.bf16.msra.mxu0 0
    %1303 = vmatprep.subr.bf16.mxu0 0
    %1304 = vmatpush1.bf16.msra.mxu0 0
    %1305 = vmatprep.subr.bf16.mxu0 0
    %1306 = vmatpush1.bf16.msra.mxu0 0
    %1307 = vmatprep.subr.bf16.mxu0 0
    %1308 = vmatpush1.bf16.msra.mxu0 0
    %1309 = vmatprep.subr.bf16.mxu0 0
    %1310 = vmatpush1.bf16.msra.mxu0 0
    %1311 = vmatprep.subr.bf16.mxu0 0
    %1312 = vmatpush1.bf16.msra.mxu0 0
    %1313 = vmatprep.mubr.bf16.mxu0 0
    %1314 = vmatmul.mubr.bf16.gmra.mrb[0].mxu0 %v914
    %v1315 = vpop.f32.mrb[0].mxu0
    %v1316 = vadd.f32 %v1091, %v1315
    %v1317 = vpop.f32.mrb[0].mxu0
    %v1318 = vpop.f32.mrb[0].mxu0
    %v1319 = vadd.f32 %v1094, %v1318
    %v1320 = vpop.f32.mrb[0].mxu0
    %1321 = vmatprep.mubr.bf16.mxu0 0
    %1322 = vmatmul.mubr.bf16.gmra.mrb[0].mxu0 %v917
    %v1323 = vpop.f32.mrb[0].mxu0
    %v1324 = vadd.f32 %v1099, %v1323
    %v1325 = vpop.f32.mrb[0].mxu0
    %v1326 = vpop.f32.mrb[0].mxu0
    %v1327 = vadd.f32 %v1102, %v1326
    %v1328 = vpop.f32.mrb[0].mxu0
    %1329 = vmatprep.mubr.bf16.mxu0 0
    %1330 = vmatmul.mubr.bf16.gmra.mrb[0].mxu0 %v920
    %v1331 = vpop.f32.mrb[0].mxu0
    %v1332 = vadd.f32 %v1107, %v1331
    %v1333 = vpop.f32.mrb[0].mxu0
    %v1334 = vpop.f32.mrb[0].mxu0
    %v1335 = vadd.f32 %v1110, %v1334
    %v1336 = vpop.f32.mrb[0].mxu0
    %1337 = vmatprep.mubr.bf16.mxu0 0
    %1338 = vmatmul.mubr.bf16.gmra.mrb[0].mxu0 %v923
    %v1339 = vpop.f32.mrb[0].mxu0
    %v1340 = vadd.f32 %v1115, %v1339
    %v1341 = vpop.f32.mrb[0].mxu0
    %v1342 = vpop.f32.mrb[0].mxu0
    %v1343 = vadd.f32 %v1118, %v1342
    %v1344 = vpop.f32.mrb[0].mxu0
    %1345 = vmatprep.mubr.bf16.mxu0 0
    %1346 = vmatmul.mubr.bf16.gmra.mrb[0].mxu0 %v926
    %v1347 = vpop.f32.mrb[0].mxu0
    %v1348 = vadd.f32 %v1123, %v1347
    %v1349 = vpop.f32.mrb[0].mxu0
    %v1350 = vpop.f32.mrb[0].mxu0
    %v1351 = vadd.f32 %v1126, %v1350
    %v1352 = vpop.f32.mrb[0].mxu0
    %1353 = vmatprep.mubr.bf16.mxu0 0
    %1354 = vmatmul.mubr.bf16.gmra.mrb[0].mxu0 %v929
    %v1355 = vpop.f32.mrb[0].mxu0
    %v1356 = vadd.f32 %v1131, %v1355
    %v1357 = vpop.f32.mrb[0].mxu0
    %v1358 = vpop.f32.mrb[0].mxu0
    %v1359 = vadd.f32 %v1134, %v1358
    %v1360 = vpop.f32.mrb[0].mxu0
    %1361 = vmatprep.mubr.bf16.mxu0 0
    %1362 = vmatmul.mubr.bf16.gmra.mrb[0].mxu0 %v932
    %v1363 = vpop.f32.mrb[0].mxu0
    %v1364 = vadd.f32 %v1139, %v1363
    %v1365 = vpop.f32.mrb[0].mxu0
    %v1366 = vpop.f32.mrb[0].mxu0
    %v1367 = vadd.f32 %v1142, %v1366
    %v1368 = vpop.f32.mrb[0].mxu0
    %1369 = vmatprep.mubr.bf16.mxu0 0
    %1370 = vmatmul.mubr.bf16.gmra.mrb[0].mxu0 %v935
    %v1371 = vpop.f32.mrb[0].mxu0
    %v1372 = vadd.f32 %v1147, %v1371
    %v1373 = vpop.f32.mrb[0].mxu0
    %v1374 = vpop.f32.mrb[0].mxu0
    %v1375 = vadd.f32 %v1150, %v1374
    %v1376 = vpop.f32.mrb[0].mxu0
    %1377 = vmatprep.mubr.bf16.mxu0 0
    %1378 = vmatmul.mubr.bf16.gmra.mrb[0].mxu0 %v938
    %v1379 = vpop.f32.mrb[0].mxu0
    %v1380 = vadd.f32 %v1155, %v1379
    %v1381 = vpop.f32.mrb[0].mxu0
    %v1382 = vpop.f32.mrb[0].mxu0
    %v1383 = vadd.f32 %v1158, %v1382
    %v1384 = vpop.f32.mrb[0].mxu0
    %1385 = vmatprep.mubr.bf16.mxu0 0
    %1386 = vmatmul.mubr.bf16.gmra.mrb[0].mxu0 %v941
    %v1387 = vpop.f32.mrb[0].mxu0
    %v1388 = vadd.f32 %v1163, %v1387
    %v1389 = vpop.f32.mrb[0].mxu0
    %v1390 = vpop.f32.mrb[0].mxu0
    %v1391 = vadd.f32 %v1166, %v1390
    %v1392 = vpop.f32.mrb[0].mxu0
    %1393 = vmatprep.mubr.bf16.mxu0 0
    %1394 = vmatmul.mubr.bf16.gmra.mrb[0].mxu0 %v944
    %v1395 = vpop.f32.mrb[0].mxu0
    %v1396 = vadd.f32 %v1171, %v1395
    %v1397 = vpop.f32.mrb[0].mxu0
    %v1398 = vpop.f32.mrb[0].mxu0
    %v1399 = vadd.f32 %v1174, %v1398
    %v1400 = vpop.f32.mrb[0].mxu0
    %1401 = vmatprep.mubr.bf16.mxu0 0
    %1402 = vmatmul.mubr.bf16.gmra.mrb[0].mxu0 %v947
    %v1403 = vpop.f32.mrb[0].mxu0
    %v1404 = vadd.f32 %v1179, %v1403
    %v1405 = vpop.f32.mrb[0].mxu0
    %v1406 = vpop.f32.mrb[0].mxu0
    %v1407 = vadd.f32 %v1182, %v1406
    %v1408 = vpop.f32.mrb[0].mxu0
    %1409 = vmatprep.mubr.bf16.mxu0 0
    %1410 = vmatmul.mubr.bf16.gmra.mrb[0].mxu0 %v950
    %v1411 = vpop.f32.mrb[0].mxu0
    %v1412 = vadd.f32 %v1187, %v1411
    %v1413 = vpop.f32.mrb[0].mxu0
    %v1414 = vpop.f32.mrb[0].mxu0
    %v1415 = vadd.f32 %v1190, %v1414
    %v1416 = vpop.f32.mrb[0].mxu0
    %1417 = vmatprep.mubr.bf16.mxu0 0
    %1418 = vmatmul.mubr.bf16.gmra.mrb[0].mxu0 %v953
    %v1419 = vpop.f32.mrb[0].mxu0
    %v1420 = vadd.f32 %v1195, %v1419
    %v1421 = vpop.f32.mrb[0].mxu0
    %v1422 = vpop.f32.mrb[0].mxu0
    %v1423 = vadd.f32 %v1198, %v1422
    %v1424 = vpop.f32.mrb[0].mxu0
    %1425 = vmatprep.mubr.bf16.mxu0 0
    %1426 = vmatmul.mubr.bf16.gmra.mrb[0].mxu0 %v956
    %v1427 = vpop.f32.mrb[0].mxu0
    %v1428 = vadd.f32 %v1203, %v1427
    %v1429 = vpop.f32.mrb[0].mxu0
    %v1430 = vpop.f32.mrb[0].mxu0
    %v1431 = vadd.f32 %v1206, %v1430
    %v1432 = vpop.f32.mrb[0].mxu0
    %1433 = vmatprep.mubr.bf16.mxu0 0
    %1434 = vmatmul.mubr.bf16.gmra.mrb[0].mxu0 %v959
    %v1435 = vpop.f32.mrb[0].mxu0
    %v1436 = vadd.f32 %v1211, %v1435
    %v1437 = vpop.f32.mrb[0].mxu0
    %v1438 = vpop.f32.mrb[0].mxu0
    %v1439 = vadd.f32 %v1214, %v1438
    %v1440 = vpop.f32.mrb[0].mxu0
    %1441 = vmatprep.mubr.bf16.mxu0 0
    %1442 = vmatmul.mubr.bf16.gmra.mrb[0].mxu0 %v962
    %v1443 = vpop.f32.mrb[0].mxu0
    %v1444 = vadd.f32 %v1219, %v1443
    %v1445 = vpop.f32.mrb[0].mxu0
    %v1446 = vpop.f32.mrb[0].mxu0
    %v1447 = vadd.f32 %v1222, %v1446
    %v1448 = vpop.f32.mrb[0].mxu0
    %1449 = vmatprep.mubr.bf16.mxu0 0
    %1450 = vmatmul.mubr.bf16.gmra.mrb[0].mxu0 %v965
    %v1451 = vpop.f32.mrb[0].mxu0
    %v1452 = vadd.f32 %v1227, %v1451
    %v1453 = vpop.f32.mrb[0].mxu0
    %v1454 = vpop.f32.mrb[0].mxu0
    %v1455 = vadd.f32 %v1230, %v1454
    %v1456 = vpop.f32.mrb[0].mxu0
    %1457 = vmatprep.mubr.bf16.mxu0 0
    %1458 = vmatmul.mubr.bf16.gmra.mrb[0].mxu0 %v968
    %v1459 = vpop.f32.mrb[0].mxu0
    %v1460 = vadd.f32 %v1235, %v1459
    %v1461 = vpop.f32.mrb[0].mxu0
    %v1462 = vpop.f32.mrb[0].mxu0
    %v1463 = vadd.f32 %v1238, %v1462
    %v1464 = vpop.f32.mrb[0].mxu0
    %1465 = vmatprep.mubr.bf16.mxu0 0
    %1466 = vmatmul.mubr.bf16.gmra.mrb[0].mxu0 %v971
    %v1467 = vpop.f32.mrb[0].mxu0
    %v1468 = vadd.f32 %v1243, %v1467
    %v1469 = vpop.f32.mrb[0].mxu0
    %v1470 = vpop.f32.mrb[0].mxu0
    %v1471 = vadd.f32 %v1246, %v1470
    %v1472 = vpop.f32.mrb[0].mxu0
    %1473 = vmatprep.mubr.bf16.mxu0 0
    %1474 = vmatmul.mubr.bf16.gmra.mrb[0].mxu0 %v974
    %v1475 = vpop.f32.mrb[0].mxu0
    %v1476 = vadd.f32 %v1251, %v1475
    %v1477 = vpop.f32.mrb[0].mxu0
    %v1478 = vpop.f32.mrb[0].mxu0
    %v1479 = vadd.f32 %v1254, %v1478
    %v1480 = vpop.f32.mrb[0].mxu0
    %1481 = vmatprep.mubr.bf16.mxu0 0
    %1482 = vmatmul.mubr.bf16.gmra.mrb[0].mxu0 %v977
    %v1483 = vpop.f32.mrb[0].mxu0
    %v1484 = vadd.f32 %v1259, %v1483
    %v1485 = vpop.f32.mrb[0].mxu0
    %v1486 = vpop.f32.mrb[0].mxu0
    %v1487 = vadd.f32 %v1262, %v1486
    %v1488 = vpop.f32.mrb[0].mxu0
    %1489 = vmatprep.mubr.bf16.mxu0 0
    %1490 = vmatmul.mubr.bf16.gmra.mrb[0].mxu0 %v980
    %v1491 = vpop.f32.mrb[0].mxu0
    %v1492 = vadd.f32 %v1267, %v1491
    %v1493 = vpop.f32.mrb[0].mxu0
    %v1494 = vpop.f32.mrb[0].mxu0
    %v1495 = vadd.f32 %v1270, %v1494
    %v1496 = vpop.f32.mrb[0].mxu0
    %1497 = vmatprep.mubr.bf16.mxu0 0
    %1498 = vmatmul.mubr.bf16.gmra.mrb[0].mxu0 %v983
    %v1499 = vpop.f32.mrb[0].mxu0
    %v1500 = vadd.f32 %v1275, %v1499
    %v1501 = vpop.f32.mrb[0].mxu0
    %v1502 = vpop.f32.mrb[0].mxu0
    %v1503 = vadd.f32 %v1278, %v1502
    %v1504 = vpop.f32.mrb[0].mxu0
    %1505 = vdwg.mxu0
    %1506 = vst [vmem:[#allocation3] sm:$0xff] %v1316
    %1507 = vst [vmem:[#allocation3 + $0x8] sm:$0xff] %v1319
    %1508 = vst [vmem:[#allocation3 + $0x10] sm:$0xff] %v1324
    %1509 = vst [vmem:[#allocation3 + $0x18] sm:$0xff] %v1327
    %1510 = vst [vmem:[#allocation3 + $0x20] sm:$0xff] %v1332
    %1511 = vst [vmem:[#allocation3 + $0x28] sm:$0xff] %v1335
    %1512 = vst [vmem:[#allocation3 + $0x30] sm:$0xff] %v1340
    %1513 = vst [vmem:[#allocation3 + $0x38] sm:$0xff] %v1343
    %1514 = vst [vmem:[#allocation3 + $0x40] sm:$0xff] %v1348
    %1515 = vst [vmem:[#allocation3 + $0x48] sm:$0xff] %v1351
    %1516 = vst [vmem:[#allocation3 + $0x50] sm:$0xff] %v1356
    %1517 = vst [vmem:[#allocation3 + $0x58] sm:$0xff] %v1359
    %1518 = vst [vmem:[#allocation3 + $0x60] sm:$0xff] %v1364
    %1519 = vst [vmem:[#allocation3 + $0x68] sm:$0xff] %v1367
    %1520 = vst [vmem:[#allocation3 + $0x70] sm:$0xff] %v1372
    %1521 = vst [vmem:[#allocation3 + $0x78] sm:$0xff] %v1375
    %1522 = vst [vmem:[#allocation3 + $0x80] sm:$0xff] %v1380
    %1523 = vst [vmem:[#allocation3 + $0x88] sm:$0xff] %v1383
    %1524 = vst [vmem:[#allocation3 + $0x90] sm:$0xff] %v1388
    %1525 = vst [vmem:[#allocation3 + $0x98] sm:$0xff] %v1391
    %1526 = vst [vmem:[#allocation3 + $0xa0] sm:$0xff] %v1396
    %1527 = vst [vmem:[#allocation3 + $0xa8] sm:$0xff] %v1399
    %1528 = vst [vmem:[#allocation3 + $0xb0] sm:$0xff] %v1404
    %1529 = vst [vmem:[#allocation3 + $0xb8] sm:$0xff] %v1407
    %1530 = vst [vmem:[#allocation3 + $0xc0] sm:$0xff] %v1412
    %1531 = vst [vmem:[#allocation3 + $0xc8] sm:$0xff] %v1415
    %1532 = vst [vmem:[#allocation3 + $0xd0] sm:$0xff] %v1420
    %1533 = vst [vmem:[#allocation3 + $0xd8] sm:$0xff] %v1423
    %1534 = vst [vmem:[#allocation3 + $0xe0] sm:$0xff] %v1428
    %1535 = vst [vmem:[#allocation3 + $0xe8] sm:$0xff] %v1431
    %1536 = vst [vmem:[#allocation3 + $0xf0] sm:$0xff] %v1436
    %1537 = vst [vmem:[#allocation3 + $0xf8] sm:$0xff] %v1439
    %1538 = vst [vmem:[#allocation3 + $0x100] sm:$0xff] %v1444
    %1539 = vst [vmem:[#allocation3 + $0x108] sm:$0xff] %v1447
    %1540 = vst [vmem:[#allocation3 + $0x110] sm:$0xff] %v1452
    %1541 = vst [vmem:[#allocation3 + $0x118] sm:$0xff] %v1455
    %1542 = vst [vmem:[#allocation3 + $0x120] sm:$0xff] %v1460
    %1543 = vst [vmem:[#allocation3 + $0x128] sm:$0xff] %v1463
    %1544 = vst [vmem:[#allocation3 + $0x130] sm:$0xff] %v1468
    %1545 = vst [vmem:[#allocation3 + $0x138] sm:$0xff] %v1471
    %1546 = vst [vmem:[#allocation3 + $0x140] sm:$0xff] %v1476
    %1547 = vst [vmem:[#allocation3 + $0x148] sm:$0xff] %v1479
    %1548 = vst [vmem:[#allocation3 + $0x150] sm:$0xff] %v1484
    %1549 = vst [vmem:[#allocation3 + $0x158] sm:$0xff] %v1487
    %1550 = vst [vmem:[#allocation3 + $0x160] sm:$0xff] %v1492
    %1551 = vst [vmem:[#allocation3 + $0x168] sm:$0xff] %v1495
    %1552 = vst [vmem:[#allocation3 + $0x170] sm:$0xff] %v1500
    %1553 = vst [vmem:[#allocation3 + $0x178] sm:$0xff] %v1503
    %v1554 = vld [vmem:[#allocation4] sm:$0xff]
    %v1555 = vld [vmem:[#allocation4 + $0x8] sm:$0xf]
    %v1556 = vld [vmem:[#allocation4 + $0xc] sm:$0xff]
    %v1557 = vld [vmem:[#allocation4 + $0x14] sm:$0xf]
    %v1558 = vld [vmem:[#allocation4 + $0x18] sm:$0xff]
    %v1559 = vld [vmem:[#allocation4 + $0x20] sm:$0xf]
    %v1560 = vld [vmem:[#allocation4 + $0x24] sm:$0xff]
    %v1561 = vld [vmem:[#allocation4 + $0x2c] sm:$0xf]
    %v1562 = vld [vmem:[#allocation4 + $0x30] sm:$0xff]
    %v1563 = vld [vmem:[#allocation4 + $0x38] sm:$0xf]
    %v1564 = vld [vmem:[#allocation4 + $0x3c] sm:$0xff]
    %v1565 = vld [vmem:[#allocation4 + $0x44] sm:$0xf]
    %v1566 = vld [vmem:[#allocation4 + $0x48] sm:$0xff]
    %v1567 = vld [vmem:[#allocation4 + $0x50] sm:$0xf]
    %v1568 = vld [vmem:[#allocation4 + $0x54] sm:$0xff]
    %v1569 = vld [vmem:[#allocation4 + $0x5c] sm:$0xf]
    %v1570 = vld [vmem:[#allocation4 + $0x60] sm:$0xff]
    %v1571 = vld [vmem:[#allocation4 + $0x68] sm:$0xf]
    %v1572 = vld [vmem:[#allocation4 + $0x6c] sm:$0xff]
    %v1573 = vld [vmem:[#allocation4 + $0x74] sm:$0xf]
    %v1574 = vld [vmem:[#allocation4 + $0x78] sm:$0xff]
    %v1575 = vld [vmem:[#allocation4 + $0x80] sm:$0xf]
    %v1576 = vld [vmem:[#allocation4 + $0x84] sm:$0xff]
    %v1577 = vld [vmem:[#allocation4 + $0x8c] sm:$0xf]
    %v1578 = vld [vmem:[#allocation4 + $0x90] sm:$0xff]
    %v1579 = vld [vmem:[#allocation4 + $0x98] sm:$0xf]
    %v1580 = vld [vmem:[#allocation4 + $0x9c] sm:$0xff]
    %v1581 = vld [vmem:[#allocation4 + $0xa4] sm:$0xf]
    %v1582 = vld [vmem:[#allocation4 + $0xa8] sm:$0xff]
    %v1583 = vld [vmem:[#allocation4 + $0xb0] sm:$0xf]
    %v1584 = vld [vmem:[#allocation4 + $0xb4] sm:$0xff]
    %v1585 = vld [vmem:[#allocation4 + $0xbc] sm:$0xf]
    %v1586 = vld [vmem:[#allocation4 + $0xc0] sm:$0xff]
    %v1587 = vld [vmem:[#allocation4 + $0xc8] sm:$0xf]
    %v1588 = vld [vmem:[#allocation4 + $0xcc] sm:$0xff]
    %v1589 = vld [vmem:[#allocation4 + $0xd4] sm:$0xf]
    %v1590 = vld [vmem:[#allocation4 + $0xd8] sm:$0xff]
    %v1591 = vld [vmem:[#allocation4 + $0xe0] sm:$0xf]
    %v1592 = vld [vmem:[#allocation4 + $0xe4] sm:$0xff]
    %v1593 = vld [vmem:[#allocation4 + $0xec] sm:$0xf]
    %v1594 = vld [vmem:[#allocation4 + $0xf0] sm:$0xff]
    %v1595 = vld [vmem:[#allocation4 + $0xf8] sm:$0xf]
    %v1596 = vld [vmem:[#allocation4 + $0xfc] sm:$0xff]
    %v1597 = vld [vmem:[#allocation4 + $0x104] sm:$0xf]
    %v1598 = vld [vmem:[#allocation4 + $0x108] sm:$0xff]
    %v1599 = vld [vmem:[#allocation4 + $0x110] sm:$0xf]
    %v1600 = vld [vmem:[#allocation4 + $0x114] sm:$0xff]
    %v1601 = vld [vmem:[#allocation4 + $0x11c] sm:$0xf]
    %v1602 = vld [vmem:[#allocation4 + $0x120] sm:$0xff]
    %v1603 = vld [vmem:[#allocation4 + $0x128] sm:$0xf]
    %v1604 = vld [vmem:[#allocation4 + $0x12c] sm:$0xff]
    %v1605 = vld [vmem:[#allocation4 + $0x134] sm:$0xf]
    %v1606 = vld [vmem:[#allocation4 + $0x138] sm:$0xff]
    %v1607 = vld [vmem:[#allocation4 + $0x140] sm:$0xf]
    %v1608 = vld [vmem:[#allocation4 + $0x144] sm:$0xff]
    %v1609 = vld [vmem:[#allocation4 + $0x14c] sm:$0xf]
    %v1610 = vld [vmem:[#allocation4 + $0x150] sm:$0xff]
    %v1611 = vld [vmem:[#allocation4 + $0x158] sm:$0xf]
    %v1612 = vld [vmem:[#allocation4 + $0x15c] sm:$0xff]
    %v1613 = vld [vmem:[#allocation4 + $0x164] sm:$0xf]
    %v1614 = vld [vmem:[#allocation4 + $0x168] sm:$0xff]
    %v1615 = vld [vmem:[#allocation4 + $0x170] sm:$0xf]
    %v1616 = vld [vmem:[#allocation4 + $0x174] sm:$0xff]
    %v1617 = vld [vmem:[#allocation4 + $0x17c] sm:$0xf]
    %v1618 = vld [vmem:[#allocation4 + $0x180] sm:$0xff]
    %v1619 = vld [vmem:[#allocation4 + $0x188] sm:$0xf]
    %v1620 = vld [vmem:[#allocation4 + $0x18c] sm:$0xff]
    %v1621 = vld [vmem:[#allocation4 + $0x194] sm:$0xf]
    %v1622 = vld [vmem:[#allocation4 + $0x198] sm:$0xff]
    %v1623 = vld [vmem:[#allocation4 + $0x1a0] sm:$0xf]
    %v1624 = vld [vmem:[#allocation4 + $0x1a4] sm:$0xff]
    %v1625 = vld [vmem:[#allocation4 + $0x1ac] sm:$0xf]
    %v1626 = vld [vmem:[#allocation4 + $0x1b0] sm:$0xff]
    %v1627 = vld [vmem:[#allocation4 + $0x1b8] sm:$0xf]
    %v1628 = vld [vmem:[#allocation4 + $0x1bc] sm:$0xff]
    %v1629 = vld [vmem:[#allocation4 + $0x1c4] sm:$0xf]
    %v1630 = vld [vmem:[#allocation4 + $0x1c8] sm:$0xff]
    %v1631 = vld [vmem:[#allocation4 + $0x1d0] sm:$0xf]
    %v1632 = vld [vmem:[#allocation4 + $0x1d4] sm:$0xff]
    %v1633 = vld [vmem:[#allocation4 + $0x1dc] sm:$0xf]
    %v1634 = vld [vmem:[#allocation4 + $0x1e0] sm:$0xff]
    %v1635 = vld [vmem:[#allocation4 + $0x1e8] sm:$0xf]
    %v1636 = vld [vmem:[#allocation4 + $0x1ec] sm:$0xff]
    %v1637 = vld [vmem:[#allocation4 + $0x1f4] sm:$0xf]
    %v1638 = vld [vmem:[#allocation4 + $0x1f8] sm:$0xff]
    %v1639 = vld [vmem:[#allocation4 + $0x200] sm:$0xf]
    %v1640 = vld [vmem:[#allocation4 + $0x204] sm:$0xff]
    %v1641 = vld [vmem:[#allocation4 + $0x20c] sm:$0xf]
    %v1642 = vld [vmem:[#allocation4 + $0x210] sm:$0xff]
    %v1643 = vld [vmem:[#allocation4 + $0x218] sm:$0xf]
    %v1644 = vld [vmem:[#allocation4 + $0x21c] sm:$0xff]
    %v1645 = vld [vmem:[#allocation4 + $0x224] sm:$0xf]
    %v1646 = vld [vmem:[#allocation4 + $0x228] sm:$0xff]
    %v1647 = vld [vmem:[#allocation4 + $0x230] sm:$0xf]
    %v1648 = vld [vmem:[#allocation4 + $0x234] sm:$0xff]
    %v1649 = vld [vmem:[#allocation4 + $0x23c] sm:$0xf]
    %v1650 = vld [vmem:[#allocation3] sm:$0xff]
    %v1651 = vld [vmem:[#allocation3 + $0x8] sm:$0xff]
    %v1652 = vld [vmem:[#allocation3 + $0x10] sm:$0xff]
    %v1653 = vld [vmem:[#allocation3 + $0x18] sm:$0xff]
    %v1654 = vld [vmem:[#allocation3 + $0x20] sm:$0xff]
    %v1655 = vld [vmem:[#allocation3 + $0x28] sm:$0xff]
    %v1656 = vld [vmem:[#allocation3 + $0x30] sm:$0xff]
    %v1657 = vld [vmem:[#allocation3 + $0x38] sm:$0xff]
    %v1658 = vld [vmem:[#allocation3 + $0x40] sm:$0xff]
    %v1659 = vld [vmem:[#allocation3 + $0x48] sm:$0xff]
    %v1660 = vld [vmem:[#allocation3 + $0x50] sm:$0xff]
    %v1661 = vld [vmem:[#allocation3 + $0x58] sm:$0xff]
    %v1662 = vld [vmem:[#allocation3 + $0x60] sm:$0xff]
    %v1663 = vld [vmem:[#allocation3 + $0x68] sm:$0xff]
    %v1664 = vld [vmem:[#allocation3 + $0x70] sm:$0xff]
    %v1665 = vld [vmem:[#allocation3 + $0x78] sm:$0xff]
    %v1666 = vld [vmem:[#allocation3 + $0x80] sm:$0xff]
    %v1667 = vld [vmem:[#allocation3 + $0x88] sm:$0xff]
    %v1668 = vld [vmem:[#allocation3 + $0x90] sm:$0xff]
    %v1669 = vld [vmem:[#allocation3 + $0x98] sm:$0xff]
    %v1670 = vld [vmem:[#allocation3 + $0xa0] sm:$0xff]
    %v1671 = vld [vmem:[#allocation3 + $0xa8] sm:$0xff]
    %v1672 = vld [vmem:[#allocation3 + $0xb0] sm:$0xff]
    %v1673 = vld [vmem:[#allocation3 + $0xb8] sm:$0xff]
    %v1674 = vld [vmem:[#allocation3 + $0xc0] sm:$0xff]
    %v1675 = vld [vmem:[#allocation3 + $0xc8] sm:$0xff]
    %v1676 = vld [vmem:[#allocation3 + $0xd0] sm:$0xff]
    %v1677 = vld [vmem:[#allocation3 + $0xd8] sm:$0xff]
    %v1678 = vld [vmem:[#allocation3 + $0xe0] sm:$0xff]
    %v1679 = vld [vmem:[#allocation3 + $0xe8] sm:$0xff]
    %v1680 = vld [vmem:[#allocation3 + $0xf0] sm:$0xff]
    %v1681 = vld [vmem:[#allocation3 + $0xf8] sm:$0xff]
    %v1682 = vld [vmem:[#allocation3 + $0x100] sm:$0xff]
    %v1683 = vld [vmem:[#allocation3 + $0x108] sm:$0xff]
    %v1684 = vld [vmem:[#allocation3 + $0x110] sm:$0xff]
    %v1685 = vld [vmem:[#allocation3 + $0x118] sm:$0xff]
    %v1686 = vld [vmem:[#allocation3 + $0x120] sm:$0xff]
    %v1687 = vld [vmem:[#allocation3 + $0x128] sm:$0xff]
    %v1688 = vld [vmem:[#allocation3 + $0x130] sm:$0xff]
    %v1689 = vld [vmem:[#allocation3 + $0x138] sm:$0xff]
    %v1690 = vld [vmem:[#allocation3 + $0x140] sm:$0xff]
    %v1691 = vld [vmem:[#allocation3 + $0x148] sm:$0xff]
    %v1692 = vld [vmem:[#allocation3 + $0x150] sm:$0xff]
    %v1693 = vld [vmem:[#allocation3 + $0x158] sm:$0xff]
    %v1694 = vld [vmem:[#allocation3 + $0x160] sm:$0xff]
    %v1695 = vld [vmem:[#allocation3 + $0x168] sm:$0xff]
    %v1696 = vld [vmem:[#allocation3 + $0x170] sm:$0xff]
    %v1697 = vld [vmem:[#allocation3 + $0x178] sm:$0xff]
    %v1698 = vpack.c.bf16 %v1651, %v1650
    %v1699 = vpack.c.bf16 %v1653, %v1652
    %v1700 = vpack.c.bf16 %v1655, %v1654
    %v1701 = vpack.c.bf16 %v1657, %v1656
    %v1702 = vpack.c.bf16 %v1659, %v1658
    %v1703 = vpack.c.bf16 %v1661, %v1660
    %v1704 = vpack.c.bf16 %v1663, %v1662
    %v1705 = vpack.c.bf16 %v1665, %v1664
    %v1706 = vpack.c.bf16 %v1667, %v1666
    %v1707 = vpack.c.bf16 %v1669, %v1668
    %v1708 = vpack.c.bf16 %v1671, %v1670
    %v1709 = vpack.c.bf16 %v1673, %v1672
    %v1710 = vpack.c.bf16 %v1675, %v1674
    %v1711 = vpack.c.bf16 %v1677, %v1676
    %v1712 = vpack.c.bf16 %v1679, %v1678
    %v1713 = vpack.c.bf16 %v1681, %v1680
    %v1714 = vpack.c.bf16 %v1683, %v1682
    %v1715 = vpack.c.bf16 %v1685, %v1684
    %v1716 = vpack.c.bf16 %v1687, %v1686
    %v1717 = vpack.c.bf16 %v1689, %v1688
    %v1718 = vpack.c.bf16 %v1691, %v1690
    %v1719 = vpack.c.bf16 %v1693, %v1692
    %v1720 = vpack.c.bf16 %v1695, %v1694
    %v1721 = vpack.c.bf16 %v1697, %v1696
    %v1818 = vunpack.c.l.b16 %v1554
    %v1819 = vunpack.c.h.b16 %v1554
    %v1820 = vunpack.c.l.b16 %v1555
    %v1821 = vunpack.c.l.b16 %v1556
    %v1822 = vunpack.c.h.b16 %v1556
    %v1823 = vunpack.c.l.b16 %v1557
    %v1824 = vunpack.c.l.b16 %v1558
    %v1825 = vunpack.c.h.b16 %v1558
    %v1826 = vunpack.c.l.b16 %v1559
    %v1827 = vunpack.c.l.b16 %v1560
    %v1828 = vunpack.c.h.b16 %v1560
    %v1829 = vunpack.c.l.b16 %v1561
    %v1830 = vunpack.c.l.b16 %v1562
    %v1831 = vunpack.c.h.b16 %v1562
    %v1832 = vunpack.c.l.b16 %v1563
    %v1833 = vunpack.c.l.b16 %v1564
    %v1834 = vunpack.c.h.b16 %v1564
    %v1835 = vunpack.c.l.b16 %v1565
    %v1836 = vunpack.c.l.b16 %v1566
    %v1837 = vunpack.c.h.b16 %v1566
    %v1838 = vunpack.c.l.b16 %v1567
    %v1839 = vunpack.c.l.b16 %v1568
    %v1840 = vunpack.c.h.b16 %v1568
    %v1841 = vunpack.c.l.b16 %v1569
    %v1842 = vunpack.c.l.b16 %v1570
    %v1843 = vunpack.c.h.b16 %v1570
    %v1844 = vunpack.c.l.b16 %v1571
    %v1845 = vunpack.c.l.b16 %v1572
    %v1846 = vunpack.c.h.b16 %v1572
    %v1847 = vunpack.c.l.b16 %v1573
    %v1848 = vunpack.c.l.b16 %v1574
    %v1849 = vunpack.c.h.b16 %v1574
    %v1850 = vunpack.c.l.b16 %v1575
    %v1851 = vunpack.c.l.b16 %v1576
    %v1852 = vunpack.c.h.b16 %v1576
    %v1853 = vunpack.c.l.b16 %v1577
    %v1854 = vunpack.c.l.b16 %v1578
    %v1855 = vunpack.c.h.b16 %v1578
    %v1856 = vunpack.c.l.b16 %v1579
    %v1857 = vunpack.c.l.b16 %v1580
    %v1858 = vunpack.c.h.b16 %v1580
    %v1859 = vunpack.c.l.b16 %v1581
    %v1860 = vunpack.c.l.b16 %v1582
    %v1861 = vunpack.c.h.b16 %v1582
    %v1862 = vunpack.c.l.b16 %v1583
    %v1863 = vunpack.c.l.b16 %v1584
    %v1864 = vunpack.c.h.b16 %v1584
    %v1865 = vunpack.c.l.b16 %v1585
    %v1866 = vunpack.c.l.b16 %v1586
    %v1867 = vunpack.c.h.b16 %v1586
    %v1868 = vunpack.c.l.b16 %v1587
    %v1869 = vunpack.c.l.b16 %v1588
    %v1870 = vunpack.c.h.b16 %v1588
    %v1871 = vunpack.c.l.b16 %v1589
    %v1872 = vunpack.c.l.b16 %v1590
    %v1873 = vunpack.c.h.b16 %v1590
    %v1874 = vunpack.c.l.b16 %v1591
    %v1875 = vunpack.c.l.b16 %v1592
    %v1876 = vunpack.c.h.b16 %v1592
    %v1877 = vunpack.c.l.b16 %v1593
    %v1878 = vunpack.c.l.b16 %v1594
    %v1879 = vunpack.c.h.b16 %v1594
    %v1880 = vunpack.c.l.b16 %v1595
    %v1881 = vunpack.c.l.b16 %v1596
    %v1882 = vunpack.c.h.b16 %v1596
    %v1883 = vunpack.c.l.b16 %v1597
    %v1884 = vunpack.c.l.b16 %v1598
    %v1885 = vunpack.c.h.b16 %v1598
    %v1886 = vunpack.c.l.b16 %v1599
    %v1887 = vunpack.c.l.b16 %v1600
    %v1888 = vunpack.c.h.b16 %v1600
    %v1889 = vunpack.c.l.b16 %v1601
    %v1890 = vunpack.c.l.b16 %v1602
    %v1891 = vunpack.c.h.b16 %v1602
    %v1892 = vunpack.c.l.b16 %v1603
    %v1893 = vunpack.c.l.b16 %v1604
    %v1894 = vunpack.c.h.b16 %v1604
    %v1895 = vunpack.c.l.b16 %v1605
    %v1896 = vunpack.c.l.b16 %v1606
    %v1897 = vunpack.c.h.b16 %v1606
    %v1898 = vunpack.c.l.b16 %v1607
    %v1899 = vunpack.c.l.b16 %v1608
    %v1900 = vunpack.c.h.b16 %v1608
    %v1901 = vunpack.c.l.b16 %v1609
    %v1902 = vunpack.c.l.b16 %v1610
    %v1903 = vunpack.c.h.b16 %v1610
    %v1904 = vunpack.c.l.b16 %v1611
    %v1905 = vunpack.c.l.b16 %v1612
    %v1906 = vunpack.c.h.b16 %v1612
    %v1907 = vunpack.c.l.b16 %v1613
    %v1908 = vunpack.c.l.b16 %v1614
    %v1909 = vunpack.c.h.b16 %v1614
    %v1910 = vunpack.c.l.b16 %v1615
    %v1911 = vunpack.c.l.b16 %v1616
    %v1912 = vunpack.c.h.b16 %v1616
    %v1913 = vunpack.c.l.b16 %v1617
    %v1914 = vunpack.c.l.b16 %v1618
    %v1915 = vunpack.c.h.b16 %v1618
    %v1916 = vunpack.c.l.b16 %v1619
    %v1917 = vunpack.c.l.b16 %v1620
    %v1918 = vunpack.c.h.b16 %v1620
    %v1919 = vunpack.c.l.b16 %v1621
    %v1920 = vunpack.c.l.b16 %v1622
    %v1921 = vunpack.c.h.b16 %v1622
    %v1922 = vunpack.c.l.b16 %v1623
    %v1923 = vunpack.c.l.b16 %v1624
    %v1924 = vunpack.c.h.b16 %v1624
    %v1925 = vunpack.c.l.b16 %v1625
    %v1926 = vunpack.c.l.b16 %v1626
    %v1927 = vunpack.c.h.b16 %v1626
    %v1928 = vunpack.c.l.b16 %v1627
    %v1929 = vunpack.c.l.b16 %v1628
    %v1930 = vunpack.c.h.b16 %v1628
    %v1931 = vunpack.c.l.b16 %v1629
    %v1932 = vunpack.c.l.b16 %v1630
    %v1933 = vunpack.c.h.b16 %v1630
    %v1934 = vunpack.c.l.b16 %v1631
    %v1935 = vunpack.c.l.b16 %v1632
    %v1936 = vunpack.c.h.b16 %v1632
    %v1937 = vunpack.c.l.b16 %v1633
    %v1938 = vunpack.c.l.b16 %v1634
    %v1939 = vunpack.c.h.b16 %v1634
    %v1940 = vunpack.c.l.b16 %v1635
    %v1941 = vunpack.c.l.b16 %v1636
    %v1942 = vunpack.c.h.b16 %v1636
    %v1943 = vunpack.c.l.b16 %v1637
    %v1944 = vunpack.c.l.b16 %v1638
    %v1945 = vunpack.c.h.b16 %v1638
    %v1946 = vunpack.c.l.b16 %v1639
    %v1947 = vunpack.c.l.b16 %v1640
    %v1948 = vunpack.c.h.b16 %v1640
    %v1949 = vunpack.c.l.b16 %v1641
    %v1950 = vunpack.c.l.b16 %v1642
    %v1951 = vunpack.c.h.b16 %v1642
    %v1952 = vunpack.c.l.b16 %v1643
    %v1953 = vunpack.c.l.b16 %v1644
    %v1954 = vunpack.c.h.b16 %v1644
    %v1955 = vunpack.c.l.b16 %v1645
    %v1956 = vunpack.c.l.b16 %v1646
    %v1957 = vunpack.c.h.b16 %v1646
    %v1958 = vunpack.c.l.b16 %v1647
    %v1959 = vunpack.c.l.b16 %v1648
    %v1960 = vunpack.c.h.b16 %v1648
    %v1961 = vunpack.c.l.b16 %v1649
    %v1962 = vpack.c.b16 %v1821, %v1818
    %v1963 = vpack.c.b16 %v1822, %v1819
    %v1964 = vpack.c.b16 %v1823, %v1820
    %v1965 = vpack.c.b16 %v1827, %v1824
    %v1966 = vpack.c.b16 %v1828, %v1825
    %v1967 = vpack.c.b16 %v1829, %v1826
    %v1968 = vpack.c.b16 %v1833, %v1830
    %v1969 = vpack.c.b16 %v1834, %v1831
    %v1970 = vpack.c.b16 %v1835, %v1832
    %v1971 = vpack.c.b16 %v1839, %v1836
    %v1972 = vpack.c.b16 %v1840, %v1837
    %v1973 = vpack.c.b16 %v1841, %v1838
    %v1974 = vpack.c.b16 %v1845, %v1842
    %v1975 = vpack.c.b16 %v1846, %v1843
    %v1976 = vpack.c.b16 %v1847, %v1844
    %v1977 = vpack.c.b16 %v1851, %v1848
    %v1978 = vpack.c.b16 %v1852, %v1849
    %v1979 = vpack.c.b16 %v1853, %v1850
    %v1980 = vpack.c.b16 %v1857, %v1854
    %v1981 = vpack.c.b16 %v1858, %v1855
    %v1982 = vpack.c.b16 %v1859, %v1856
    %v1983 = vpack.c.b16 %v1863, %v1860
    %v1984 = vpack.c.b16 %v1864, %v1861
    %v1985 = vpack.c.b16 %v1865, %v1862
    %v1986 = vpack.c.b16 %v1869, %v1866
    %v1987 = vpack.c.b16 %v1870, %v1867
    %v1988 = vpack.c.b16 %v1871, %v1868
    %v1989 = vpack.c.b16 %v1875, %v1872
    %v1990 = vpack.c.b16 %v1876, %v1873
    %v1991 = vpack.c.b16 %v1877, %v1874
    %v1992 = vpack.c.b16 %v1881, %v1878
    %v1993 = vpack.c.b16 %v1882, %v1879
    %v1994 = vpack.c.b16 %v1883, %v1880
    %v1995 = vpack.c.b16 %v1887, %v1884
    %v1996 = vpack.c.b16 %v1888, %v1885
    %v1997 = vpack.c.b16 %v1889, %v1886
    %v1998 = vpack.c.b16 %v1893, %v1890
    %v1999 = vpack.c.b16 %v1894, %v1891
    %v2000 = vpack.c.b16 %v1895, %v1892
    %v2001 = vpack.c.b16 %v1899, %v1896
    %v2002 = vpack.c.b16 %v1900, %v1897
    %v2003 = vpack.c.b16 %v1901, %v1898
    %v2004 = vpack.c.b16 %v1905, %v1902
    %v2005 = vpack.c.b16 %v1906, %v1903
    %v2006 = vpack.c.b16 %v1907, %v1904
    %v2007 = vpack.c.b16 %v1911, %v1908
    %v2008 = vpack.c.b16 %v1912, %v1909
    %v2009 = vpack.c.b16 %v1913, %v1910
    %v2010 = vpack.c.b16 %v1917, %v1914
    %v2011 = vpack.c.b16 %v1918, %v1915
    %v2012 = vpack.c.b16 %v1919, %v1916
    %v2013 = vpack.c.b16 %v1923, %v1920
    %v2014 = vpack.c.b16 %v1924, %v1921
    %v2015 = vpack.c.b16 %v1925, %v1922
    %v2016 = vpack.c.b16 %v1929, %v1926
    %v2017 = vpack.c.b16 %v1930, %v1927
    %v2018 = vpack.c.b16 %v1931, %v1928
    %v2019 = vpack.c.b16 %v1935, %v1932
    %v2020 = vpack.c.b16 %v1936, %v1933
    %v2021 = vpack.c.b16 %v1937, %v1934
    %v2022 = vpack.c.b16 %v1941, %v1938
    %v2023 = vpack.c.b16 %v1942, %v1939
    %v2024 = vpack.c.b16 %v1943, %v1940
    %v2025 = vpack.c.b16 %v1947, %v1944
    %v2026 = vpack.c.b16 %v1948, %v1945
    %v2027 = vpack.c.b16 %v1949, %v1946
    %v2028 = vpack.c.b16 %v1953, %v1950
    %v2029 = vpack.c.b16 %v1954, %v1951
    %v2030 = vpack.c.b16 %v1955, %v1952
    %v2031 = vpack.c.b16 %v1959, %v1956
    %v2032 = vpack.c.b16 %v1960, %v1957
    %v2033 = vpack.c.b16 %v1961, %v1958
    %2106 = vmatprep.subr.bf16.mxu0 0
    %2107 = vmatpush1.bf16.msra.mxu0 %v1698
    %2108 = vmatprep.subr.bf16.mxu0 0
    %2109 = vmatpush1.bf16.msra.mxu0 %v1699
    %2110 = vmatprep.subr.bf16.mxu0 0
    %2111 = vmatpush1.bf16.msra.mxu0 %v1700
    %2112 = vmatprep.subr.bf16.mxu0 0
    %2113 = vmatpush1.bf16.msra.mxu0 %v1701
    %2114 = vmatprep.subr.bf16.mxu0 0
    %2115 = vmatpush1.bf16.msra.mxu0 %v1702
    %2116 = vmatprep.subr.bf16.mxu0 0
    %2117 = vmatpush1.bf16.msra.mxu0 %v1703
    %2118 = vmatprep.subr.bf16.mxu0 0
    %2119 = vmatpush1.bf16.msra.mxu0 %v1704
    %2120 = vmatprep.subr.bf16.mxu0 0
    %2121 = vmatpush1.bf16.msra.mxu0 %v1705
    %2122 = vmatprep.subr.bf16.mxu0 0
    %2123 = vmatpush1.bf16.msra.mxu0 %v1706
    %2124 = vmatprep.subr.bf16.mxu0 0
    %2125 = vmatpush1.bf16.msra.mxu0 %v1707
    %2126 = vmatprep.subr.bf16.mxu0 0
    %2127 = vmatpush1.bf16.msra.mxu0 %v1708
    %2128 = vmatprep.subr.bf16.mxu0 0
    %2129 = vmatpush1.bf16.msra.mxu0 %v1709
    %2130 = vmatprep.subr.bf16.mxu0 0
    %2131 = vmatpush1.bf16.msra.mxu0 %v1710
    %2132 = vmatprep.subr.bf16.mxu0 0
    %2133 = vmatpush1.bf16.msra.mxu0 %v1711
    %2134 = vmatprep.subr.bf16.mxu0 0
    %2135 = vmatpush1.bf16.msra.mxu0 %v1712
    %2136 = vmatprep.subr.bf16.mxu0 0
    %2137 = vmatpush1.bf16.msra.mxu0 %v1713
    %2138 = vmatprep.mubr.bf16.mxu0 %v1963
    %2139 = vmatmul.mubr.bf16.gmra.mrb[0].mxu0 %v1962
    %v2140 = vpop.f32.mrb[0].mxu0
    %v2141 = vadd.f32 0.0, %v2140
    %v2142 = vpop.f32.mrb[0].mxu0
    %v2143 = vpop.f32.mrb[0].mxu0
    %v2144 = vadd.f32 0.0, %v2143
    %v2145 = vpop.f32.mrb[0].mxu0
    %2146 = vmatprep.mubr.bf16.mxu0 %v1966
    %2147 = vmatmul.mubr.bf16.gmra.mrb[0].mxu0 %v1965
    %v2148 = vpop.f32.mrb[0].mxu0
    %v2149 = vadd.f32 0.0, %v2148
    %v2150 = vpop.f32.mrb[0].mxu0
    %v2151 = vpop.f32.mrb[0].mxu0
    %v2152 = vadd.f32 0.0, %v2151
    %v2153 = vpop.f32.mrb[0].mxu0
    %2154 = vmatprep.mubr.bf16.mxu0 %v1969
    %2155 = vmatmul.mubr.bf16.gmra.mrb[0].mxu0 %v1968
    %v2156 = vpop.f32.mrb[0].mxu0
    %v2157 = vadd.f32 0.0, %v2156
    %v2158 = vpop.f32.mrb[0].mxu0
    %v2159 = vpop.f32.mrb[0].mxu0
    %v2160 = vadd.f32 0.0, %v2159
    %v2161 = vpop.f32.mrb[0].mxu0
    %2162 = vmatprep.mubr.bf16.mxu0 %v1972
    %2163 = vmatmul.mubr.bf16.gmra.mrb[0].mxu0 %v1971
    %v2164 = vpop.f32.mrb[0].mxu0
    %v2165 = vadd.f32 0.0, %v2164
    %v2166 = vpop.f32.mrb[0].mxu0
    %v2167 = vpop.f32.mrb[0].mxu0
    %v2168 = vadd.f32 0.0, %v2167
    %v2169 = vpop.f32.mrb[0].mxu0
    %2170 = vmatprep.mubr.bf16.mxu0 %v1975
    %2171 = vmatmul.mubr.bf16.gmra.mrb[0].mxu0 %v1974
    %v2172 = vpop.f32.mrb[0].mxu0
    %v2173 = vadd.f32 0.0, %v2172
    %v2174 = vpop.f32.mrb[0].mxu0
    %v2175 = vpop.f32.mrb[0].mxu0
    %v2176 = vadd.f32 0.0, %v2175
    %v2177 = vpop.f32.mrb[0].mxu0
    %2178 = vmatprep.mubr.bf16.mxu0 %v1978
    %2179 = vmatmul.mubr.bf16.gmra.mrb[0].mxu0 %v1977
    %v2180 = vpop.f32.mrb[0].mxu0
    %v2181 = vadd.f32 0.0, %v2180
    %v2182 = vpop.f32.mrb[0].mxu0
    %v2183 = vpop.f32.mrb[0].mxu0
    %v2184 = vadd.f32 0.0, %v2183
    %v2185 = vpop.f32.mrb[0].mxu0
    %2186 = vmatprep.mubr.bf16.mxu0 %v1981
    %2187 = vmatmul.mubr.bf16.gmra.mrb[0].mxu0 %v1980
    %v2188 = vpop.f32.mrb[0].mxu0
    %v2189 = vadd.f32 0.0, %v2188
    %v2190 = vpop.f32.mrb[0].mxu0
    %v2191 = vpop.f32.mrb[0].mxu0
    %v2192 = vadd.f32 0.0, %v2191
    %v2193 = vpop.f32.mrb[0].mxu0
    %2194 = vmatprep.mubr.bf16.mxu0 %v1984
    %2195 = vmatmul.mubr.bf16.gmra.mrb[0].mxu0 %v1983
    %v2196 = vpop.f32.mrb[0].mxu0
    %v2197 = vadd.f32 0.0, %v2196
    %v2198 = vpop.f32.mrb[0].mxu0
    %v2199 = vpop.f32.mrb[0].mxu0
    %v2200 = vadd.f32 0.0, %v2199
    %v2201 = vpop.f32.mrb[0].mxu0
    %2202 = vmatprep.mubr.bf16.mxu0 %v1987
    %2203 = vmatmul.mubr.bf16.gmra.mrb[0].mxu0 %v1986
    %v2204 = vpop.f32.mrb[0].mxu0
    %v2205 = vadd.f32 0.0, %v2204
    %v2206 = vpop.f32.mrb[0].mxu0
    %v2207 = vpop.f32.mrb[0].mxu0
    %v2208 = vadd.f32 0.0, %v2207
    %v2209 = vpop.f32.mrb[0].mxu0
    %2210 = vmatprep.mubr.bf16.mxu0 %v1990
    %2211 = vmatmul.mubr.bf16.gmra.mrb[0].mxu0 %v1989
    %v2212 = vpop.f32.mrb[0].mxu0
    %v2213 = vadd.f32 0.0, %v2212
    %v2214 = vpop.f32.mrb[0].mxu0
    %v2215 = vpop.f32.mrb[0].mxu0
    %v2216 = vadd.f32 0.0, %v2215
    %v2217 = vpop.f32.mrb[0].mxu0
    %2218 = vmatprep.mubr.bf16.mxu0 %v1993
    %2219 = vmatmul.mubr.bf16.gmra.mrb[0].mxu0 %v1992
    %v2220 = vpop.f32.mrb[0].mxu0
    %v2221 = vadd.f32 0.0, %v2220
    %v2222 = vpop.f32.mrb[0].mxu0
    %v2223 = vpop.f32.mrb[0].mxu0
    %v2224 = vadd.f32 0.0, %v2223
    %v2225 = vpop.f32.mrb[0].mxu0
    %2226 = vmatprep.mubr.bf16.mxu0 %v1996
    %2227 = vmatmul.mubr.bf16.gmra.mrb[0].mxu0 %v1995
    %v2228 = vpop.f32.mrb[0].mxu0
    %v2229 = vadd.f32 0.0, %v2228
    %v2230 = vpop.f32.mrb[0].mxu0
    %v2231 = vpop.f32.mrb[0].mxu0
    %v2232 = vadd.f32 0.0, %v2231
    %v2233 = vpop.f32.mrb[0].mxu0
    %2234 = vmatprep.mubr.bf16.mxu0 %v1999
    %2235 = vmatmul.mubr.bf16.gmra.mrb[0].mxu0 %v1998
    %v2236 = vpop.f32.mrb[0].mxu0
    %v2237 = vadd.f32 0.0, %v2236
    %v2238 = vpop.f32.mrb[0].mxu0
    %v2239 = vpop.f32.mrb[0].mxu0
    %v2240 = vadd.f32 0.0, %v2239
    %v2241 = vpop.f32.mrb[0].mxu0
    %2242 = vmatprep.mubr.bf16.mxu0 %v2002
    %2243 = vmatmul.mubr.bf16.gmra.mrb[0].mxu0 %v2001
    %v2244 = vpop.f32.mrb[0].mxu0
    %v2245 = vadd.f32 0.0, %v2244
    %v2246 = vpop.f32.mrb[0].mxu0
    %v2247 = vpop.f32.mrb[0].mxu0
    %v2248 = vadd.f32 0.0, %v2247
    %v2249 = vpop.f32.mrb[0].mxu0
    %2250 = vmatprep.mubr.bf16.mxu0 %v2005
    %2251 = vmatmul.mubr.bf16.gmra.mrb[0].mxu0 %v2004
    %v2252 = vpop.f32.mrb[0].mxu0
    %v2253 = vadd.f32 0.0, %v2252
    %v2254 = vpop.f32.mrb[0].mxu0
    %v2255 = vpop.f32.mrb[0].mxu0
    %v2256 = vadd.f32 0.0, %v2255
    %v2257 = vpop.f32.mrb[0].mxu0
    %2258 = vmatprep.mubr.bf16.mxu0 %v2008
    %2259 = vmatmul.mubr.bf16.gmra.mrb[0].mxu0 %v2007
    %v2260 = vpop.f32.mrb[0].mxu0
    %v2261 = vadd.f32 0.0, %v2260
    %v2262 = vpop.f32.mrb[0].mxu0
    %v2263 = vpop.f32.mrb[0].mxu0
    %v2264 = vadd.f32 0.0, %v2263
    %v2265 = vpop.f32.mrb[0].mxu0
    %2266 = vmatprep.mubr.bf16.mxu0 %v2011
    %2267 = vmatmul.mubr.bf16.gmra.mrb[0].mxu0 %v2010
    %v2268 = vpop.f32.mrb[0].mxu0
    %v2269 = vadd.f32 0.0, %v2268
    %v2270 = vpop.f32.mrb[0].mxu0
    %v2271 = vpop.f32.mrb[0].mxu0
    %v2272 = vadd.f32 0.0, %v2271
    %v2273 = vpop.f32.mrb[0].mxu0
    %2274 = vmatprep.mubr.bf16.mxu0 %v2014
    %2275 = vmatmul.mubr.bf16.gmra.mrb[0].mxu0 %v2013
    %v2276 = vpop.f32.mrb[0].mxu0
    %v2277 = vadd.f32 0.0, %v2276
    %v2278 = vpop.f32.mrb[0].mxu0
    %v2279 = vpop.f32.mrb[0].mxu0
    %v2280 = vadd.f32 0.0, %v2279
    %v2281 = vpop.f32.mrb[0].mxu0
    %2282 = vmatprep.mubr.bf16.mxu0 %v2017
    %2283 = vmatmul.mubr.bf16.gmra.mrb[0].mxu0 %v2016
    %v2284 = vpop.f32.mrb[0].mxu0
    %v2285 = vadd.f32 0.0, %v2284
    %v2286 = vpop.f32.mrb[0].mxu0
    %v2287 = vpop.f32.mrb[0].mxu0
    %v2288 = vadd.f32 0.0, %v2287
    %v2289 = vpop.f32.mrb[0].mxu0
    %2290 = vmatprep.mubr.bf16.mxu0 %v2020
    %2291 = vmatmul.mubr.bf16.gmra.mrb[0].mxu0 %v2019
    %v2292 = vpop.f32.mrb[0].mxu0
    %v2293 = vadd.f32 0.0, %v2292
    %v2294 = vpop.f32.mrb[0].mxu0
    %v2295 = vpop.f32.mrb[0].mxu0
    %v2296 = vadd.f32 0.0, %v2295
    %v2297 = vpop.f32.mrb[0].mxu0
    %2298 = vmatprep.mubr.bf16.mxu0 %v2023
    %2299 = vmatmul.mubr.bf16.gmra.mrb[0].mxu0 %v2022
    %v2300 = vpop.f32.mrb[0].mxu0
    %v2301 = vadd.f32 0.0, %v2300
    %v2302 = vpop.f32.mrb[0].mxu0
    %v2303 = vpop.f32.mrb[0].mxu0
    %v2304 = vadd.f32 0.0, %v2303
    %v2305 = vpop.f32.mrb[0].mxu0
    %2306 = vmatprep.mubr.bf16.mxu0 %v2026
    %2307 = vmatmul.mubr.bf16.gmra.mrb[0].mxu0 %v2025
    %v2308 = vpop.f32.mrb[0].mxu0
    %v2309 = vadd.f32 0.0, %v2308
    %v2310 = vpop.f32.mrb[0].mxu0
    %v2311 = vpop.f32.mrb[0].mxu0
    %v2312 = vadd.f32 0.0, %v2311
    %v2313 = vpop.f32.mrb[0].mxu0
    %2314 = vmatprep.mubr.bf16.mxu0 %v2029
    %2315 = vmatmul.mubr.bf16.gmra.mrb[0].mxu0 %v2028
    %v2316 = vpop.f32.mrb[0].mxu0
    %v2317 = vadd.f32 0.0, %v2316
    %v2318 = vpop.f32.mrb[0].mxu0
    %v2319 = vpop.f32.mrb[0].mxu0
    %v2320 = vadd.f32 0.0, %v2319
    %v2321 = vpop.f32.mrb[0].mxu0
    %2322 = vmatprep.mubr.bf16.mxu0 %v2032
    %2323 = vmatmul.mubr.bf16.gmra.mrb[0].mxu0 %v2031
    %v2324 = vpop.f32.mrb[0].mxu0
    %v2325 = vadd.f32 0.0, %v2324
    %v2326 = vpop.f32.mrb[0].mxu0
    %v2327 = vpop.f32.mrb[0].mxu0
    %v2328 = vadd.f32 0.0, %v2327
    %v2329 = vpop.f32.mrb[0].mxu0
    %2330 = vdwg.mxu0
    %2331 = vmatprep.subr.bf16.mxu0 0
    %2332 = vmatpush1.bf16.msra.mxu0 %v1714
    %2333 = vmatprep.subr.bf16.mxu0 0
    %2334 = vmatpush1.bf16.msra.mxu0 %v1715
    %2335 = vmatprep.subr.bf16.mxu0 0
    %2336 = vmatpush1.bf16.msra.mxu0 %v1716
    %2337 = vmatprep.subr.bf16.mxu0 0
    %2338 = vmatpush1.bf16.msra.mxu0 %v1717
    %2339 = vmatprep.subr.bf16.mxu0 0
    %2340 = vmatpush1.bf16.msra.mxu0 %v1718
    %2341 = vmatprep.subr.bf16.mxu0 0
    %2342 = vmatpush1.bf16.msra.mxu0 %v1719
    %2343 = vmatprep.subr.bf16.mxu0 0
    %2344 = vmatpush1.bf16.msra.mxu0 %v1720
    %2345 = vmatprep.subr.bf16.mxu0 0
    %2346 = vmatpush1.bf16.msra.mxu0 %v1721
    %2347 = vmatprep.subr.bf16.mxu0 0
    %2348 = vmatpush1.bf16.msra.mxu0 0
    %2349 = vmatprep.subr.bf16.mxu0 0
    %2350 = vmatpush1.bf16.msra.mxu0 0
    %2351 = vmatprep.subr.bf16.mxu0 0
    %2352 = vmatpush1.bf16.msra.mxu0 0
    %2353 = vmatprep.subr.bf16.mxu0 0
    %2354 = vmatpush1.bf16.msra.mxu0 0
    %2355 = vmatprep.subr.bf16.mxu0 0
    %2356 = vmatpush1.bf16.msra.mxu0 0
    %2357 = vmatprep.subr.bf16.mxu0 0
    %2358 = vmatpush1.bf16.msra.mxu0 0
    %2359 = vmatprep.subr.bf16.mxu0 0
    %2360 = vmatpush1.bf16.msra.mxu0 0
    %2361 = vmatprep.subr.bf16.mxu0 0
    %2362 = vmatpush1.bf16.msra.mxu0 0
    %2363 = vmatprep.mubr.bf16.mxu0 0
    %2364 = vmatmul.mubr.bf16.gmra.mrb[0].mxu0 %v1964
    %v2365 = vpop.f32.mrb[0].mxu0
    %v2366 = vadd.f32 %v2141, %v2365
    %v2367 = vpop.f32.mrb[0].mxu0
    %v2368 = vpop.f32.mrb[0].mxu0
    %v2369 = vadd.f32 %v2144, %v2368
    %v2370 = vpop.f32.mrb[0].mxu0
    %2371 = vmatprep.mubr.bf16.mxu0 0
    %2372 = vmatmul.mubr.bf16.gmra.mrb[0].mxu0 %v1967
    %v2373 = vpop.f32.mrb[0].mxu0
    %v2374 = vadd.f32 %v2149, %v2373
    %v2375 = vpop.f32.mrb[0].mxu0
    %v2376 = vpop.f32.mrb[0].mxu0
    %v2377 = vadd.f32 %v2152, %v2376
    %v2378 = vpop.f32.mrb[0].mxu0
    %2379 = vmatprep.mubr.bf16.mxu0 0
    %2380 = vmatmul.mubr.bf16.gmra.mrb[0].mxu0 %v1970
    %v2381 = vpop.f32.mrb[0].mxu0
    %v2382 = vadd.f32 %v2157, %v2381
    %v2383 = vpop.f32.mrb[0].mxu0
    %v2384 = vpop.f32.mrb[0].mxu0
    %v2385 = vadd.f32 %v2160, %v2384
    %v2386 = vpop.f32.mrb[0].mxu0
    %2387 = vmatprep.mubr.bf16.mxu0 0
    %2388 = vmatmul.mubr.bf16.gmra.mrb[0].mxu0 %v1973
    %v2389 = vpop.f32.mrb[0].mxu0
    %v2390 = vadd.f32 %v2165, %v2389
    %v2391 = vpop.f32.mrb[0].mxu0
    %v2392 = vpop.f32.mrb[0].mxu0
    %v2393 = vadd.f32 %v2168, %v2392
    %v2394 = vpop.f32.mrb[0].mxu0
    %2395 = vmatprep.mubr.bf16.mxu0 0
    %2396 = vmatmul.mubr.bf16.gmra.mrb[0].mxu0 %v1976
    %v2397 = vpop.f32.mrb[0].mxu0
    %v2398 = vadd.f32 %v2173, %v2397
    %v2399 = vpop.f32.mrb[0].mxu0
    %v2400 = vpop.f32.mrb[0].mxu0
    %v2401 = vadd.f32 %v2176, %v2400
    %v2402 = vpop.f32.mrb[0].mxu0
    %2403 = vmatprep.mubr.bf16.mxu0 0
    %2404 = vmatmul.mubr.bf16.gmra.mrb[0].mxu0 %v1979
    %v2405 = vpop.f32.mrb[0].mxu0
    %v2406 = vadd.f32 %v2181, %v2405
    %v2407 = vpop.f32.mrb[0].mxu0
    %v2408 = vpop.f32.mrb[0].mxu0
    %v2409 = vadd.f32 %v2184, %v2408
    %v2410 = vpop.f32.mrb[0].mxu0
    %2411 = vmatprep.mubr.bf16.mxu0 0
    %2412 = vmatmul.mubr.bf16.gmra.mrb[0].mxu0 %v1982
    %v2413 = vpop.f32.mrb[0].mxu0
    %v2414 = vadd.f32 %v2189, %v2413
    %v2415 = vpop.f32.mrb[0].mxu0
    %v2416 = vpop.f32.mrb[0].mxu0
    %v2417 = vadd.f32 %v2192, %v2416
    %v2418 = vpop.f32.mrb[0].mxu0
    %2419 = vmatprep.mubr.bf16.mxu0 0
    %2420 = vmatmul.mubr.bf16.gmra.mrb[0].mxu0 %v1985
    %v2421 = vpop.f32.mrb[0].mxu0
    %v2422 = vadd.f32 %v2197, %v2421
    %v2423 = vpop.f32.mrb[0].mxu0
    %v2424 = vpop.f32.mrb[0].mxu0
    %v2425 = vadd.f32 %v2200, %v2424
    %v2426 = vpop.f32.mrb[0].mxu0
    %2427 = vmatprep.mubr.bf16.mxu0 0
    %2428 = vmatmul.mubr.bf16.gmra.mrb[0].mxu0 %v1988
    %v2429 = vpop.f32.mrb[0].mxu0
    %v2430 = vadd.f32 %v2205, %v2429
    %v2431 = vpop.f32.mrb[0].mxu0
    %v2432 = vpop.f32.mrb[0].mxu0
    %v2433 = vadd.f32 %v2208, %v2432
    %v2434 = vpop.f32.mrb[0].mxu0
    %2435 = vmatprep.mubr.bf16.mxu0 0
    %2436 = vmatmul.mubr.bf16.gmra.mrb[0].mxu0 %v1991
    %v2437 = vpop.f32.mrb[0].mxu0
    %v2438 = vadd.f32 %v2213, %v2437
    %v2439 = vpop.f32.mrb[0].mxu0
    %v2440 = vpop.f32.mrb[0].mxu0
    %v2441 = vadd.f32 %v2216, %v2440
    %v2442 = vpop.f32.mrb[0].mxu0
    %2443 = vmatprep.mubr.bf16.mxu0 0
    %2444 = vmatmul.mubr.bf16.gmra.mrb[0].mxu0 %v1994
    %v2445 = vpop.f32.mrb[0].mxu0
    %v2446 = vadd.f32 %v2221, %v2445
    %v2447 = vpop.f32.mrb[0].mxu0
    %v2448 = vpop.f32.mrb[0].mxu0
    %v2449 = vadd.f32 %v2224, %v2448
    %v2450 = vpop.f32.mrb[0].mxu0
    %2451 = vmatprep.mubr.bf16.mxu0 0
    %2452 = vmatmul.mubr.bf16.gmra.mrb[0].mxu0 %v1997
    %v2453 = vpop.f32.mrb[0].mxu0
    %v2454 = vadd.f32 %v2229, %v2453
    %v2455 = vpop.f32.mrb[0].mxu0
    %v2456 = vpop.f32.mrb[0].mxu0
    %v2457 = vadd.f32 %v2232, %v2456
    %v2458 = vpop.f32.mrb[0].mxu0
    %2459 = vmatprep.mubr.bf16.mxu0 0
    %2460 = vmatmul.mubr.bf16.gmra.mrb[0].mxu0 %v2000
    %v2461 = vpop.f32.mrb[0].mxu0
    %v2462 = vadd.f32 %v2237, %v2461
    %v2463 = vpop.f32.mrb[0].mxu0
    %v2464 = vpop.f32.mrb[0].mxu0
    %v2465 = vadd.f32 %v2240, %v2464
    %v2466 = vpop.f32.mrb[0].mxu0
    %2467 = vmatprep.mubr.bf16.mxu0 0
    %2468 = vmatmul.mubr.bf16.gmra.mrb[0].mxu0 %v2003
    %v2469 = vpop.f32.mrb[0].mxu0
    %v2470 = vadd.f32 %v2245, %v2469
    %v2471 = vpop.f32.mrb[0].mxu0
    %v2472 = vpop.f32.mrb[0].mxu0
    %v2473 = vadd.f32 %v2248, %v2472
    %v2474 = vpop.f32.mrb[0].mxu0
    %2475 = vmatprep.mubr.bf16.mxu0 0
    %2476 = vmatmul.mubr.bf16.gmra.mrb[0].mxu0 %v2006
    %v2477 = vpop.f32.mrb[0].mxu0
    %v2478 = vadd.f32 %v2253, %v2477
    %v2479 = vpop.f32.mrb[0].mxu0
    %v2480 = vpop.f32.mrb[0].mxu0
    %v2481 = vadd.f32 %v2256, %v2480
    %v2482 = vpop.f32.mrb[0].mxu0
    %2483 = vmatprep.mubr.bf16.mxu0 0
    %2484 = vmatmul.mubr.bf16.gmra.mrb[0].mxu0 %v2009
    %v2485 = vpop.f32.mrb[0].mxu0
    %v2486 = vadd.f32 %v2261, %v2485
    %v2487 = vpop.f32.mrb[0].mxu0
    %v2488 = vpop.f32.mrb[0].mxu0
    %v2489 = vadd.f32 %v2264, %v2488
    %v2490 = vpop.f32.mrb[0].mxu0
    %2491 = vmatprep.mubr.bf16.mxu0 0
    %2492 = vmatmul.mubr.bf16.gmra.mrb[0].mxu0 %v2012
    %v2493 = vpop.f32.mrb[0].mxu0
    %v2494 = vadd.f32 %v2269, %v2493
    %v2495 = vpop.f32.mrb[0].mxu0
    %v2496 = vpop.f32.mrb[0].mxu0
    %v2497 = vadd.f32 %v2272, %v2496
    %v2498 = vpop.f32.mrb[0].mxu0
    %2499 = vmatprep.mubr.bf16.mxu0 0
    %2500 = vmatmul.mubr.bf16.gmra.mrb[0].mxu0 %v2015
    %v2501 = vpop.f32.mrb[0].mxu0
    %v2502 = vadd.f32 %v2277, %v2501
    %v2503 = vpop.f32.mrb[0].mxu0
    %v2504 = vpop.f32.mrb[0].mxu0
    %v2505 = vadd.f32 %v2280, %v2504
    %v2506 = vpop.f32.mrb[0].mxu0
    %2507 = vmatprep.mubr.bf16.mxu0 0
    %2508 = vmatmul.mubr.bf16.gmra.mrb[0].mxu0 %v2018
    %v2509 = vpop.f32.mrb[0].mxu0
    %v2510 = vadd.f32 %v2285, %v2509
    %v2511 = vpop.f32.mrb[0].mxu0
    %v2512 = vpop.f32.mrb[0].mxu0
    %v2513 = vadd.f32 %v2288, %v2512
    %v2514 = vpop.f32.mrb[0].mxu0
    %2515 = vmatprep.mubr.bf16.mxu0 0
    %2516 = vmatmul.mubr.bf16.gmra.mrb[0].mxu0 %v2021
    %v2517 = vpop.f32.mrb[0].mxu0
    %v2518 = vadd.f32 %v2293, %v2517
    %v2519 = vpop.f32.mrb[0].mxu0
    %v2520 = vpop.f32.mrb[0].mxu0
    %v2521 = vadd.f32 %v2296, %v2520
    %v2522 = vpop.f32.mrb[0].mxu0
    %2523 = vmatprep.mubr.bf16.mxu0 0
    %2524 = vmatmul.mubr.bf16.gmra.mrb[0].mxu0 %v2024
    %v2525 = vpop.f32.mrb[0].mxu0
    %v2526 = vadd.f32 %v2301, %v2525
    %v2527 = vpop.f32.mrb[0].mxu0
    %v2528 = vpop.f32.mrb[0].mxu0
    %v2529 = vadd.f32 %v2304, %v2528
    %v2530 = vpop.f32.mrb[0].mxu0
    %2531 = vmatprep.mubr.bf16.mxu0 0
    %2532 = vmatmul.mubr.bf16.gmra.mrb[0].mxu0 %v2027
    %v2533 = vpop.f32.mrb[0].mxu0
    %v2534 = vadd.f32 %v2309, %v2533
    %v2535 = vpop.f32.mrb[0].mxu0
    %v2536 = vpop.f32.mrb[0].mxu0
    %v2537 = vadd.f32 %v2312, %v2536
    %v2538 = vpop.f32.mrb[0].mxu0
    %2539 = vmatprep.mubr.bf16.mxu0 0
    %2540 = vmatmul.mubr.bf16.gmra.mrb[0].mxu0 %v2030
    %v2541 = vpop.f32.mrb[0].mxu0
    %v2542 = vadd.f32 %v2317, %v2541
    %v2543 = vpop.f32.mrb[0].mxu0
    %v2544 = vpop.f32.mrb[0].mxu0
    %v2545 = vadd.f32 %v2320, %v2544
    %v2546 = vpop.f32.mrb[0].mxu0
    %2547 = vmatprep.mubr.bf16.mxu0 0
    %2548 = vmatmul.mubr.bf16.gmra.mrb[0].mxu0 %v2033
    %v2549 = vpop.f32.mrb[0].mxu0
    %v2550 = vadd.f32 %v2325, %v2549
    %v2551 = vpop.f32.mrb[0].mxu0
    %v2552 = vpop.f32.mrb[0].mxu0
    %v2553 = vadd.f32 %v2328, %v2552
    %v2554 = vpop.f32.mrb[0].mxu0
    %2555 = vdwg.mxu0
    %2556 = vst [vmem:[#allocation2] sm:$0xff] %v2366
    %2557 = vst [vmem:[#allocation2 + $0x8] sm:$0xff] %v2369
    %2558 = vst [vmem:[#allocation2 + $0x10] sm:$0xff] %v2374
    %2559 = vst [vmem:[#allocation2 + $0x18] sm:$0xff] %v2377
    %2560 = vst [vmem:[#allocation2 + $0x20] sm:$0xff] %v2382
    %2561 = vst [vmem:[#allocation2 + $0x28] sm:$0xff] %v2385
    %2562 = vst [vmem:[#allocation2 + $0x30] sm:$0xff] %v2390
    %2563 = vst [vmem:[#allocation2 + $0x38] sm:$0xff] %v2393
    %2564 = vst [vmem:[#allocation2 + $0x40] sm:$0xff] %v2398
    %2565 = vst [vmem:[#allocation2 + $0x48] sm:$0xff] %v2401
    %2566 = vst [vmem:[#allocation2 + $0x50] sm:$0xff] %v2406
    %2567 = vst [vmem:[#allocation2 + $0x58] sm:$0xff] %v2409
    %2568 = vst [vmem:[#allocation2 + $0x60] sm:$0xff] %v2414
    %2569 = vst [vmem:[#allocation2 + $0x68] sm:$0xff] %v2417
    %2570 = vst [vmem:[#allocation2 + $0x70] sm:$0xff] %v2422
    %2571 = vst [vmem:[#allocation2 + $0x78] sm:$0xff] %v2425
    %2572 = vst [vmem:[#allocation2 + $0x80] sm:$0xff] %v2430
    %2573 = vst [vmem:[#allocation2 + $0x88] sm:$0xff] %v2433
    %2574 = vst [vmem:[#allocation2 + $0x90] sm:$0xff] %v2438
    %2575 = vst [vmem:[#allocation2 + $0x98] sm:$0xff] %v2441
    %2576 = vst [vmem:[#allocation2 + $0xa0] sm:$0xff] %v2446
    %2577 = vst [vmem:[#allocation2 + $0xa8] sm:$0xff] %v2449
    %2578 = vst [vmem:[#allocation2 + $0xb0] sm:$0xff] %v2454
    %2579 = vst [vmem:[#allocation2 + $0xb8] sm:$0xff] %v2457
    %2580 = vst [vmem:[#allocation2 + $0xc0] sm:$0xff] %v2462
    %2581 = vst [vmem:[#allocation2 + $0xc8] sm:$0xff] %v2465
    %2582 = vst [vmem:[#allocation2 + $0xd0] sm:$0xff] %v2470
    %2583 = vst [vmem:[#allocation2 + $0xd8] sm:$0xff] %v2473
    %2584 = vst [vmem:[#allocation2 + $0xe0] sm:$0xff] %v2478
    %2585 = vst [vmem:[#allocation2 + $0xe8] sm:$0xff] %v2481
    %2586 = vst [vmem:[#allocation2 + $0xf0] sm:$0xff] %v2486
    %2587 = vst [vmem:[#allocation2 + $0xf8] sm:$0xff] %v2489
    %2588 = vst [vmem:[#allocation2 + $0x100] sm:$0xff] %v2494
    %2589 = vst [vmem:[#allocation2 + $0x108] sm:$0xff] %v2497
    %2590 = vst [vmem:[#allocation2 + $0x110] sm:$0xff] %v2502
    %2591 = vst [vmem:[#allocation2 + $0x118] sm:$0xff] %v2505
    %2592 = vst [vmem:[#allocation2 + $0x120] sm:$0xff] %v2510
    %2593 = vst [vmem:[#allocation2 + $0x128] sm:$0xff] %v2513
    %2594 = vst [vmem:[#allocation2 + $0x130] sm:$0xff] %v2518
    %2595 = vst [vmem:[#allocation2 + $0x138] sm:$0xff] %v2521
    %2596 = vst [vmem:[#allocation2 + $0x140] sm:$0xff] %v2526
    %2597 = vst [vmem:[#allocation2 + $0x148] sm:$0xff] %v2529
    %2598 = vst [vmem:[#allocation2 + $0x150] sm:$0xff] %v2534
    %2599 = vst [vmem:[#allocation2 + $0x158] sm:$0xff] %v2537
    %2600 = vst [vmem:[#allocation2 + $0x160] sm:$0xff] %v2542
    %2601 = vst [vmem:[#allocation2 + $0x168] sm:$0xff] %v2545
    %2602 = vst [vmem:[#allocation2 + $0x170] sm:$0xff] %v2550
    %2603 = vst [vmem:[#allocation2 + $0x178] sm:$0xff] %v2553
    %v2604 = vld [vmem:[#allocation4] sm:$0xff]
    %v2605 = vld [vmem:[#allocation4 + $0x8] sm:$0xf]
    %v2606 = vld [vmem:[#allocation4 + $0xc] sm:$0xff]
    %v2607 = vld [vmem:[#allocation4 + $0x14] sm:$0xf]
    %v2608 = vld [vmem:[#allocation4 + $0x18] sm:$0xff]
    %v2609 = vld [vmem:[#allocation4 + $0x20] sm:$0xf]
    %v2610 = vld [vmem:[#allocation4 + $0x24] sm:$0xff]
    %v2611 = vld [vmem:[#allocation4 + $0x2c] sm:$0xf]
    %v2612 = vld [vmem:[#allocation4 + $0x30] sm:$0xff]
    %v2613 = vld [vmem:[#allocation4 + $0x38] sm:$0xf]
    %v2614 = vld [vmem:[#allocation4 + $0x3c] sm:$0xff]
    %v2615 = vld [vmem:[#allocation4 + $0x44] sm:$0xf]
    %v2616 = vld [vmem:[#allocation4 + $0x48] sm:$0xff]
    %v2617 = vld [vmem:[#allocation4 + $0x50] sm:$0xf]
    %v2618 = vld [vmem:[#allocation4 + $0x54] sm:$0xff]
    %v2619 = vld [vmem:[#allocation4 + $0x5c] sm:$0xf]
    %v2620 = vld [vmem:[#allocation4 + $0x60] sm:$0xff]
    %v2621 = vld [vmem:[#allocation4 + $0x68] sm:$0xf]
    %v2622 = vld [vmem:[#allocation4 + $0x6c] sm:$0xff]
    %v2623 = vld [vmem:[#allocation4 + $0x74] sm:$0xf]
    %v2624 = vld [vmem:[#allocation4 + $0x78] sm:$0xff]
    %v2625 = vld [vmem:[#allocation4 + $0x80] sm:$0xf]
    %v2626 = vld [vmem:[#allocation4 + $0x84] sm:$0xff]
    %v2627 = vld [vmem:[#allocation4 + $0x8c] sm:$0xf]
    %v2628 = vld [vmem:[#allocation4 + $0x90] sm:$0xff]
    %v2629 = vld [vmem:[#allocation4 + $0x98] sm:$0xf]
    %v2630 = vld [vmem:[#allocation4 + $0x9c] sm:$0xff]
    %v2631 = vld [vmem:[#allocation4 + $0xa4] sm:$0xf]
    %v2632 = vld [vmem:[#allocation4 + $0xa8] sm:$0xff]
    %v2633 = vld [vmem:[#allocation4 + $0xb0] sm:$0xf]
    %v2634 = vld [vmem:[#allocation4 + $0xb4] sm:$0xff]
    %v2635 = vld [vmem:[#allocation4 + $0xbc] sm:$0xf]
    %v2636 = vld [vmem:[#allocation4 + $0xc0] sm:$0xff]
    %v2637 = vld [vmem:[#allocation4 + $0xc8] sm:$0xf]
    %v2638 = vld [vmem:[#allocation4 + $0xcc] sm:$0xff]
    %v2639 = vld [vmem:[#allocation4 + $0xd4] sm:$0xf]
    %v2640 = vld [vmem:[#allocation4 + $0xd8] sm:$0xff]
    %v2641 = vld [vmem:[#allocation4 + $0xe0] sm:$0xf]
    %v2642 = vld [vmem:[#allocation4 + $0xe4] sm:$0xff]
    %v2643 = vld [vmem:[#allocation4 + $0xec] sm:$0xf]
    %v2644 = vld [vmem:[#allocation4 + $0xf0] sm:$0xff]
    %v2645 = vld [vmem:[#allocation4 + $0xf8] sm:$0xf]
    %v2646 = vld [vmem:[#allocation4 + $0xfc] sm:$0xff]
    %v2647 = vld [vmem:[#allocation4 + $0x104] sm:$0xf]
    %v2648 = vld [vmem:[#allocation4 + $0x108] sm:$0xff]
    %v2649 = vld [vmem:[#allocation4 + $0x110] sm:$0xf]
    %v2650 = vld [vmem:[#allocation4 + $0x114] sm:$0xff]
    %v2651 = vld [vmem:[#allocation4 + $0x11c] sm:$0xf]
    %v2652 = vld [vmem:[#allocation4 + $0x120] sm:$0xff]
    %v2653 = vld [vmem:[#allocation4 + $0x128] sm:$0xf]
    %v2654 = vld [vmem:[#allocation4 + $0x12c] sm:$0xff]
    %v2655 = vld [vmem:[#allocation4 + $0x134] sm:$0xf]
    %v2656 = vld [vmem:[#allocation4 + $0x138] sm:$0xff]
    %v2657 = vld [vmem:[#allocation4 + $0x140] sm:$0xf]
    %v2658 = vld [vmem:[#allocation4 + $0x144] sm:$0xff]
    %v2659 = vld [vmem:[#allocation4 + $0x14c] sm:$0xf]
    %v2660 = vld [vmem:[#allocation4 + $0x150] sm:$0xff]
    %v2661 = vld [vmem:[#allocation4 + $0x158] sm:$0xf]
    %v2662 = vld [vmem:[#allocation4 + $0x15c] sm:$0xff]
    %v2663 = vld [vmem:[#allocation4 + $0x164] sm:$0xf]
    %v2664 = vld [vmem:[#allocation4 + $0x168] sm:$0xff]
    %v2665 = vld [vmem:[#allocation4 + $0x170] sm:$0xf]
    %v2666 = vld [vmem:[#allocation4 + $0x174] sm:$0xff]
    %v2667 = vld [vmem:[#allocation4 + $0x17c] sm:$0xf]
    %v2668 = vld [vmem:[#allocation4 + $0x180] sm:$0xff]
    %v2669 = vld [vmem:[#allocation4 + $0x188] sm:$0xf]
    %v2670 = vld [vmem:[#allocation4 + $0x18c] sm:$0xff]
    %v2671 = vld [vmem:[#allocation4 + $0x194] sm:$0xf]
    %v2672 = vld [vmem:[#allocation4 + $0x198] sm:$0xff]
    %v2673 = vld [vmem:[#allocation4 + $0x1a0] sm:$0xf]
    %v2674 = vld [vmem:[#allocation4 + $0x1a4] sm:$0xff]
    %v2675 = vld [vmem:[#allocation4 + $0x1ac] sm:$0xf]
    %v2676 = vld [vmem:[#allocation4 + $0x1b0] sm:$0xff]
    %v2677 = vld [vmem:[#allocation4 + $0x1b8] sm:$0xf]
    %v2678 = vld [vmem:[#allocation4 + $0x1bc] sm:$0xff]
    %v2679 = vld [vmem:[#allocation4 + $0x1c4] sm:$0xf]
    %v2680 = vld [vmem:[#allocation4 + $0x1c8] sm:$0xff]
    %v2681 = vld [vmem:[#allocation4 + $0x1d0] sm:$0xf]
    %v2682 = vld [vmem:[#allocation4 + $0x1d4] sm:$0xff]
    %v2683 = vld [vmem:[#allocation4 + $0x1dc] sm:$0xf]
    %v2684 = vld [vmem:[#allocation4 + $0x1e0] sm:$0xff]
    %v2685 = vld [vmem:[#allocation4 + $0x1e8] sm:$0xf]
    %v2686 = vld [vmem:[#allocation4 + $0x1ec] sm:$0xff]
    %v2687 = vld [vmem:[#allocation4 + $0x1f4] sm:$0xf]
    %v2688 = vld [vmem:[#allocation4 + $0x1f8] sm:$0xff]
    %v2689 = vld [vmem:[#allocation4 + $0x200] sm:$0xf]
    %v2690 = vld [vmem:[#allocation4 + $0x204] sm:$0xff]
    %v2691 = vld [vmem:[#allocation4 + $0x20c] sm:$0xf]
    %v2692 = vld [vmem:[#allocation4 + $0x210] sm:$0xff]
    %v2693 = vld [vmem:[#allocation4 + $0x218] sm:$0xf]
    %v2694 = vld [vmem:[#allocation4 + $0x21c] sm:$0xff]
    %v2695 = vld [vmem:[#allocation4 + $0x224] sm:$0xf]
    %v2696 = vld [vmem:[#allocation4 + $0x228] sm:$0xff]
    %v2697 = vld [vmem:[#allocation4 + $0x230] sm:$0xf]
    %v2698 = vld [vmem:[#allocation4 + $0x234] sm:$0xff]
    %v2699 = vld [vmem:[#allocation4 + $0x23c] sm:$0xf]
    %v2700 = vld [vmem:[#allocation2] sm:$0xff]
    %v2701 = vld [vmem:[#allocation2 + $0x8] sm:$0xff]
    %v2702 = vld [vmem:[#allocation2 + $0x10] sm:$0xff]
    %v2703 = vld [vmem:[#allocation2 + $0x18] sm:$0xff]
    %v2704 = vld [vmem:[#allocation2 + $0x20] sm:$0xff]
    %v2705 = vld [vmem:[#allocation2 + $0x28] sm:$0xff]
    %v2706 = vld [vmem:[#allocation2 + $0x30] sm:$0xff]
    %v2707 = vld [vmem:[#allocation2 + $0x38] sm:$0xff]
    %v2708 = vld [vmem:[#allocation2 + $0x40] sm:$0xff]
    %v2709 = vld [vmem:[#allocation2 + $0x48] sm:$0xff]
    %v2710 = vld [vmem:[#allocation2 + $0x50] sm:$0xff]
    %v2711 = vld [vmem:[#allocation2 + $0x58] sm:$0xff]
    %v2712 = vld [vmem:[#allocation2 + $0x60] sm:$0xff]
    %v2713 = vld [vmem:[#allocation2 + $0x68] sm:$0xff]
    %v2714 = vld [vmem:[#allocation2 + $0x70] sm:$0xff]
    %v2715 = vld [vmem:[#allocation2 + $0x78] sm:$0xff]
    %v2716 = vld [vmem:[#allocation2 + $0x80] sm:$0xff]
    %v2717 = vld [vmem:[#allocation2 + $0x88] sm:$0xff]
    %v2718 = vld [vmem:[#allocation2 + $0x90] sm:$0xff]
    %v2719 = vld [vmem:[#allocation2 + $0x98] sm:$0xff]
    %v2720 = vld [vmem:[#allocation2 + $0xa0] sm:$0xff]
    %v2721 = vld [vmem:[#allocation2 + $0xa8] sm:$0xff]
    %v2722 = vld [vmem:[#allocation2 + $0xb0] sm:$0xff]
    %v2723 = vld [vmem:[#allocation2 + $0xb8] sm:$0xff]
    %v2724 = vld [vmem:[#allocation2 + $0xc0] sm:$0xff]
    %v2725 = vld [vmem:[#allocation2 + $0xc8] sm:$0xff]
    %v2726 = vld [vmem:[#allocation2 + $0xd0] sm:$0xff]
    %v2727 = vld [vmem:[#allocation2 + $0xd8] sm:$0xff]
    %v2728 = vld [vmem:[#allocation2 + $0xe0] sm:$0xff]
    %v2729 = vld [vmem:[#allocation2 + $0xe8] sm:$0xff]
    %v2730 = vld [vmem:[#allocation2 + $0xf0] sm:$0xff]
    %v2731 = vld [vmem:[#allocation2 + $0xf8] sm:$0xff]
    %v2732 = vld [vmem:[#allocation2 + $0x100] sm:$0xff]
    %v2733 = vld [vmem:[#allocation2 + $0x108] sm:$0xff]
    %v2734 = vld [vmem:[#allocation2 + $0x110] sm:$0xff]
    %v2735 = vld [vmem:[#allocation2 + $0x118] sm:$0xff]
    %v2736 = vld [vmem:[#allocation2 + $0x120] sm:$0xff]
    %v2737 = vld [vmem:[#allocation2 + $0x128] sm:$0xff]
    %v2738 = vld [vmem:[#allocation2 + $0x130] sm:$0xff]
    %v2739 = vld [vmem:[#allocation2 + $0x138] sm:$0xff]
    %v2740 = vld [vmem:[#allocation2 + $0x140] sm:$0xff]
    %v2741 = vld [vmem:[#allocation2 + $0x148] sm:$0xff]
    %v2742 = vld [vmem:[#allocation2 + $0x150] sm:$0xff]
    %v2743 = vld [vmem:[#allocation2 + $0x158] sm:$0xff]
    %v2744 = vld [vmem:[#allocation2 + $0x160] sm:$0xff]
    %v2745 = vld [vmem:[#allocation2 + $0x168] sm:$0xff]
    %v2746 = vld [vmem:[#allocation2 + $0x170] sm:$0xff]
    %v2747 = vld [vmem:[#allocation2 + $0x178] sm:$0xff]
    %v2748 = vpack.c.bf16 %v2701, %v2700
    %v2749 = vpack.c.bf16 %v2703, %v2702
    %v2750 = vpack.c.bf16 %v2705, %v2704
    %v2751 = vpack.c.bf16 %v2707, %v2706
    %v2752 = vpack.c.bf16 %v2709, %v2708
    %v2753 = vpack.c.bf16 %v2711, %v2710
    %v2754 = vpack.c.bf16 %v2713, %v2712
    %v2755 = vpack.c.bf16 %v2715, %v2714
    %v2756 = vpack.c.bf16 %v2717, %v2716
    %v2757 = vpack.c.bf16 %v2719, %v2718
    %v2758 = vpack.c.bf16 %v2721, %v2720
    %v2759 = vpack.c.bf16 %v2723, %v2722
    %v2760 = vpack.c.bf16 %v2725, %v2724
    %v2761 = vpack.c.bf16 %v2727, %v2726
    %v2762 = vpack.c.bf16 %v2729, %v2728
    %v2763 = vpack.c.bf16 %v2731, %v2730
    %v2764 = vpack.c.bf16 %v2733, %v2732
    %v2765 = vpack.c.bf16 %v2735, %v2734
    %v2766 = vpack.c.bf16 %v2737, %v2736
    %v2767 = vpack.c.bf16 %v2739, %v2738
    %v2768 = vpack.c.bf16 %v2741, %v2740
    %v2769 = vpack.c.bf16 %v2743, %v2742
    %v2770 = vpack.c.bf16 %v2745, %v2744
    %v2771 = vpack.c.bf16 %v2747, %v2746
    %v2868 = vunpack.c.l.b16 %v2604
    %v2869 = vunpack.c.h.b16 %v2604
    %v2870 = vunpack.c.l.b16 %v2605
    %v2871 = vunpack.c.l.b16 %v2606
    %v2872 = vunpack.c.h.b16 %v2606
    %v2873 = vunpack.c.l.b16 %v2607
    %v2874 = vunpack.c.l.b16 %v2608
    %v2875 = vunpack.c.h.b16 %v2608
    %v2876 = vunpack.c.l.b16 %v2609
    %v2877 = vunpack.c.l.b16 %v2610
    %v2878 = vunpack.c.h.b16 %v2610
    %v2879 = vunpack.c.l.b16 %v2611
    %v2880 = vunpack.c.l.b16 %v2612
    %v2881 = vunpack.c.h.b16 %v2612
    %v2882 = vunpack.c.l.b16 %v2613
    %v2883 = vunpack.c.l.b16 %v2614
    %v2884 = vunpack.c.h.b16 %v2614
    %v2885 = vunpack.c.l.b16 %v2615
    %v2886 = vunpack.c.l.b16 %v2616
    %v2887 = vunpack.c.h.b16 %v2616
    %v2888 = vunpack.c.l.b16 %v2617
    %v2889 = vunpack.c.l.b16 %v2618
    %v2890 = vunpack.c.h.b16 %v2618
    %v2891 = vunpack.c.l.b16 %v2619
    %v2892 = vunpack.c.l.b16 %v2620
    %v2893 = vunpack.c.h.b16 %v2620
    %v2894 = vunpack.c.l.b16 %v2621
    %v2895 = vunpack.c.l.b16 %v2622
    %v2896 = vunpack.c.h.b16 %v2622
    %v2897 = vunpack.c.l.b16 %v2623
    %v2898 = vunpack.c.l.b16 %v2624
    %v2899 = vunpack.c.h.b16 %v2624
    %v2900 = vunpack.c.l.b16 %v2625
    %v2901 = vunpack.c.l.b16 %v2626
    %v2902 = vunpack.c.h.b16 %v2626
    %v2903 = vunpack.c.l.b16 %v2627
    %v2904 = vunpack.c.l.b16 %v2628
    %v2905 = vunpack.c.h.b16 %v2628
    %v2906 = vunpack.c.l.b16 %v2629
    %v2907 = vunpack.c.l.b16 %v2630
    %v2908 = vunpack.c.h.b16 %v2630
    %v2909 = vunpack.c.l.b16 %v2631
    %v2910 = vunpack.c.l.b16 %v2632
    %v2911 = vunpack.c.h.b16 %v2632
    %v2912 = vunpack.c.l.b16 %v2633
    %v2913 = vunpack.c.l.b16 %v2634
    %v2914 = vunpack.c.h.b16 %v2634
    %v2915 = vunpack.c.l.b16 %v2635
    %v2916 = vunpack.c.l.b16 %v2636
    %v2917 = vunpack.c.h.b16 %v2636
    %v2918 = vunpack.c.l.b16 %v2637
    %v2919 = vunpack.c.l.b16 %v2638
    %v2920 = vunpack.c.h.b16 %v2638
    %v2921 = vunpack.c.l.b16 %v2639
    %v2922 = vunpack.c.l.b16 %v2640
    %v2923 = vunpack.c.h.b16 %v2640
    %v2924 = vunpack.c.l.b16 %v2641
    %v2925 = vunpack.c.l.b16 %v2642
    %v2926 = vunpack.c.h.b16 %v2642
    %v2927 = vunpack.c.l.b16 %v2643
    %v2928 = vunpack.c.l.b16 %v2644
    %v2929 = vunpack.c.h.b16 %v2644
    %v2930 = vunpack.c.l.b16 %v2645
    %v2931 = vunpack.c.l.b16 %v2646
    %v2932 = vunpack.c.h.b16 %v2646
    %v2933 = vunpack.c.l.b16 %v2647
    %v2934 = vunpack.c.l.b16 %v2648
    %v2935 = vunpack.c.h.b16 %v2648
    %v2936 = vunpack.c.l.b16 %v2649
    %v2937 = vunpack.c.l.b16 %v2650
    %v2938 = vunpack.c.h.b16 %v2650
    %v2939 = vunpack.c.l.b16 %v2651
    %v2940 = vunpack.c.l.b16 %v2652
    %v2941 = vunpack.c.h.b16 %v2652
    %v2942 = vunpack.c.l.b16 %v2653
    %v2943 = vunpack.c.l.b16 %v2654
    %v2944 = vunpack.c.h.b16 %v2654
    %v2945 = vunpack.c.l.b16 %v2655
    %v2946 = vunpack.c.l.b16 %v2656
    %v2947 = vunpack.c.h.b16 %v2656
    %v2948 = vunpack.c.l.b16 %v2657
    %v2949 = vunpack.c.l.b16 %v2658
    %v2950 = vunpack.c.h.b16 %v2658
    %v2951 = vunpack.c.l.b16 %v2659
    %v2952 = vunpack.c.l.b16 %v2660
    %v2953 = vunpack.c.h.b16 %v2660
    %v2954 = vunpack.c.l.b16 %v2661
    %v2955 = vunpack.c.l.b16 %v2662
    %v2956 = vunpack.c.h.b16 %v2662
    %v2957 = vunpack.c.l.b16 %v2663
    %v2958 = vunpack.c.l.b16 %v2664
    %v2959 = vunpack.c.h.b16 %v2664
    %v2960 = vunpack.c.l.b16 %v2665
    %v2961 = vunpack.c.l.b16 %v2666
    %v2962 = vunpack.c.h.b16 %v2666
    %v2963 = vunpack.c.l.b16 %v2667
    %v2964 = vunpack.c.l.b16 %v2668
    %v2965 = vunpack.c.h.b16 %v2668
    %v2966 = vunpack.c.l.b16 %v2669
    %v2967 = vunpack.c.l.b16 %v2670
    %v2968 = vunpack.c.h.b16 %v2670
    %v2969 = vunpack.c.l.b16 %v2671
    %v2970 = vunpack.c.l.b16 %v2672
    %v2971 = vunpack.c.h.b16 %v2672
    %v2972 = vunpack.c.l.b16 %v2673
    %v2973 = vunpack.c.l.b16 %v2674
    %v2974 = vunpack.c.h.b16 %v2674
    %v2975 = vunpack.c.l.b16 %v2675
    %v2976 = vunpack.c.l.b16 %v2676
    %v2977 = vunpack.c.h.b16 %v2676
    %v2978 = vunpack.c.l.b16 %v2677
    %v2979 = vunpack.c.l.b16 %v2678
    %v2980 = vunpack.c.h.b16 %v2678
    %v2981 = vunpack.c.l.b16 %v2679
    %v2982 = vunpack.c.l.b16 %v2680
    %v2983 = vunpack.c.h.b16 %v2680
    %v2984 = vunpack.c.l.b16 %v2681
    %v2985 = vunpack.c.l.b16 %v2682
    %v2986 = vunpack.c.h.b16 %v2682
    %v2987 = vunpack.c.l.b16 %v2683
    %v2988 = vunpack.c.l.b16 %v2684
    %v2989 = vunpack.c.h.b16 %v2684
    %v2990 = vunpack.c.l.b16 %v2685
    %v2991 = vunpack.c.l.b16 %v2686
    %v2992 = vunpack.c.h.b16 %v2686
    %v2993 = vunpack.c.l.b16 %v2687
    %v2994 = vunpack.c.l.b16 %v2688
    %v2995 = vunpack.c.h.b16 %v2688
    %v2996 = vunpack.c.l.b16 %v2689
    %v2997 = vunpack.c.l.b16 %v2690
    %v2998 = vunpack.c.h.b16 %v2690
    %v2999 = vunpack.c.l.b16 %v2691
    %v3000 = vunpack.c.l.b16 %v2692
    %v3001 = vunpack.c.h.b16 %v2692
    %v3002 = vunpack.c.l.b16 %v2693
    %v3003 = vunpack.c.l.b16 %v2694
    %v3004 = vunpack.c.h.b16 %v2694
    %v3005 = vunpack.c.l.b16 %v2695
    %v3006 = vunpack.c.l.b16 %v2696
    %v3007 = vunpack.c.h.b16 %v2696
    %v3008 = vunpack.c.l.b16 %v2697
    %v3009 = vunpack.c.l.b16 %v2698
    %v3010 = vunpack.c.h.b16 %v2698
    %v3011 = vunpack.c.l.b16 %v2699
    %v3012 = vpack.c.b16 %v2871, %v2868
    %v3013 = vpack.c.b16 %v2872, %v2869
    %v3014 = vpack.c.b16 %v2873, %v2870
    %v3015 = vpack.c.b16 %v2877, %v2874
    %v3016 = vpack.c.b16 %v2878, %v2875
    %v3017 = vpack.c.b16 %v2879, %v2876
    %v3018 = vpack.c.b16 %v2883, %v2880
    %v3019 = vpack.c.b16 %v2884, %v2881
    %v3020 = vpack.c.b16 %v2885, %v2882
    %v3021 = vpack.c.b16 %v2889, %v2886
    %v3022 = vpack.c.b16 %v2890, %v2887
    %v3023 = vpack.c.b16 %v2891, %v2888
    %v3024 = vpack.c.b16 %v2895, %v2892
    %v3025 = vpack.c.b16 %v2896, %v2893
    %v3026 = vpack.c.b16 %v2897, %v2894
    %v3027 = vpack.c.b16 %v2901, %v2898
    %v3028 = vpack.c.b16 %v2902, %v2899
    %v3029 = vpack.c.b16 %v2903, %v2900
    %v3030 = vpack.c.b16 %v2907, %v2904
    %v3031 = vpack.c.b16 %v2908, %v2905
    %v3032 = vpack.c.b16 %v2909, %v2906
    %v3033 = vpack.c.b16 %v2913, %v2910
    %v3034 = vpack.c.b16 %v2914, %v2911
    %v3035 = vpack.c.b16 %v2915, %v2912
    %v3036 = vpack.c.b16 %v2919, %v2916
    %v3037 = vpack.c.b16 %v2920, %v2917
    %v3038 = vpack.c.b16 %v2921, %v2918
    %v3039 = vpack.c.b16 %v2925, %v2922
    %v3040 = vpack.c.b16 %v2926, %v2923
    %v3041 = vpack.c.b16 %v2927, %v2924
    %v3042 = vpack.c.b16 %v2931, %v2928
    %v3043 = vpack.c.b16 %v2932, %v2929
    %v3044 = vpack.c.b16 %v2933, %v2930
    %v3045 = vpack.c.b16 %v2937, %v2934
    %v3046 = vpack.c.b16 %v2938, %v2935
    %v3047 = vpack.c.b16 %v2939, %v2936
    %v3048 = vpack.c.b16 %v2943, %v2940
    %v3049 = vpack.c.b16 %v2944, %v2941
    %v3050 = vpack.c.b16 %v2945, %v2942
    %v3051 = vpack.c.b16 %v2949, %v2946
    %v3052 = vpack.c.b16 %v2950, %v2947
    %v3053 = vpack.c.b16 %v2951, %v2948
    %v3054 = vpack.c.b16 %v2955, %v2952
    %v3055 = vpack.c.b16 %v2956, %v2953
    %v3056 = vpack.c.b16 %v2957, %v2954
    %v3057 = vpack.c.b16 %v2961, %v2958
    %v3058 = vpack.c.b16 %v2962, %v2959
    %v3059 = vpack.c.b16 %v2963, %v2960
    %v3060 = vpack.c.b16 %v2967, %v2964
    %v3061 = vpack.c.b16 %v2968, %v2965
    %v3062 = vpack.c.b16 %v2969, %v2966
    %v3063 = vpack.c.b16 %v2973, %v2970
    %v3064 = vpack.c.b16 %v2974, %v2971
    %v3065 = vpack.c.b16 %v2975, %v2972
    %v3066 = vpack.c.b16 %v2979, %v2976
    %v3067 = vpack.c.b16 %v2980, %v2977
    %v3068 = vpack.c.b16 %v2981, %v2978
    %v3069 = vpack.c.b16 %v2985, %v2982
    %v3070 = vpack.c.b16 %v2986, %v2983
    %v3071 = vpack.c.b16 %v2987, %v2984
    %v3072 = vpack.c.b16 %v2991, %v2988
    %v3073 = vpack.c.b16 %v2992, %v2989
    %v3074 = vpack.c.b16 %v2993, %v2990
    %v3075 = vpack.c.b16 %v2997, %v2994
    %v3076 = vpack.c.b16 %v2998, %v2995
    %v3077 = vpack.c.b16 %v2999, %v2996
    %v3078 = vpack.c.b16 %v3003, %v3000
    %v3079 = vpack.c.b16 %v3004, %v3001
    %v3080 = vpack.c.b16 %v3005, %v3002
    %v3081 = vpack.c.b16 %v3009, %v3006
    %v3082 = vpack.c.b16 %v3010, %v3007
    %v3083 = vpack.c.b16 %v3011, %v3008
    %3156 = vmatprep.subr.bf16.mxu0 0
    %3157 = vmatpush1.bf16.msra.mxu0 %v2748
    %3158 = vmatprep.subr.bf16.mxu0 0
    %3159 = vmatpush1.bf16.msra.mxu0 %v2749
    %3160 = vmatprep.subr.bf16.mxu0 0
    %3161 = vmatpush1.bf16.msra.mxu0 %v2750
    %3162 = vmatprep.subr.bf16.mxu0 0
    %3163 = vmatpush1.bf16.msra.mxu0 %v2751
    %3164 = vmatprep.subr.bf16.mxu0 0
    %3165 = vmatpush1.bf16.msra.mxu0 %v2752
    %3166 = vmatprep.subr.bf16.mxu0 0
    %3167 = vmatpush1.bf16.msra.mxu0 %v2753
    %3168 = vmatprep.subr.bf16.mxu0 0
    %3169 = vmatpush1.bf16.msra.mxu0 %v2754
    %3170 = vmatprep.subr.bf16.mxu0 0
    %3171 = vmatpush1.bf16.msra.mxu0 %v2755
    %3172 = vmatprep.subr.bf16.mxu0 0
    %3173 = vmatpush1.bf16.msra.mxu0 %v2756
    %3174 = vmatprep.subr.bf16.mxu0 0
    %3175 = vmatpush1.bf16.msra.mxu0 %v2757
    %3176 = vmatprep.subr.bf16.mxu0 0
    %3177 = vmatpush1.bf16.msra.mxu0 %v2758
    %3178 = vmatprep.subr.bf16.mxu0 0
    %3179 = vmatpush1.bf16.msra.mxu0 %v2759
    %3180 = vmatprep.subr.bf16.mxu0 0
    %3181 = vmatpush1.bf16.msra.mxu0 %v2760
    %3182 = vmatprep.subr.bf16.mxu0 0
    %3183 = vmatpush1.bf16.msra.mxu0 %v2761
    %3184 = vmatprep.subr.bf16.mxu0 0
    %3185 = vmatpush1.bf16.msra.mxu0 %v2762
    %3186 = vmatprep.subr.bf16.mxu0 0
    %3187 = vmatpush1.bf16.msra.mxu0 %v2763
    %3188 = vmatprep.mubr.bf16.mxu0 %v3013
    %3189 = vmatmul.mubr.bf16.gmra.mrb[0].mxu0 %v3012
    %v3190 = vpop.f32.mrb[0].mxu0
    %v3191 = vadd.f32 0.0, %v3190
    %v3192 = vpop.f32.mrb[0].mxu0
    %v3193 = vpop.f32.mrb[0].mxu0
    %v3194 = vadd.f32 0.0, %v3193
    %v3195 = vpop.f32.mrb[0].mxu0
    %3196 = vmatprep.mubr.bf16.mxu0 %v3016
    %3197 = vmatmul.mubr.bf16.gmra.mrb[0].mxu0 %v3015
    %v3198 = vpop.f32.mrb[0].mxu0
    %v3199 = vadd.f32 0.0, %v3198
    %v3200 = vpop.f32.mrb[0].mxu0
    %v3201 = vpop.f32.mrb[0].mxu0
    %v3202 = vadd.f32 0.0, %v3201
    %v3203 = vpop.f32.mrb[0].mxu0
    %3204 = vmatprep.mubr.bf16.mxu0 %v3019
    %3205 = vmatmul.mubr.bf16.gmra.mrb[0].mxu0 %v3018
    %v3206 = vpop.f32.mrb[0].mxu0
    %v3207 = vadd.f32 0.0, %v3206
    %v3208 = vpop.f32.mrb[0].mxu0
    %v3209 = vpop.f32.mrb[0].mxu0
    %v3210 = vadd.f32 0.0, %v3209
    %v3211 = vpop.f32.mrb[0].mxu0
    %3212 = vmatprep.mubr.bf16.mxu0 %v3022
    %3213 = vmatmul.mubr.bf16.gmra.mrb[0].mxu0 %v3021
    %v3214 = vpop.f32.mrb[0].mxu0
    %v3215 = vadd.f32 0.0, %v3214
    %v3216 = vpop.f32.mrb[0].mxu0
    %v3217 = vpop.f32.mrb[0].mxu0
    %v3218 = vadd.f32 0.0, %v3217
    %v3219 = vpop.f32.mrb[0].mxu0
    %3220 = vmatprep.mubr.bf16.mxu0 %v3025
    %3221 = vmatmul.mubr.bf16.gmra.mrb[0].mxu0 %v3024
    %v3222 = vpop.f32.mrb[0].mxu0
    %v3223 = vadd.f32 0.0, %v3222
    %v3224 = vpop.f32.mrb[0].mxu0
    %v3225 = vpop.f32.mrb[0].mxu0
    %v3226 = vadd.f32 0.0, %v3225
    %v3227 = vpop.f32.mrb[0].mxu0
    %3228 = vmatprep.mubr.bf16.mxu0 %v3028
    %3229 = vmatmul.mubr.bf16.gmra.mrb[0].mxu0 %v3027
    %v3230 = vpop.f32.mrb[0].mxu0
    %v3231 = vadd.f32 0.0, %v3230
    %v3232 = vpop.f32.mrb[0].mxu0
    %v3233 = vpop.f32.mrb[0].mxu0
    %v3234 = vadd.f32 0.0, %v3233
    %v3235 = vpop.f32.mrb[0].mxu0
    %3236 = vmatprep.mubr.bf16.mxu0 %v3031
    %3237 = vmatmul.mubr.bf16.gmra.mrb[0].mxu0 %v3030
    %v3238 = vpop.f32.mrb[0].mxu0
    %v3239 = vadd.f32 0.0, %v3238
    %v3240 = vpop.f32.mrb[0].mxu0
    %v3241 = vpop.f32.mrb[0].mxu0
    %v3242 = vadd.f32 0.0, %v3241
    %v3243 = vpop.f32.mrb[0].mxu0
    %3244 = vmatprep.mubr.bf16.mxu0 %v3034
    %3245 = vmatmul.mubr.bf16.gmra.mrb[0].mxu0 %v3033
    %v3246 = vpop.f32.mrb[0].mxu0
    %v3247 = vadd.f32 0.0, %v3246
    %v3248 = vpop.f32.mrb[0].mxu0
    %v3249 = vpop.f32.mrb[0].mxu0
    %v3250 = vadd.f32 0.0, %v3249
    %v3251 = vpop.f32.mrb[0].mxu0
    %3252 = vmatprep.mubr.bf16.mxu0 %v3037
    %3253 = vmatmul.mubr.bf16.gmra.mrb[0].mxu0 %v3036
    %v3254 = vpop.f32.mrb[0].mxu0
    %v3255 = vadd.f32 0.0, %v3254
    %v3256 = vpop.f32.mrb[0].mxu0
    %v3257 = vpop.f32.mrb[0].mxu0
    %v3258 = vadd.f32 0.0, %v3257
    %v3259 = vpop.f32.mrb[0].mxu0
    %3260 = vmatprep.mubr.bf16.mxu0 %v3040
    %3261 = vmatmul.mubr.bf16.gmra.mrb[0].mxu0 %v3039
    %v3262 = vpop.f32.mrb[0].mxu0
    %v3263 = vadd.f32 0.0, %v3262
    %v3264 = vpop.f32.mrb[0].mxu0
    %v3265 = vpop.f32.mrb[0].mxu0
    %v3266 = vadd.f32 0.0, %v3265
    %v3267 = vpop.f32.mrb[0].mxu0
    %3268 = vmatprep.mubr.bf16.mxu0 %v3043
    %3269 = vmatmul.mubr.bf16.gmra.mrb[0].mxu0 %v3042
    %v3270 = vpop.f32.mrb[0].mxu0
    %v3271 = vadd.f32 0.0, %v3270
    %v3272 = vpop.f32.mrb[0].mxu0
    %v3273 = vpop.f32.mrb[0].mxu0
    %v3274 = vadd.f32 0.0, %v3273
    %v3275 = vpop.f32.mrb[0].mxu0
    %3276 = vmatprep.mubr.bf16.mxu0 %v3046
    %3277 = vmatmul.mubr.bf16.gmra.mrb[0].mxu0 %v3045
    %v3278 = vpop.f32.mrb[0].mxu0
    %v3279 = vadd.f32 0.0, %v3278
    %v3280 = vpop.f32.mrb[0].mxu0
    %v3281 = vpop.f32.mrb[0].mxu0
    %v3282 = vadd.f32 0.0, %v3281
    %v3283 = vpop.f32.mrb[0].mxu0
    %3284 = vmatprep.mubr.bf16.mxu0 %v3049
    %3285 = vmatmul.mubr.bf16.gmra.mrb[0].mxu0 %v3048
    %v3286 = vpop.f32.mrb[0].mxu0
    %v3287 = vadd.f32 0.0, %v3286
    %v3288 = vpop.f32.mrb[0].mxu0
    %v3289 = vpop.f32.mrb[0].mxu0
    %v3290 = vadd.f32 0.0, %v3289
    %v3291 = vpop.f32.mrb[0].mxu0
    %3292 = vmatprep.mubr.bf16.mxu0 %v3052
    %3293 = vmatmul.mubr.bf16.gmra.mrb[0].mxu0 %v3051
    %v3294 = vpop.f32.mrb[0].mxu0
    %v3295 = vadd.f32 0.0, %v3294
    %v3296 = vpop.f32.mrb[0].mxu0
    %v3297 = vpop.f32.mrb[0].mxu0
    %v3298 = vadd.f32 0.0, %v3297
    %v3299 = vpop.f32.mrb[0].mxu0
    %3300 = vmatprep.mubr.bf16.mxu0 %v3055
    %3301 = vmatmul.mubr.bf16.gmra.mrb[0].mxu0 %v3054
    %v3302 = vpop.f32.mrb[0].mxu0
    %v3303 = vadd.f32 0.0, %v3302
    %v3304 = vpop.f32.mrb[0].mxu0
    %v3305 = vpop.f32.mrb[0].mxu0
    %v3306 = vadd.f32 0.0, %v3305
    %v3307 = vpop.f32.mrb[0].mxu0
    %3308 = vmatprep.mubr.bf16.mxu0 %v3058
    %3309 = vmatmul.mubr.bf16.gmra.mrb[0].mxu0 %v3057
    %v3310 = vpop.f32.mrb[0].mxu0
    %v3311 = vadd.f32 0.0, %v3310
    %v3312 = vpop.f32.mrb[0].mxu0
    %v3313 = vpop.f32.mrb[0].mxu0
    %v3314 = vadd.f32 0.0, %v3313
    %v3315 = vpop.f32.mrb[0].mxu0
    %3316 = vmatprep.mubr.bf16.mxu0 %v3061
    %3317 = vmatmul.mubr.bf16.gmra.mrb[0].mxu0 %v3060
    %v3318 = vpop.f32.mrb[0].mxu0
    %v3319 = vadd.f32 0.0, %v3318
    %v3320 = vpop.f32.mrb[0].mxu0
    %v3321 = vpop.f32.mrb[0].mxu0
    %v3322 = vadd.f32 0.0, %v3321
    %v3323 = vpop.f32.mrb[0].mxu0
    %3324 = vmatprep.mubr.bf16.mxu0 %v3064
    %3325 = vmatmul.mubr.bf16.gmra.mrb[0].mxu0 %v3063
    %v3326 = vpop.f32.mrb[0].mxu0
    %v3327 = vadd.f32 0.0, %v3326
    %v3328 = vpop.f32.mrb[0].mxu0
    %v3329 = vpop.f32.mrb[0].mxu0
    %v3330 = vadd.f32 0.0, %v3329
    %v3331 = vpop.f32.mrb[0].mxu0
    %3332 = vmatprep.mubr.bf16.mxu0 %v3067
    %3333 = vmatmul.mubr.bf16.gmra.mrb[0].mxu0 %v3066
    %v3334 = vpop.f32.mrb[0].mxu0
    %v3335 = vadd.f32 0.0, %v3334
    %v3336 = vpop.f32.mrb[0].mxu0
    %v3337 = vpop.f32.mrb[0].mxu0
    %v3338 = vadd.f32 0.0, %v3337
    %v3339 = vpop.f32.mrb[0].mxu0
    %3340 = vmatprep.mubr.bf16.mxu0 %v3070
    %3341 = vmatmul.mubr.bf16.gmra.mrb[0].mxu0 %v3069
    %v3342 = vpop.f32.mrb[0].mxu0
    %v3343 = vadd.f32 0.0, %v3342
    %v3344 = vpop.f32.mrb[0].mxu0
    %v3345 = vpop.f32.mrb[0].mxu0
    %v3346 = vadd.f32 0.0, %v3345
    %v3347 = vpop.f32.mrb[0].mxu0
    %3348 = vmatprep.mubr.bf16.mxu0 %v3073
    %3349 = vmatmul.mubr.bf16.gmra.mrb[0].mxu0 %v3072
    %v3350 = vpop.f32.mrb[0].mxu0
    %v3351 = vadd.f32 0.0, %v3350
    %v3352 = vpop.f32.mrb[0].mxu0
    %v3353 = vpop.f32.mrb[0].mxu0
    %v3354 = vadd.f32 0.0, %v3353
    %v3355 = vpop.f32.mrb[0].mxu0
    %3356 = vmatprep.mubr.bf16.mxu0 %v3076
    %3357 = vmatmul.mubr.bf16.gmra.mrb[0].mxu0 %v3075
    %v3358 = vpop.f32.mrb[0].mxu0
    %v3359 = vadd.f32 0.0, %v3358
    %v3360 = vpop.f32.mrb[0].mxu0
    %v3361 = vpop.f32.mrb[0].mxu0
    %v3362 = vadd.f32 0.0, %v3361
    %v3363 = vpop.f32.mrb[0].mxu0
    %3364 = vmatprep.mubr.bf16.mxu0 %v3079
    %3365 = vmatmul.mubr.bf16.gmra.mrb[0].mxu0 %v3078
    %v3366 = vpop.f32.mrb[0].mxu0
    %v3367 = vadd.f32 0.0, %v3366
    %v3368 = vpop.f32.mrb[0].mxu0
    %v3369 = vpop.f32.mrb[0].mxu0
    %v3370 = vadd.f32 0.0, %v3369
    %v3371 = vpop.f32.mrb[0].mxu0
    %3372 = vmatprep.mubr.bf16.mxu0 %v3082
    %3373 = vmatmul.mubr.bf16.gmra.mrb[0].mxu0 %v3081
    %v3374 = vpop.f32.mrb[0].mxu0
    %v3375 = vadd.f32 0.0, %v3374
    %v3376 = vpop.f32.mrb[0].mxu0
    %v3377 = vpop.f32.mrb[0].mxu0
    %v3378 = vadd.f32 0.0, %v3377
    %v3379 = vpop.f32.mrb[0].mxu0
    %3380 = vdwg.mxu0
    %3381 = vmatprep.subr.bf16.mxu0 0
    %3382 = vmatpush1.bf16.msra.mxu0 %v2764
    %3383 = vmatprep.subr.bf16.mxu0 0
    %3384 = vmatpush1.bf16.msra.mxu0 %v2765
    %3385 = vmatprep.subr.bf16.mxu0 0
    %3386 = vmatpush1.bf16.msra.mxu0 %v2766
    %3387 = vmatprep.subr.bf16.mxu0 0
    %3388 = vmatpush1.bf16.msra.mxu0 %v2767
    %3389 = vmatprep.subr.bf16.mxu0 0
    %3390 = vmatpush1.bf16.msra.mxu0 %v2768
    %3391 = vmatprep.subr.bf16.mxu0 0
    %3392 = vmatpush1.bf16.msra.mxu0 %v2769
    %3393 = vmatprep.subr.bf16.mxu0 0
    %3394 = vmatpush1.bf16.msra.mxu0 %v2770
    %3395 = vmatprep.subr.bf16.mxu0 0
    %3396 = vmatpush1.bf16.msra.mxu0 %v2771
    %3397 = vmatprep.subr.bf16.mxu0 0
    %3398 = vmatpush1.bf16.msra.mxu0 0
    %3399 = vmatprep.subr.bf16.mxu0 0
    %3400 = vmatpush1.bf16.msra.mxu0 0
    %3401 = vmatprep.subr.bf16.mxu0 0
    %3402 = vmatpush1.bf16.msra.mxu0 0
    %3403 = vmatprep.subr.bf16.mxu0 0
    %3404 = vmatpush1.bf16.msra.mxu0 0
    %3405 = vmatprep.subr.bf16.mxu0 0
    %3406 = vmatpush1.bf16.msra.mxu0 0
    %3407 = vmatprep.subr.bf16.mxu0 0
    %3408 = vmatpush1.bf16.msra.mxu0 0
    %3409 = vmatprep.subr.bf16.mxu0 0
    %3410 = vmatpush1.bf16.msra.mxu0 0
    %3411 = vmatprep.subr.bf16.mxu0 0
    %3412 = vmatpush1.bf16.msra.mxu0 0
    %3413 = vmatprep.mubr.bf16.mxu0 0
    %3414 = vmatmul.mubr.bf16.gmra.mrb[0].mxu0 %v3014
    %v3415 = vpop.f32.mrb[0].mxu0
    %v3416 = vadd.f32 %v3191, %v3415
    %v3417 = vpop.f32.mrb[0].mxu0
    %v3418 = vpop.f32.mrb[0].mxu0
    %v3419 = vadd.f32 %v3194, %v3418
    %v3420 = vpop.f32.mrb[0].mxu0
    %3421 = vmatprep.mubr.bf16.mxu0 0
    %3422 = vmatmul.mubr.bf16.gmra.mrb[0].mxu0 %v3017
    %v3423 = vpop.f32.mrb[0].mxu0
    %v3424 = vadd.f32 %v3199, %v3423
    %v3425 = vpop.f32.mrb[0].mxu0
    %v3426 = vpop.f32.mrb[0].mxu0
    %v3427 = vadd.f32 %v3202, %v3426
    %v3428 = vpop.f32.mrb[0].mxu0
    %3429 = vmatprep.mubr.bf16.mxu0 0
    %3430 = vmatmul.mubr.bf16.gmra.mrb[0].mxu0 %v3020
    %v3431 = vpop.f32.mrb[0].mxu0
    %v3432 = vadd.f32 %v3207, %v3431
    %v3433 = vpop.f32.mrb[0].mxu0
    %v3434 = vpop.f32.mrb[0].mxu0
    %v3435 = vadd.f32 %v3210, %v3434
    %v3436 = vpop.f32.mrb[0].mxu0
    %3437 = vmatprep.mubr.bf16.mxu0 0
    %3438 = vmatmul.mubr.bf16.gmra.mrb[0].mxu0 %v3023
    %v3439 = vpop.f32.mrb[0].mxu0
    %v3440 = vadd.f32 %v3215, %v3439
    %v3441 = vpop.f32.mrb[0].mxu0
    %v3442 = vpop.f32.mrb[0].mxu0
    %v3443 = vadd.f32 %v3218, %v3442
    %v3444 = vpop.f32.mrb[0].mxu0
    %3445 = vmatprep.mubr.bf16.mxu0 0
    %3446 = vmatmul.mubr.bf16.gmra.mrb[0].mxu0 %v3026
    %v3447 = vpop.f32.mrb[0].mxu0
    %v3448 = vadd.f32 %v3223, %v3447
    %v3449 = vpop.f32.mrb[0].mxu0
    %v3450 = vpop.f32.mrb[0].mxu0
    %v3451 = vadd.f32 %v3226, %v3450
    %v3452 = vpop.f32.mrb[0].mxu0
    %3453 = vmatprep.mubr.bf16.mxu0 0
    %3454 = vmatmul.mubr.bf16.gmra.mrb[0].mxu0 %v3029
    %v3455 = vpop.f32.mrb[0].mxu0
    %v3456 = vadd.f32 %v3231, %v3455
    %v3457 = vpop.f32.mrb[0].mxu0
    %v3458 = vpop.f32.mrb[0].mxu0
    %v3459 = vadd.f32 %v3234, %v3458
    %v3460 = vpop.f32.mrb[0].mxu0
    %3461 = vmatprep.mubr.bf16.mxu0 0
    %3462 = vmatmul.mubr.bf16.gmra.mrb[0].mxu0 %v3032
    %v3463 = vpop.f32.mrb[0].mxu0
    %v3464 = vadd.f32 %v3239, %v3463
    %v3465 = vpop.f32.mrb[0].mxu0
    %v3466 = vpop.f32.mrb[0].mxu0
    %v3467 = vadd.f32 %v3242, %v3466
    %v3468 = vpop.f32.mrb[0].mxu0
    %3469 = vmatprep.mubr.bf16.mxu0 0
    %3470 = vmatmul.mubr.bf16.gmra.mrb[0].mxu0 %v3035
    %v3471 = vpop.f32.mrb[0].mxu0
    %v3472 = vadd.f32 %v3247, %v3471
    %v3473 = vpop.f32.mrb[0].mxu0
    %v3474 = vpop.f32.mrb[0].mxu0
    %v3475 = vadd.f32 %v3250, %v3474
    %v3476 = vpop.f32.mrb[0].mxu0
    %3477 = vmatprep.mubr.bf16.mxu0 0
    %3478 = vmatmul.mubr.bf16.gmra.mrb[0].mxu0 %v3038
    %v3479 = vpop.f32.mrb[0].mxu0
    %v3480 = vadd.f32 %v3255, %v3479
    %v3481 = vpop.f32.mrb[0].mxu0
    %v3482 = vpop.f32.mrb[0].mxu0
    %v3483 = vadd.f32 %v3258, %v3482
    %v3484 = vpop.f32.mrb[0].mxu0
    %3485 = vmatprep.mubr.bf16.mxu0 0
    %3486 = vmatmul.mubr.bf16.gmra.mrb[0].mxu0 %v3041
    %v3487 = vpop.f32.mrb[0].mxu0
    %v3488 = vadd.f32 %v3263, %v3487
    %v3489 = vpop.f32.mrb[0].mxu0
    %v3490 = vpop.f32.mrb[0].mxu0
    %v3491 = vadd.f32 %v3266, %v3490
    %v3492 = vpop.f32.mrb[0].mxu0
    %3493 = vmatprep.mubr.bf16.mxu0 0
    %3494 = vmatmul.mubr.bf16.gmra.mrb[0].mxu0 %v3044
    %v3495 = vpop.f32.mrb[0].mxu0
    %v3496 = vadd.f32 %v3271, %v3495
    %v3497 = vpop.f32.mrb[0].mxu0
    %v3498 = vpop.f32.mrb[0].mxu0
    %v3499 = vadd.f32 %v3274, %v3498
    %v3500 = vpop.f32.mrb[0].mxu0
    %3501 = vmatprep.mubr.bf16.mxu0 0
    %3502 = vmatmul.mubr.bf16.gmra.mrb[0].mxu0 %v3047
    %v3503 = vpop.f32.mrb[0].mxu0
    %v3504 = vadd.f32 %v3279, %v3503
    %v3505 = vpop.f32.mrb[0].mxu0
    %v3506 = vpop.f32.mrb[0].mxu0
    %v3507 = vadd.f32 %v3282, %v3506
    %v3508 = vpop.f32.mrb[0].mxu0
    %3509 = vmatprep.mubr.bf16.mxu0 0
    %3510 = vmatmul.mubr.bf16.gmra.mrb[0].mxu0 %v3050
    %v3511 = vpop.f32.mrb[0].mxu0
    %v3512 = vadd.f32 %v3287, %v3511
    %v3513 = vpop.f32.mrb[0].mxu0
    %v3514 = vpop.f32.mrb[0].mxu0
    %v3515 = vadd.f32 %v3290, %v3514
    %v3516 = vpop.f32.mrb[0].mxu0
    %3517 = vmatprep.mubr.bf16.mxu0 0
    %3518 = vmatmul.mubr.bf16.gmra.mrb[0].mxu0 %v3053
    %v3519 = vpop.f32.mrb[0].mxu0
    %v3520 = vadd.f32 %v3295, %v3519
    %v3521 = vpop.f32.mrb[0].mxu0
    %v3522 = vpop.f32.mrb[0].mxu0
    %v3523 = vadd.f32 %v3298, %v3522
    %v3524 = vpop.f32.mrb[0].mxu0
    %3525 = vmatprep.mubr.bf16.mxu0 0
    %3526 = vmatmul.mubr.bf16.gmra.mrb[0].mxu0 %v3056
    %v3527 = vpop.f32.mrb[0].mxu0
    %v3528 = vadd.f32 %v3303, %v3527
    %v3529 = vpop.f32.mrb[0].mxu0
    %v3530 = vpop.f32.mrb[0].mxu0
    %v3531 = vadd.f32 %v3306, %v3530
    %v3532 = vpop.f32.mrb[0].mxu0
    %3533 = vmatprep.mubr.bf16.mxu0 0
    %3534 = vmatmul.mubr.bf16.gmra.mrb[0].mxu0 %v3059
    %v3535 = vpop.f32.mrb[0].mxu0
    %v3536 = vadd.f32 %v3311, %v3535
    %v3537 = vpop.f32.mrb[0].mxu0
    %v3538 = vpop.f32.mrb[0].mxu0
    %v3539 = vadd.f32 %v3314, %v3538
    %v3540 = vpop.f32.mrb[0].mxu0
    %3541 = vmatprep.mubr.bf16.mxu0 0
    %3542 = vmatmul.mubr.bf16.gmra.mrb[0].mxu0 %v3062
    %v3543 = vpop.f32.mrb[0].mxu0
    %v3544 = vadd.f32 %v3319, %v3543
    %v3545 = vpop.f32.mrb[0].mxu0
    %v3546 = vpop.f32.mrb[0].mxu0
    %v3547 = vadd.f32 %v3322, %v3546
    %v3548 = vpop.f32.mrb[0].mxu0
    %3549 = vmatprep.mubr.bf16.mxu0 0
    %3550 = vmatmul.mubr.bf16.gmra.mrb[0].mxu0 %v3065
    %v3551 = vpop.f32.mrb[0].mxu0
    %v3552 = vadd.f32 %v3327, %v3551
    %v3553 = vpop.f32.mrb[0].mxu0
    %v3554 = vpop.f32.mrb[0].mxu0
    %v3555 = vadd.f32 %v3330, %v3554
    %v3556 = vpop.f32.mrb[0].mxu0
    %3557 = vmatprep.mubr.bf16.mxu0 0
    %3558 = vmatmul.mubr.bf16.gmra.mrb[0].mxu0 %v3068
    %v3559 = vpop.f32.mrb[0].mxu0
    %v3560 = vadd.f32 %v3335, %v3559
    %v3561 = vpop.f32.mrb[0].mxu0
    %v3562 = vpop.f32.mrb[0].mxu0
    %v3563 = vadd.f32 %v3338, %v3562
    %v3564 = vpop.f32.mrb[0].mxu0
    %3565 = vmatprep.mubr.bf16.mxu0 0
    %3566 = vmatmul.mubr.bf16.gmra.mrb[0].mxu0 %v3071
    %v3567 = vpop.f32.mrb[0].mxu0
    %v3568 = vadd.f32 %v3343, %v3567
    %v3569 = vpop.f32.mrb[0].mxu0
    %v3570 = vpop.f32.mrb[0].mxu0
    %v3571 = vadd.f32 %v3346, %v3570
    %v3572 = vpop.f32.mrb[0].mxu0
    %3573 = vmatprep.mubr.bf16.mxu0 0
    %3574 = vmatmul.mubr.bf16.gmra.mrb[0].mxu0 %v3074
    %v3575 = vpop.f32.mrb[0].mxu0
    %v3576 = vadd.f32 %v3351, %v3575
    %v3577 = vpop.f32.mrb[0].mxu0
    %v3578 = vpop.f32.mrb[0].mxu0
    %v3579 = vadd.f32 %v3354, %v3578
    %v3580 = vpop.f32.mrb[0].mxu0
    %3581 = vmatprep.mubr.bf16.mxu0 0
    %3582 = vmatmul.mubr.bf16.gmra.mrb[0].mxu0 %v3077
    %v3583 = vpop.f32.mrb[0].mxu0
    %v3584 = vadd.f32 %v3359, %v3583
    %v3585 = vpop.f32.mrb[0].mxu0
    %v3586 = vpop.f32.mrb[0].mxu0
    %v3587 = vadd.f32 %v3362, %v3586
    %v3588 = vpop.f32.mrb[0].mxu0
    %3589 = vmatprep.mubr.bf16.mxu0 0
    %3590 = vmatmul.mubr.bf16.gmra.mrb[0].mxu0 %v3080
    %v3591 = vpop.f32.mrb[0].mxu0
    %v3592 = vadd.f32 %v3367, %v3591
    %v3593 = vpop.f32.mrb[0].mxu0
    %v3594 = vpop.f32.mrb[0].mxu0
    %v3595 = vadd.f32 %v3370, %v3594
    %v3596 = vpop.f32.mrb[0].mxu0
    %3597 = vmatprep.mubr.bf16.mxu0 0
    %3598 = vmatmul.mubr.bf16.gmra.mrb[0].mxu0 %v3083
    %v3599 = vpop.f32.mrb[0].mxu0
    %v3600 = vadd.f32 %v3375, %v3599
    %v3601 = vpop.f32.mrb[0].mxu0
    %v3602 = vpop.f32.mrb[0].mxu0
    %v3603 = vadd.f32 %v3378, %v3602
    %v3604 = vpop.f32.mrb[0].mxu0
    %3605 = vdwg.mxu0
    %3606 = vst [vmem:[#allocation3] sm:$0xff] %v3416
    %3607 = vst [vmem:[#allocation3 + $0x8] sm:$0xff] %v3419
    %3608 = vst [vmem:[#allocation3 + $0x10] sm:$0xff] %v3424
    %3609 = vst [vmem:[#allocation3 + $0x18] sm:$0xff] %v3427
    %3610 = vst [vmem:[#allocation3 + $0x20] sm:$0xff] %v3432
    %3611 = vst [vmem:[#allocation3 + $0x28] sm:$0xff] %v3435
    %3612 = vst [vmem:[#allocation3 + $0x30] sm:$0xff] %v3440
    %3613 = vst [vmem:[#allocation3 + $0x38] sm:$0xff] %v3443
    %3614 = vst [vmem:[#allocation3 + $0x40] sm:$0xff] %v3448
    %3615 = vst [vmem:[#allocation3 + $0x48] sm:$0xff] %v3451
    %3616 = vst [vmem:[#allocation3 + $0x50] sm:$0xff] %v3456
    %3617 = vst [vmem:[#allocation3 + $0x58] sm:$0xff] %v3459
    %3618 = vst [vmem:[#allocation3 + $0x60] sm:$0xff] %v3464
    %3619 = vst [vmem:[#allocation3 + $0x68] sm:$0xff] %v3467
    %3620 = vst [vmem:[#allocation3 + $0x70] sm:$0xff] %v3472
    %3621 = vst [vmem:[#allocation3 + $0x78] sm:$0xff] %v3475
    %3622 = vst [vmem:[#allocation3 + $0x80] sm:$0xff] %v3480
    %3623 = vst [vmem:[#allocation3 + $0x88] sm:$0xff] %v3483
    %3624 = vst [vmem:[#allocation3 + $0x90] sm:$0xff] %v3488
    %3625 = vst [vmem:[#allocation3 + $0x98] sm:$0xff] %v3491
    %3626 = vst [vmem:[#allocation3 + $0xa0] sm:$0xff] %v3496
    %3627 = vst [vmem:[#allocation3 + $0xa8] sm:$0xff] %v3499
    %3628 = vst [vmem:[#allocation3 + $0xb0] sm:$0xff] %v3504
    %3629 = vst [vmem:[#allocation3 + $0xb8] sm:$0xff] %v3507
    %3630 = vst [vmem:[#allocation3 + $0xc0] sm:$0xff] %v3512
    %3631 = vst [vmem:[#allocation3 + $0xc8] sm:$0xff] %v3515
    %3632 = vst [vmem:[#allocation3 + $0xd0] sm:$0xff] %v3520
    %3633 = vst [vmem:[#allocation3 + $0xd8] sm:$0xff] %v3523
    %3634 = vst [vmem:[#allocation3 + $0xe0] sm:$0xff] %v3528
    %3635 = vst [vmem:[#allocation3 + $0xe8] sm:$0xff] %v3531
    %3636 = vst [vmem:[#allocation3 + $0xf0] sm:$0xff] %v3536
    %3637 = vst [vmem:[#allocation3 + $0xf8] sm:$0xff] %v3539
    %3638 = vst [vmem:[#allocation3 + $0x100] sm:$0xff] %v3544
    %3639 = vst [vmem:[#allocation3 + $0x108] sm:$0xff] %v3547
    %3640 = vst [vmem:[#allocation3 + $0x110] sm:$0xff] %v3552
    %3641 = vst [vmem:[#allocation3 + $0x118] sm:$0xff] %v3555
    %3642 = vst [vmem:[#allocation3 + $0x120] sm:$0xff] %v3560
    %3643 = vst [vmem:[#allocation3 + $0x128] sm:$0xff] %v3563
    %3644 = vst [vmem:[#allocation3 + $0x130] sm:$0xff] %v3568
    %3645 = vst [vmem:[#allocation3 + $0x138] sm:$0xff] %v3571
    %3646 = vst [vmem:[#allocation3 + $0x140] sm:$0xff] %v3576
    %3647 = vst [vmem:[#allocation3 + $0x148] sm:$0xff] %v3579
    %3648 = vst [vmem:[#allocation3 + $0x150] sm:$0xff] %v3584
    %3649 = vst [vmem:[#allocation3 + $0x158] sm:$0xff] %v3587
    %3650 = vst [vmem:[#allocation3 + $0x160] sm:$0xff] %v3592
    %3651 = vst [vmem:[#allocation3 + $0x168] sm:$0xff] %v3595
    %3652 = vst [vmem:[#allocation3 + $0x170] sm:$0xff] %v3600
    %3653 = vst [vmem:[#allocation3 + $0x178] sm:$0xff] %v3603
    %v3654 = vld [vmem:[#allocation3] sm:$0xff]
    %v3655 = vld [vmem:[#allocation3 + $0x8] sm:$0xff]
    %v3656 = vld [vmem:[#allocation3 + $0x10] sm:$0xff]
    %v3657 = vld [vmem:[#allocation3 + $0x18] sm:$0xff]
    %v3658 = vld [vmem:[#allocation3 + $0x20] sm:$0xff]
    %v3659 = vld [vmem:[#allocation3 + $0x28] sm:$0xff]
    %v3660 = vld [vmem:[#allocation3 + $0x30] sm:$0xff]
    %v3661 = vld [vmem:[#allocation3 + $0x38] sm:$0xff]
    %v3662 = vld [vmem:[#allocation3 + $0x40] sm:$0xff]
    %v3663 = vld [vmem:[#allocation3 + $0x48] sm:$0xff]
    %v3664 = vld [vmem:[#allocation3 + $0x50] sm:$0xff]
    %v3665 = vld [vmem:[#allocation3 + $0x58] sm:$0xff]
    %v3666 = vld [vmem:[#allocation3 + $0x60] sm:$0xff]
    %v3667 = vld [vmem:[#allocation3 + $0x68] sm:$0xff]
    %v3668 = vld [vmem:[#allocation3 + $0x70] sm:$0xff]
    %v3669 = vld [vmem:[#allocation3 + $0x78] sm:$0xff]
    %v3670 = vld [vmem:[#allocation3 + $0x80] sm:$0xff]
    %v3671 = vld [vmem:[#allocation3 + $0x88] sm:$0xff]
    %v3672 = vld [vmem:[#allocation3 + $0x90] sm:$0xff]
    %v3673 = vld [vmem:[#allocation3 + $0x98] sm:$0xff]
    %v3674 = vld [vmem:[#allocation3 + $0xa0] sm:$0xff]
    %v3675 = vld [vmem:[#allocation3 + $0xa8] sm:$0xff]
    %v3676 = vld [vmem:[#allocation3 + $0xb0] sm:$0xff]
    %v3677 = vld [vmem:[#allocation3 + $0xb8] sm:$0xff]
    %v3678 = vld [vmem:[#allocation3 + $0xc0] sm:$0xff]
    %v3679 = vld [vmem:[#allocation3 + $0xc8] sm:$0xff]
    %v3680 = vld [vmem:[#allocation3 + $0xd0] sm:$0xff]
    %v3681 = vld [vmem:[#allocation3 + $0xd8] sm:$0xff]
    %v3682 = vld [vmem:[#allocation3 + $0xe0] sm:$0xff]
    %v3683 = vld [vmem:[#allocation3 + $0xe8] sm:$0xff]
    %v3684 = vld [vmem:[#allocation3 + $0xf0] sm:$0xff]
    %v3685 = vld [vmem:[#allocation3 + $0xf8] sm:$0xff]
    %v3686 = vld [vmem:[#allocation3 + $0x100] sm:$0xff]
    %v3687 = vld [vmem:[#allocation3 + $0x108] sm:$0xff]
    %v3688 = vld [vmem:[#allocation3 + $0x110] sm:$0xff]
    %v3689 = vld [vmem:[#allocation3 + $0x118] sm:$0xff]
    %v3690 = vld [vmem:[#allocation3 + $0x120] sm:$0xff]
    %v3691 = vld [vmem:[#allocation3 + $0x128] sm:$0xff]
    %v3692 = vld [vmem:[#allocation3 + $0x130] sm:$0xff]
    %v3693 = vld [vmem:[#allocation3 + $0x138] sm:$0xff]
    %v3694 = vld [vmem:[#allocation3 + $0x140] sm:$0xff]
    %v3695 = vld [vmem:[#allocation3 + $0x148] sm:$0xff]
    %v3696 = vld [vmem:[#allocation3 + $0x150] sm:$0xff]
    %v3697 = vld [vmem:[#allocation3 + $0x158] sm:$0xff]
    %v3698 = vld [vmem:[#allocation3 + $0x160] sm:$0xff]
    %v3699 = vld [vmem:[#allocation3 + $0x168] sm:$0xff]
    %v3700 = vld [vmem:[#allocation3 + $0x170] sm:$0xff]
    %v3701 = vld [vmem:[#allocation3 + $0x178] sm:$0xff]
    %v3702 = vld [vmem:[#allocation10] sm:$0xff]
    %v3703 = vld [vmem:[#allocation10 + $0x8] sm:$0xff]
    %v3704 = vld [vmem:[#allocation10 + $0x10] sm:$0xff]
    %v3705 = vld [vmem:[#allocation10 + $0x18] sm:$0xff]
    %v3706 = vld [vmem:[#allocation10 + $0x20] sm:$0xff]
    %v3707 = vld [vmem:[#allocation10 + $0x28] sm:$0xff]
    %v3708 = vld [vmem:[#allocation10 + $0x30] sm:$0xff]
    %v3709 = vld [vmem:[#allocation10 + $0x38] sm:$0xff]
    %v3710 = vld [vmem:[#allocation10 + $0x40] sm:$0xff]
    %v3711 = vld [vmem:[#allocation10 + $0x48] sm:$0xff]
    %v3712 = vld [vmem:[#allocation10 + $0x50] sm:$0xff]
    %v3713 = vld [vmem:[#allocation10 + $0x58] sm:$0xff]
    %v3714 = vld [vmem:[#allocation10 + $0x60] sm:$0xff]
    %v3715 = vld [vmem:[#allocation10 + $0x68] sm:$0xff]
    %v3716 = vld [vmem:[#allocation10 + $0x70] sm:$0xff]
    %v3717 = vld [vmem:[#allocation10 + $0x78] sm:$0xff]
    %v3718 = vld [vmem:[%s5] sm:$0x1]
    %v3720 = vlaneseq
    %v3721 = vshrl.u32 %v3720, 7
    %v3722 = vsub.s32 0, %v3721
    %v3723 = vrot.slane %v3718, %v3722
    %3725 = vmatprep.subr.mxu0 0.0
    %3726 = vmatpush1.msra.mxu0 %v3702
    %3727 = vmatprep.subr.mxu0 0.0
    %3728 = vmatpush1.msra.mxu0 %v3703
    %3729 = vmatprep.subr.mxu0 0.0
    %3730 = vmatpush1.msra.mxu0 %v3704
    %3731 = vmatprep.subr.mxu0 0.0
    %3732 = vmatpush1.msra.mxu0 %v3705
    %3733 = vmatprep.subr.mxu0 0.0
    %3734 = vmatpush1.msra.mxu0 %v3706
    %3735 = vmatprep.subr.mxu0 0.0
    %3736 = vmatpush1.msra.mxu0 %v3707
    %3737 = vmatprep.subr.mxu0 0.0
    %3738 = vmatpush1.msra.mxu0 %v3708
    %3739 = vmatprep.subr.mxu0 0.0
    %3740 = vmatpush1.msra.mxu0 %v3709
    %3741 = vmatprep.subr.mxu0 0.0
    %3742 = vmatpush1.msra.mxu0 %v3710
    %3743 = vmatprep.subr.mxu0 0.0
    %3744 = vmatpush1.msra.mxu0 %v3711
    %3745 = vmatprep.subr.mxu0 0.0
    %3746 = vmatpush1.msra.mxu0 %v3712
    %3747 = vmatprep.subr.mxu0 0.0
    %3748 = vmatpush1.msra.mxu0 %v3713
    %3749 = vmatprep.subr.mxu0 0.0
    %3750 = vmatpush1.msra.mxu0 %v3714
    %3751 = vmatprep.subr.mxu0 0.0
    %3752 = vmatpush1.msra.mxu0 %v3715
    %3753 = vmatprep.subr.mxu0 0.0
    %3754 = vmatpush1.msra.mxu0 %v3716
    %3755 = vmatprep.subr.mxu0 0.0
    %3756 = vmatpush1.msra.mxu0 %v3717
    %3757 = vmatprep.subr.mxu0 0.0
    %3758 = vmatpush1.msra.mxu0 0.0
    %3759 = vmatprep.subr.mxu0 0.0
    %3760 = vmatpush1.msra.mxu0 0.0
    %3761 = vmatprep.subr.mxu0 0.0
    %3762 = vmatpush1.msra.mxu0 0.0
    %3763 = vmatprep.subr.mxu0 0.0
    %3764 = vmatpush1.msra.mxu0 0.0
    %3765 = vmatprep.subr.mxu0 0.0
    %3766 = vmatpush1.msra.mxu0 0.0
    %3767 = vmatprep.subr.mxu0 0.0
    %3768 = vmatpush1.msra.mxu0 0.0
    %3769 = vmatprep.subr.mxu0 0.0
    %3770 = vmatpush1.msra.mxu0 0.0
    %3771 = vmatprep.subr.mxu0 0.0
    %3772 = vmatpush1.msra.mxu0 0.0
    %3773 = vmatprep.subr.mxu0 0.0
    %3774 = vmatpush1.msra.mxu0 0.0
    %3775 = vmatprep.subr.mxu0 0.0
    %3776 = vmatpush1.msra.mxu0 0.0
    %3777 = vmatprep.subr.mxu0 0.0
    %3778 = vmatpush1.msra.mxu0 0.0
    %3779 = vmatprep.subr.mxu0 0.0
    %3780 = vmatpush1.msra.mxu0 0.0
    %3781 = vmatprep.subr.mxu0 0.0
    %3782 = vmatpush1.msra.mxu0 0.0
    %3783 = vmatprep.subr.mxu0 0.0
    %3784 = vmatpush1.msra.mxu0 0.0
    %3785 = vmatprep.subr.mxu0 0.0
    %3786 = vmatpush1.msra.mxu0 0.0
    %3787 = vmatprep.subr.mxu0 0.0
    %3788 = vmatpush1.msra.mxu0 0.0
    %3789 = vmatprep.mubr.f32.mxu0 0.0
    %3790 = vmatmul.mubr.f32.gmra.mrb[0].mxu0 %v3654
    %v3791 = vpop.f32.mrb[0].mxu0
    %v3792 = vadd.f32 %v3723, %v3791
    %v3793 = vpop.f32.mrb[0].mxu0
    %3794 = vmatprep.mubr.f32.mxu0 0.0
    %3795 = vmatmul.mubr.f32.gmra.mrb[0].mxu0 %v3655
    %v3796 = vpop.f32.mrb[0].mxu0
    %v3797 = vadd.f32 %v3723, %v3796
    %v3798 = vpop.f32.mrb[0].mxu0
    %3799 = vmatprep.mubr.f32.mxu0 0.0
    %3800 = vmatmul.mubr.f32.gmra.mrb[0].mxu0 %v3656
    %v3801 = vpop.f32.mrb[0].mxu0
    %v3802 = vadd.f32 %v3723, %v3801
    %v3803 = vpop.f32.mrb[0].mxu0
    %3804 = vmatprep.mubr.f32.mxu0 0.0
    %3805 = vmatmul.mubr.f32.gmra.mrb[0].mxu0 %v3657
    %v3806 = vpop.f32.mrb[0].mxu0
    %v3807 = vadd.f32 %v3723, %v3806
    %v3808 = vpop.f32.mrb[0].mxu0
    %3809 = vmatprep.mubr.f32.mxu0 0.0
    %3810 = vmatmul.mubr.f32.gmra.mrb[0].mxu0 %v3658
    %v3811 = vpop.f32.mrb[0].mxu0
    %v3812 = vadd.f32 %v3723, %v3811
    %v3813 = vpop.f32.mrb[0].mxu0
    %3814 = vmatprep.mubr.f32.mxu0 0.0
    %3815 = vmatmul.mubr.f32.gmra.mrb[0].mxu0 %v3659
    %v3816 = vpop.f32.mrb[0].mxu0
    %v3817 = vadd.f32 %v3723, %v3816
    %v3818 = vpop.f32.mrb[0].mxu0
    %3819 = vmatprep.mubr.f32.mxu0 0.0
    %3820 = vmatmul.mubr.f32.gmra.mrb[0].mxu0 %v3660
    %v3821 = vpop.f32.mrb[0].mxu0
    %v3822 = vadd.f32 %v3723, %v3821
    %v3823 = vpop.f32.mrb[0].mxu0
    %3824 = vmatprep.mubr.f32.mxu0 0.0
    %3825 = vmatmul.mubr.f32.gmra.mrb[0].mxu0 %v3661
    %v3826 = vpop.f32.mrb[0].mxu0
    %v3827 = vadd.f32 %v3723, %v3826
    %v3828 = vpop.f32.mrb[0].mxu0
    %3829 = vmatprep.mubr.f32.mxu0 0.0
    %3830 = vmatmul.mubr.f32.gmra.mrb[0].mxu0 %v3662
    %v3831 = vpop.f32.mrb[0].mxu0
    %v3832 = vadd.f32 %v3723, %v3831
    %v3833 = vpop.f32.mrb[0].mxu0
    %3834 = vmatprep.mubr.f32.mxu0 0.0
    %3835 = vmatmul.mubr.f32.gmra.mrb[0].mxu0 %v3663
    %v3836 = vpop.f32.mrb[0].mxu0
    %v3837 = vadd.f32 %v3723, %v3836
    %v3838 = vpop.f32.mrb[0].mxu0
    %3839 = vmatprep.mubr.f32.mxu0 0.0
    %3840 = vmatmul.mubr.f32.gmra.mrb[0].mxu0 %v3664
    %v3841 = vpop.f32.mrb[0].mxu0
    %v3842 = vadd.f32 %v3723, %v3841
    %v3843 = vpop.f32.mrb[0].mxu0
    %3844 = vmatprep.mubr.f32.mxu0 0.0
    %3845 = vmatmul.mubr.f32.gmra.mrb[0].mxu0 %v3665
    %v3846 = vpop.f32.mrb[0].mxu0
    %v3847 = vadd.f32 %v3723, %v3846
    %v3848 = vpop.f32.mrb[0].mxu0
    %3849 = vmatprep.mubr.f32.mxu0 0.0
    %3850 = vmatmul.mubr.f32.gmra.mrb[0].mxu0 %v3666
    %v3851 = vpop.f32.mrb[0].mxu0
    %v3852 = vadd.f32 %v3723, %v3851
    %v3853 = vpop.f32.mrb[0].mxu0
    %3854 = vmatprep.mubr.f32.mxu0 0.0
    %3855 = vmatmul.mubr.f32.gmra.mrb[0].mxu0 %v3667
    %v3856 = vpop.f32.mrb[0].mxu0
    %v3857 = vadd.f32 %v3723, %v3856
    %v3858 = vpop.f32.mrb[0].mxu0
    %3859 = vmatprep.mubr.f32.mxu0 0.0
    %3860 = vmatmul.mubr.f32.gmra.mrb[0].mxu0 %v3668
    %v3861 = vpop.f32.mrb[0].mxu0
    %v3862 = vadd.f32 %v3723, %v3861
    %v3863 = vpop.f32.mrb[0].mxu0
    %3864 = vmatprep.mubr.f32.mxu0 0.0
    %3865 = vmatmul.mubr.f32.gmra.mrb[0].mxu0 %v3669
    %v3866 = vpop.f32.mrb[0].mxu0
    %v3867 = vadd.f32 %v3723, %v3866
    %v3868 = vpop.f32.mrb[0].mxu0
    %3869 = vmatprep.mubr.f32.mxu0 0.0
    %3870 = vmatmul.mubr.f32.gmra.mrb[0].mxu0 %v3670
    %v3871 = vpop.f32.mrb[0].mxu0
    %v3872 = vadd.f32 %v3723, %v3871
    %v3873 = vpop.f32.mrb[0].mxu0
    %3874 = vmatprep.mubr.f32.mxu0 0.0
    %3875 = vmatmul.mubr.f32.gmra.mrb[0].mxu0 %v3671
    %v3876 = vpop.f32.mrb[0].mxu0
    %v3877 = vadd.f32 %v3723, %v3876
    %v3878 = vpop.f32.mrb[0].mxu0
    %3879 = vmatprep.mubr.f32.mxu0 0.0
    %3880 = vmatmul.mubr.f32.gmra.mrb[0].mxu0 %v3672
    %v3881 = vpop.f32.mrb[0].mxu0
    %v3882 = vadd.f32 %v3723, %v3881
    %v3883 = vpop.f32.mrb[0].mxu0
    %3884 = vmatprep.mubr.f32.mxu0 0.0
    %3885 = vmatmul.mubr.f32.gmra.mrb[0].mxu0 %v3673
    %v3886 = vpop.f32.mrb[0].mxu0
    %v3887 = vadd.f32 %v3723, %v3886
    %v3888 = vpop.f32.mrb[0].mxu0
    %3889 = vmatprep.mubr.f32.mxu0 0.0
    %3890 = vmatmul.mubr.f32.gmra.mrb[0].mxu0 %v3674
    %v3891 = vpop.f32.mrb[0].mxu0
    %v3892 = vadd.f32 %v3723, %v3891
    %v3893 = vpop.f32.mrb[0].mxu0
    %3894 = vmatprep.mubr.f32.mxu0 0.0
    %3895 = vmatmul.mubr.f32.gmra.mrb[0].mxu0 %v3675
    %v3896 = vpop.f32.mrb[0].mxu0
    %v3897 = vadd.f32 %v3723, %v3896
    %v3898 = vpop.f32.mrb[0].mxu0
    %3899 = vmatprep.mubr.f32.mxu0 0.0
    %3900 = vmatmul.mubr.f32.gmra.mrb[0].mxu0 %v3676
    %v3901 = vpop.f32.mrb[0].mxu0
    %v3902 = vadd.f32 %v3723, %v3901
    %v3903 = vpop.f32.mrb[0].mxu0
    %3904 = vmatprep.mubr.f32.mxu0 0.0
    %3905 = vmatmul.mubr.f32.gmra.mrb[0].mxu0 %v3677
    %v3906 = vpop.f32.mrb[0].mxu0
    %v3907 = vadd.f32 %v3723, %v3906
    %v3908 = vpop.f32.mrb[0].mxu0
    %3909 = vmatprep.mubr.f32.mxu0 0.0
    %3910 = vmatmul.mubr.f32.gmra.mrb[0].mxu0 %v3678
    %v3911 = vpop.f32.mrb[0].mxu0
    %v3912 = vadd.f32 %v3723, %v3911
    %v3913 = vpop.f32.mrb[0].mxu0
    %3914 = vmatprep.mubr.f32.mxu0 0.0
    %3915 = vmatmul.mubr.f32.gmra.mrb[0].mxu0 %v3679
    %v3916 = vpop.f32.mrb[0].mxu0
    %v3917 = vadd.f32 %v3723, %v3916
    %v3918 = vpop.f32.mrb[0].mxu0
    %3919 = vmatprep.mubr.f32.mxu0 0.0
    %3920 = vmatmul.mubr.f32.gmra.mrb[0].mxu0 %v3680
    %v3921 = vpop.f32.mrb[0].mxu0
    %v3922 = vadd.f32 %v3723, %v3921
    %v3923 = vpop.f32.mrb[0].mxu0
    %3924 = vmatprep.mubr.f32.mxu0 0.0
    %3925 = vmatmul.mubr.f32.gmra.mrb[0].mxu0 %v3681
    %v3926 = vpop.f32.mrb[0].mxu0
    %v3927 = vadd.f32 %v3723, %v3926
    %v3928 = vpop.f32.mrb[0].mxu0
    %3929 = vmatprep.mubr.f32.mxu0 0.0
    %3930 = vmatmul.mubr.f32.gmra.mrb[0].mxu0 %v3682
    %v3931 = vpop.f32.mrb[0].mxu0
    %v3932 = vadd.f32 %v3723, %v3931
    %v3933 = vpop.f32.mrb[0].mxu0
    %3934 = vmatprep.mubr.f32.mxu0 0.0
    %3935 = vmatmul.mubr.f32.gmra.mrb[0].mxu0 %v3683
    %v3936 = vpop.f32.mrb[0].mxu0
    %v3937 = vadd.f32 %v3723, %v3936
    %v3938 = vpop.f32.mrb[0].mxu0
    %3939 = vmatprep.mubr.f32.mxu0 0.0
    %3940 = vmatmul.mubr.f32.gmra.mrb[0].mxu0 %v3684
    %v3941 = vpop.f32.mrb[0].mxu0
    %v3942 = vadd.f32 %v3723, %v3941
    %v3943 = vpop.f32.mrb[0].mxu0
    %3944 = vmatprep.mubr.f32.mxu0 0.0
    %3945 = vmatmul.mubr.f32.gmra.mrb[0].mxu0 %v3685
    %v3946 = vpop.f32.mrb[0].mxu0
    %v3947 = vadd.f32 %v3723, %v3946
    %v3948 = vpop.f32.mrb[0].mxu0
    %3949 = vmatprep.mubr.f32.mxu0 0.0
    %3950 = vmatmul.mubr.f32.gmra.mrb[0].mxu0 %v3686
    %v3951 = vpop.f32.mrb[0].mxu0
    %v3952 = vadd.f32 %v3723, %v3951
    %v3953 = vpop.f32.mrb[0].mxu0
    %3954 = vmatprep.mubr.f32.mxu0 0.0
    %3955 = vmatmul.mubr.f32.gmra.mrb[0].mxu0 %v3687
    %v3956 = vpop.f32.mrb[0].mxu0
    %v3957 = vadd.f32 %v3723, %v3956
    %v3958 = vpop.f32.mrb[0].mxu0
    %3959 = vmatprep.mubr.f32.mxu0 0.0
    %3960 = vmatmul.mubr.f32.gmra.mrb[0].mxu0 %v3688
    %v3961 = vpop.f32.mrb[0].mxu0
    %v3962 = vadd.f32 %v3723, %v3961
    %v3963 = vpop.f32.mrb[0].mxu0
    %3964 = vmatprep.mubr.f32.mxu0 0.0
    %3965 = vmatmul.mubr.f32.gmra.mrb[0].mxu0 %v3689
    %v3966 = vpop.f32.mrb[0].mxu0
    %v3967 = vadd.f32 %v3723, %v3966
    %v3968 = vpop.f32.mrb[0].mxu0
    %3969 = vmatprep.mubr.f32.mxu0 0.0
    %3970 = vmatmul.mubr.f32.gmra.mrb[0].mxu0 %v3690
    %v3971 = vpop.f32.mrb[0].mxu0
    %v3972 = vadd.f32 %v3723, %v3971
    %v3973 = vpop.f32.mrb[0].mxu0
    %3974 = vmatprep.mubr.f32.mxu0 0.0
    %3975 = vmatmul.mubr.f32.gmra.mrb[0].mxu0 %v3691
    %v3976 = vpop.f32.mrb[0].mxu0
    %v3977 = vadd.f32 %v3723, %v3976
    %v3978 = vpop.f32.mrb[0].mxu0
    %3979 = vmatprep.mubr.f32.mxu0 0.0
    %3980 = vmatmul.mubr.f32.gmra.mrb[0].mxu0 %v3692
    %v3981 = vpop.f32.mrb[0].mxu0
    %v3982 = vadd.f32 %v3723, %v3981
    %v3983 = vpop.f32.mrb[0].mxu0
    %3984 = vmatprep.mubr.f32.mxu0 0.0
    %3985 = vmatmul.mubr.f32.gmra.mrb[0].mxu0 %v3693
    %v3986 = vpop.f32.mrb[0].mxu0
    %v3987 = vadd.f32 %v3723, %v3986
    %v3988 = vpop.f32.mrb[0].mxu0
    %3989 = vmatprep.mubr.f32.mxu0 0.0
    %3990 = vmatmul.mubr.f32.gmra.mrb[0].mxu0 %v3694
    %v3991 = vpop.f32.mrb[0].mxu0
    %v3992 = vadd.f32 %v3723, %v3991
    %v3993 = vpop.f32.mrb[0].mxu0
    %3994 = vmatprep.mubr.f32.mxu0 0.0
    %3995 = vmatmul.mubr.f32.gmra.mrb[0].mxu0 %v3695
    %v3996 = vpop.f32.mrb[0].mxu0
    %v3997 = vadd.f32 %v3723, %v3996
    %v3998 = vpop.f32.mrb[0].mxu0
    %3999 = vmatprep.mubr.f32.mxu0 0.0
    %4000 = vmatmul.mubr.f32.gmra.mrb[0].mxu0 %v3696
    %v4001 = vpop.f32.mrb[0].mxu0
    %v4002 = vadd.f32 %v3723, %v4001
    %v4003 = vpop.f32.mrb[0].mxu0
    %4004 = vmatprep.mubr.f32.mxu0 0.0
    %4005 = vmatmul.mubr.f32.gmra.mrb[0].mxu0 %v3697
    %v4006 = vpop.f32.mrb[0].mxu0
    %v4007 = vadd.f32 %v3723, %v4006
    %v4008 = vpop.f32.mrb[0].mxu0
    %4009 = vmatprep.mubr.f32.mxu0 0.0
    %4010 = vmatmul.mubr.f32.gmra.mrb[0].mxu0 %v3698
    %v4011 = vpop.f32.mrb[0].mxu0
    %v4012 = vadd.f32 %v3723, %v4011
    %v4013 = vpop.f32.mrb[0].mxu0
    %4014 = vmatprep.mubr.f32.mxu0 0.0
    %4015 = vmatmul.mubr.f32.gmra.mrb[0].mxu0 %v3699
    %v4016 = vpop.f32.mrb[0].mxu0
    %v4017 = vadd.f32 %v3723, %v4016
    %v4018 = vpop.f32.mrb[0].mxu0
    %4019 = vmatprep.mubr.f32.mxu0 0.0
    %4020 = vmatmul.mubr.f32.gmra.mrb[0].mxu0 %v3700
    %v4021 = vpop.f32.mrb[0].mxu0
    %v4022 = vadd.f32 %v3723, %v4021
    %v4023 = vpop.f32.mrb[0].mxu0
    %4024 = vmatprep.mubr.f32.mxu0 0.0
    %4025 = vmatmul.mubr.f32.gmra.mrb[0].mxu0 %v3701
    %v4026 = vpop.f32.mrb[0].mxu0
    %v4027 = vadd.f32 %v3723, %v4026
    %v4028 = vpop.f32.mrb[0].mxu0
    %4029 = vdwg.mxu0
    %4030 = vst [vmem:[#allocation12] sm:$0xff] %v3792
    %4031 = vst [vmem:[#allocation12 + $0x8] sm:$0xff] %v3797
    %4032 = vst [vmem:[#allocation12 + $0x10] sm:$0xff] %v3802
    %4033 = vst [vmem:[#allocation12 + $0x18] sm:$0xff] %v3807
    %4034 = vst [vmem:[#allocation12 + $0x20] sm:$0xff] %v3812
    %4035 = vst [vmem:[#allocation12 + $0x28] sm:$0xff] %v3817
    %4036 = vst [vmem:[#allocation12 + $0x30] sm:$0xff] %v3822
    %4037 = vst [vmem:[#allocation12 + $0x38] sm:$0xff] %v3827
    %4038 = vst [vmem:[#allocation12 + $0x40] sm:$0xff] %v3832
    %4039 = vst [vmem:[#allocation12 + $0x48] sm:$0xff] %v3837
    %4040 = vst [vmem:[#allocation12 + $0x50] sm:$0xff] %v3842
    %4041 = vst [vmem:[#allocation12 + $0x58] sm:$0xff] %v3847
    %4042 = vst [vmem:[#allocation12 + $0x60] sm:$0xff] %v3852
    %4043 = vst [vmem:[#allocation12 + $0x68] sm:$0xff] %v3857
    %4044 = vst [vmem:[#allocation12 + $0x70] sm:$0xff] %v3862
    %4045 = vst [vmem:[#allocation12 + $0x78] sm:$0xff] %v3867
    %4046 = vst [vmem:[#allocation12 + $0x80] sm:$0xff] %v3872
    %4047 = vst [vmem:[#allocation12 + $0x88] sm:$0xff] %v3877
    %4048 = vst [vmem:[#allocation12 + $0x90] sm:$0xff] %v3882
    %4049 = vst [vmem:[#allocation12 + $0x98] sm:$0xff] %v3887
    %4050 = vst [vmem:[#allocation12 + $0xa0] sm:$0xff] %v3892
    %4051 = vst [vmem:[#allocation12 + $0xa8] sm:$0xff] %v3897
    %4052 = vst [vmem:[#allocation12 + $0xb0] sm:$0xff] %v3902
    %4053 = vst [vmem:[#allocation12 + $0xb8] sm:$0xff] %v3907
    %4054 = vst [vmem:[#allocation12 + $0xc0] sm:$0xff] %v3912
    %4055 = vst [vmem:[#allocation12 + $0xc8] sm:$0xff] %v3917
    %4056 = vst [vmem:[#allocation12 + $0xd0] sm:$0xff] %v3922
    %4057 = vst [vmem:[#allocation12 + $0xd8] sm:$0xff] %v3927
    %4058 = vst [vmem:[#allocation12 + $0xe0] sm:$0xff] %v3932
    %4059 = vst [vmem:[#allocation12 + $0xe8] sm:$0xff] %v3937
    %4060 = vst [vmem:[#allocation12 + $0xf0] sm:$0xff] %v3942
    %4061 = vst [vmem:[#allocation12 + $0xf8] sm:$0xff] %v3947
    %4062 = vst [vmem:[#allocation12 + $0x100] sm:$0xff] %v3952
    %4063 = vst [vmem:[#allocation12 + $0x108] sm:$0xff] %v3957
    %4064 = vst [vmem:[#allocation12 + $0x110] sm:$0xff] %v3962
    %4065 = vst [vmem:[#allocation12 + $0x118] sm:$0xff] %v3967
    %4066 = vst [vmem:[#allocation12 + $0x120] sm:$0xff] %v3972
    %4067 = vst [vmem:[#allocation12 + $0x128] sm:$0xff] %v3977
    %4068 = vst [vmem:[#allocation12 + $0x130] sm:$0xff] %v3982
    %4069 = vst [vmem:[#allocation12 + $0x138] sm:$0xff] %v3987
    %4070 = vst [vmem:[#allocation12 + $0x140] sm:$0xff] %v3992
    %4071 = vst [vmem:[#allocation12 + $0x148] sm:$0xff] %v3997
    %4072 = vst [vmem:[#allocation12 + $0x150] sm:$0xff] %v4002
    %4073 = vst [vmem:[#allocation12 + $0x158] sm:$0xff] %v4007
    %4074 = vst [vmem:[#allocation12 + $0x160] sm:$0xff] %v4012
    %4075 = vst [vmem:[#allocation12 + $0x168] sm:$0xff] %v4017
    %4076 = vst [vmem:[#allocation12 + $0x170] sm:$0xff] %v4022
    %4077 = vst [vmem:[#allocation12 + $0x178] sm:$0xff] %v4027
    // Predicated region
    $region42: #{tpu_custom_call.1} parent=1 // pred_check
      _
    $region43: #{tpu_custom_call.1} parent=1 // pred_check_branch
      %4079 = sbr.rel (0) target = $region45
    $region44: #{tpu_custom_call.1} parent=1 // pred_region
      %s4081 = ssub.s32 6144, 6144
      %4082 = vsyncadd [#allocation6], %s4081
      %s4083 = sshll.u32 [#allocation12], 4
      %s4084 = int_to_ptr.vmem [resolvable:$true] %s4083
      %4089 = dma.vmem_to_hbm [thread:$0]  %s4084, 6144, %s6, [#allocation6], 128, 128, 8
    $region45: #{tpu_custom_call.1} parent=1 // pred_fallthru
      _
    // Predicated region
    $region46: #{tpu_custom_call.1} parent=1 // pred_check
      _
    $region47: #{tpu_custom_call.1} parent=1 // pred_check_branch
      %4091 = sbr.rel (0) target = $region49
    $region48: #{tpu_custom_call.1} parent=1 // pred_region
      %4092 = dma.done [#allocation6], 6144
    $region49: #{tpu_custom_call.1} parent=1 // pred_fallthru
      _
    %4093 = vsyncpa [#allocation5], 1
    %4094 = vsyncpa [#allocation8], 1
    %4095 = vsyncpa [#allocation11], 1
    %4096 = vsyncpa [#allocation6], 1

</llo_original>
